<compile_context>
chip_gen: v7x
topology: tpu7x:2x2x1
jax: 0.10.0
libtpu: 0.0.40
codegen_flags: <defaults>
</compile_context>

<pallas_src>
import functools

import jax
import jax.numpy as jnp
import numpy as np
from jax import lax
from jax.experimental import pallas as pl
from jax.experimental.pallas import tpu as pltpu


def _bilstm_kernel(pf_ref, pb_ref, whf_ref, whb_ref, c0_ref,
                   of_ref, ob_ref, hn_ref, cn_ref,
                   hf_sc, cf_sc, hb_sc, cb_sc, *, mm_precision):
    """Fused bidirectional LSTM recurrence, both directions per grid step.

    Grid: (time-chunk t,), sequential ("arbitrary").

    pf_ref : [Tc, B, 4H]  forward-direction projected inputs, chunk t
    pb_ref : [Tc, B, 4H]  backward-direction projected inputs, chunk nT-1-t
    whf_ref/whb_ref : [H, 4H]  W_hh^T per direction (constant index_map)
    c0_ref : [B, H]       CLS initial cell state (shared by both directions)
    of_ref : [Tc, B, H]   forward hidden states for chunk t
    ob_ref : [Tc, B, H]   backward hidden states for chunk nT-1-t
                          (forward-time order inside the chunk)
    hn_ref/cn_ref : [2, B, H] final states (written on the last chunk only)
    *_sc   : VMEM f32 scratch carrying h/c of each chain across chunks
    """
    t = pl.program_id(0)
    n_t = pl.num_programs(0)
    Tc = pf_ref.shape[0]
    H = c0_ref.shape[-1]

    @pl.when(t == 0)
    def _init():
        zeros = jnp.zeros(hf_sc.shape, hf_sc.dtype)
        hf_sc[...] = zeros
        hb_sc[...] = zeros
        c0 = c0_ref[...].astype(cf_sc.dtype)
        cf_sc[...] = c0
        cb_sc[...] = c0

    whf = whf_ref[...]                # [H, 4H]
    whb = whb_ref[...]
    h_f = hf_sc[...]                  # [B, H] f32 state
    c_f = cf_sc[...]
    h_b = hb_sc[...]
    c_b = cb_sc[...]

    def cell(p_t, h, c, w):
        gates = p_t.astype(jnp.float32) + jnp.dot(
            h.astype(w.dtype), w,
            preferred_element_type=jnp.float32, precision=mm_precision)
        # PyTorch gate order: i, f, g, o.  With production H % 128 == 0 these
        # slices are vreg-aligned and free.
        i_g = jax.nn.sigmoid(gates[:, 0 * H:1 * H])
        f_g = jax.nn.sigmoid(gates[:, 1 * H:2 * H])
        g_g = jnp.tanh(gates[:, 2 * H:3 * H])
        o_g = jax.nn.sigmoid(gates[:, 3 * H:4 * H])
        c_new = f_g * c + i_g * g_g
        h_new = o_g * jnp.tanh(c_new)
        return h_new, c_new

    # Statically-unrolled, statically-indexed loop over the Tc steps of this
    # chunk.  The two directions' chains are independent, so their matmuls and
    # transcendentals interleave on the single TensorCore.
    # TODO(synk): for very large Tc, switch to lax.fori_loop(unroll=2..4) to
    # bound vreg live ranges (at the cost of dynamic row indices).
    for s in range(Tc):
        rb = Tc - 1 - s               # backward chain walks its chunk in reverse
        h_f, c_f = cell(pf_ref[s], h_f, c_f, whf)
        h_b, c_b = cell(pb_ref[rb], h_b, c_b, whb)
        of_ref[s] = h_f.astype(of_ref.dtype)
        ob_ref[rb] = h_b.astype(ob_ref.dtype)

    hf_sc[...] = h_f
    cf_sc[...] = c_f
    hb_sc[...] = h_b
    cb_sc[...] = c_b

    @pl.when(t == n_t - 1)
    def _finalize():
        hn_ref[0] = h_f.astype(hn_ref.dtype)
        hn_ref[1] = h_b.astype(hn_ref.dtype)
        cn_ref[0] = c_f.astype(cn_ref.dtype)
        cn_ref[1] = c_b.astype(cn_ref.dtype)


def _pick_time_chunk(T, B, H, proj_itemsize, out_itemsize,
                     vmem_budget_bytes, unroll_cap=16):
    """Largest divisor of T whose double-buffered blocks fit the VMEM budget."""
    G = 4 * H
    best = 1
    for Tc in range(1, min(T, unroll_cap) + 1):
        if T % Tc:
            continue
        pipeline_bytes = (
            2 * 2 * Tc * B * G * proj_itemsize     # proj_f + proj_b, 2 buffers each
            + 2 * 2 * Tc * B * H * out_itemsize    # out_f + out_b, 2 buffers each
            + 2 * 2 * H * G * proj_itemsize        # W_hh fwd/bwd (conservative x2)
            + 2 * B * H * 4                        # c0
            + 2 * 2 * 2 * B * H * out_itemsize     # h_n / c_n
            + 4 * B * H * 4)                       # h/c carry scratch
        if pipeline_bytes <= vmem_budget_bytes:
            best = Tc
    return best


@functools.partial(jax.jit,
                   static_argnames=("time_chunk", "compute_dtype",
                                    "vmem_limit_bytes"))
def bilstm_forward(x, cls_hidden, params, *, time_chunk=None,
                   compute_dtype=jnp.float32,
                   vmem_limit_bytes=64 * 1024 * 1024):
    """Reproduces LSTM.forward (bidirectional=True, n_layers=1, init_state='CLS').

    x          : [B, T, D]   batch[input_name]
    cls_hidden : [B, H]      batch['CLS_hidden_states']
    params     : PyTorch-layout weights: w_ih_{d} [4H,D], w_hh_{d} [4H,H],
                 b_ih_{d}/b_hh_{d} [4H] for d in {0 (fwd), 1 (bwd)}.
    Returns (output [B, T, 2H], h_n [2, B, H], c_n [2, B, H]).

    Note: on v7x (64 MiB VMEM / TC) pass a smaller vmem_limit_bytes (e.g.
    40 MiB) or use compute_dtype=bf16 to keep the same Tc.
    """
    B, T, D = x.shape
    H = cls_hidden.shape[-1]
    G = 4 * H

    use_bf16 = (compute_dtype == jnp.bfloat16)
    store_dtype = jnp.bfloat16 if use_bf16 else jnp.float32   # proj / W_hh / out
    mm_prec = lax.Precision.DEFAULT if use_bf16 else lax.Precision.HIGHEST

    if time_chunk is None:
        itemsize = jnp.dtype(store_dtype).itemsize
        Tc = _pick_time_chunk(T, B, H, itemsize, itemsize,
                              vmem_budget_bytes=(3 * vmem_limit_bytes) // 4)
    else:
        Tc = time_chunk
    assert T % Tc == 0, "time_chunk must divide the sequence length"
    nT = T // Tc

    # --- Hoisted input projection: one big matmul per direction, emitted
    # directly in time-major order (only the small x gets transposed).
    xt = jnp.transpose(x, (1, 0, 2)).astype(compute_dtype)        # [T, B, D]
    wih_f = params["w_ih_0"].T.astype(compute_dtype)              # [D, 4H]
    wih_b = params["w_ih_1"].T.astype(compute_dtype)
    bias_f = (params["b_ih_0"] + params["b_hh_0"]).astype(jnp.float32)
    bias_b = (params["b_ih_1"] + params["b_hh_1"]).astype(jnp.float32)

    proj_f = (jnp.einsum("tbd,dg->tbg", xt, wih_f,
                         preferred_element_type=jnp.float32,
                         precision=mm_prec) + bias_f).astype(store_dtype)
    proj_b = (jnp.einsum("tbd,dg->tbg", xt, wih_b,
                         preferred_element_type=jnp.float32,
                         precision=mm_prec) + bias_b).astype(store_dtype)

    whh_f = params["w_hh_0"].T.astype(store_dtype)                # [H, 4H]
    whh_b = params["w_hh_1"].T.astype(store_dtype)
    c0 = cls_hidden.astype(jnp.float32)                           # CLS init

    kernel = functools.partial(_bilstm_kernel, mm_precision=mm_prec)

    grid_spec = pltpu.PrefetchScalarGridSpec(
        num_scalar_prefetch=0,
        grid=(nT,),                                   # time chunks (recurrence)
        in_specs=[
            pl.BlockSpec((Tc, B, G), lambda t: (t, 0, 0)),            # proj fwd
            pl.BlockSpec((Tc, B, G), lambda t: (nT - 1 - t, 0, 0)),   # proj bwd
            pl.BlockSpec((H, G), lambda t: (0, 0)),                   # W_hh fwd
            pl.BlockSpec((H, G), lambda t: (0, 0)),                   # W_hh bwd
            pl.BlockSpec((B, H), lambda t: (0, 0)),                   # c0 (CLS)
        ],
        out_specs=(
            pl.BlockSpec((Tc, B, H), lambda t: (t, 0, 0)),            # out fwd
            pl.BlockSpec((Tc, B, H), lambda t: (nT - 1 - t, 0, 0)),   # out bwd
            pl.BlockSpec((2, B, H), lambda t: (0, 0, 0)),             # h_n
            pl.BlockSpec((2, B, H), lambda t: (0, 0, 0)),             # c_n
        ),
        scratch_shapes=[pltpu.VMEM((B, H), jnp.float32)] * 4,         # h/c carry
    )

    out_f, out_b, h_n, c_n = pl.pallas_call(
        kernel,
        out_shape=(
            jax.ShapeDtypeStruct((T, B, H), store_dtype),
            jax.ShapeDtypeStruct((T, B, H), store_dtype),
            jax.ShapeDtypeStruct((2, B, H), store_dtype),
            jax.ShapeDtypeStruct((2, B, H), store_dtype),
        ),
        grid_spec=grid_spec,
        compiler_params=pltpu.CompilerParams(
            dimension_semantics=("arbitrary",),
            vmem_limit_bytes=vmem_limit_bytes),
    )(proj_f, proj_b, whh_f, whh_b, c0)

    # torch batch_first layout: [B, T, 2H] with forward || backward halves.
    # TODO(synk): if downstream accepts seq-major output (or H % 128 == 0 with
    # a direction grid axis), this transpose+concat pass can be eliminated.
    output = jnp.concatenate(
        [jnp.transpose(out_f, (1, 0, 2)), jnp.transpose(out_b, (1, 0, 2))],
        axis=-1)
    return output, h_n, c_n


# ----------------------------- pure-JAX reference -----------------------------
def _ref_lstm_dir(x_tbd, w_ih, w_hh, b_ih, b_hh, h0, c0):
    H = h0.shape[-1]

    def step(carry, x_t):
        h, c = carry
        gates = (jnp.dot(x_t, w_ih.T, precision=lax.Precision.HIGHEST)
                 + jnp.dot(h, w_hh.T, precision=lax.Precision.HIGHEST)
                 + b_ih + b_hh)
        i = jax.nn.sigmoid(gates[:, 0 * H:1 * H])
        f = jax.nn.sigmoid(gates[:, 1 * H:2 * H])
        g = jnp.tanh(gates[:, 2 * H:3 * H])
        o = jax.nn.sigmoid(gates[:, 3 * H:4 * H])
        c = f * c + i * g
        h = o * jnp.tanh(c)
        return (h, c), h

    (h_n, c_n), ys = jax.lax.scan(step, (h0, c0), x_tbd)
    return ys, h_n, c_n


def _ref_bilstm(x, cls_hidden, params):
    B, T, D = x.shape
    H = cls_hidden.shape[-1]
    h0 = jnp.zeros((B, H), jnp.float32)
    c0 = cls_hidden
    x_tbd = jnp.transpose(x, (1, 0, 2))
    out_f, hf, cf = _ref_lstm_dir(x_tbd, params["w_ih_0"], params["w_hh_0"],
                                  params["b_ih_0"], params["b_hh_0"], h0, c0)
    out_b, hb, cb = _ref_lstm_dir(x_tbd[::-1], params["w_ih_1"], params["w_hh_1"],
                                  params["b_ih_1"], params["b_hh_1"], h0, c0)
    out_b = out_b[::-1]
    output = jnp.concatenate([jnp.transpose(out_f, (1, 0, 2)),
                              jnp.transpose(out_b, (1, 0, 2))], axis=-1)
    return output, jnp.stack([hf, hb]), jnp.stack([cf, cb])


if __name__ == "__main__":
    # Small shapes consistent with the module (batch_first BiLSTM, CLS init).
    B, T, D, H = 8, 16, 16, 32   # batch, seq, input_size, hidden_dim

    key = jax.random.PRNGKey(0)
    kx, kcls, *kw = jax.random.split(key, 2 + 8)

    x = jax.random.normal(kx, (B, T, D), jnp.float32)
    cls_hidden = jax.random.normal(kcls, (B, H), jnp.float32)

    # Deterministic params (PyTorch nn.LSTM layout: W_ih [4H,D], W_hh [4H,H]).
    k = 1.0 / np.sqrt(H)
    params = {}
    shapes = [("w_ih", (4 * H, D)), ("w_hh", (4 * H, H)),
              ("b_ih", (4 * H,)), ("b_hh", (4 * H,))]
    ki = 0
    for d in range(2):                       # two directions
        for name, shp in shapes:
            params[f"{name}_{d}"] = jax.random.uniform(
                kw[ki], shp, jnp.float32, minval=-k, maxval=k)
            ki += 1

    ref_out, ref_h, ref_c = _ref_bilstm(x, cls_hidden, params)

    # f32 path, explicit multi-chunk tiling (exercises cross-chunk h/c carry
    # and the reversed-chunk backward index_map).
    out_a, h_a, c_a = bilstm_forward(x, cls_hidden, params, time_chunk=4)
    # f32 path, VMEM-budget-picked chunk.
    out_b, h_b, c_b = bilstm_forward(x, cls_hidden, params)
    # Production bf16 storage path (bf16 proj / W_hh / outputs, f32 state).
    out_c, h_c, c_c = bilstm_forward(x, cls_hidden, params,
                                     compute_dtype=jnp.bfloat16)
    jax.block_until_ready((out_a, h_a, c_a, out_b, h_b, c_b, out_c, h_c, c_c))

    def f32np(a):
        return np.asarray(a.astype(jnp.float32))

    # Strict check for the f32 paths.
    for got, ref in ((out_a, ref_out), (h_a, ref_h), (c_a, ref_c),
                     (out_b, ref_out), (h_b, ref_h), (c_b, ref_c)):
        np.testing.assert_allclose(f32np(got), np.asarray(ref),
                                   rtol=1e-4, atol=1e-4)
    # Loose sanity check for the bf16 production path.
    for got, ref in ((out_c, ref_out), (h_c, ref_h), (c_c, ref_c)):
        np.testing.assert_allclose(f32np(got), np.asarray(ref),
                                   rtol=1e-1, atol=1e-1)

    assert out_a.shape == (B, T, 2 * H)
    assert h_a.shape == (2, B, H) and c_a.shape == (2, B, H)
    assert out_c.dtype == jnp.bfloat16
    # TODO(synk): init_state='learned' (trainable h0/c0) not implemented;
    # dropout is a no-op for n_layers=1 exactly as in torch.nn.LSTM.
    print("KERNEL_OK")
</pallas_src>

<mosaic_0001>
module attributes {stable_mosaic.version = 11 : i64} {
  func.func @_bilstm_kernel(%arg0: i32, %arg1: memref<4x8x128xf32, #tpu.memory_space<vmem>>, %arg2: memref<4x8x128xf32, #tpu.memory_space<vmem>>, %arg3: memref<32x128xf32, #tpu.memory_space<vmem>>, %arg4: memref<32x128xf32, #tpu.memory_space<vmem>>, %arg5: memref<8x32xf32, #tpu.memory_space<vmem>>, %arg6: memref<4x8x32xf32, #tpu.memory_space<vmem>>, %arg7: memref<4x8x32xf32, #tpu.memory_space<vmem>>, %arg8: memref<2x8x32xf32, #tpu.memory_space<vmem>>, %arg9: memref<2x8x32xf32, #tpu.memory_space<vmem>>, %arg10: memref<8x32xf32, #tpu.memory_space<vmem>>, %arg11: memref<8x32xf32, #tpu.memory_space<vmem>>, %arg12: memref<8x32xf32, #tpu.memory_space<vmem>>, %arg13: memref<8x32xf32, #tpu.memory_space<vmem>>) attributes {dimension_semantics = [#tpu.dimension_semantics<arbitrary>], iteration_bounds = array<i64: 4>, scalar_prefetch = 0 : i64, scratch_operands = 4 : i64, tpu.core_type = #tpu.core_type<tc>, window_params = [{transform_indices = @transform_0, window_bounds = array<i64: 4, 8, 128>}, {transform_indices = @transform_1, window_bounds = array<i64: 4, 8, 128>}, {pipeline_mode = #tpu.pipeline_mode<synchronous>, transform_indices = @transform_2, window_bounds = array<i64: 32, 128>}, {pipeline_mode = #tpu.pipeline_mode<synchronous>, transform_indices = @transform_3, window_bounds = array<i64: 32, 128>}, {pipeline_mode = #tpu.pipeline_mode<synchronous>, transform_indices = @transform_4, window_bounds = array<i64: 8, 32>}, {transform_indices = @transform_5, window_bounds = array<i64: 4, 8, 32>}, {transform_indices = @transform_6, window_bounds = array<i64: 4, 8, 32>}, {pipeline_mode = #tpu.pipeline_mode<synchronous>, transform_indices = @transform_7, window_bounds = array<i64: 2, 8, 32>}, {pipeline_mode = #tpu.pipeline_mode<synchronous>, transform_indices = @transform_8, window_bounds = array<i64: 2, 8, 32>}]} {
    %c0_i32 = arith.constant 0 : i32
    %0 = arith.cmpi eq, %arg0, %c0_i32 : i32
    %1 = arith.extui %0 : i1 to i32
    %c0_i32_0 = arith.constant 0 : i32
    %2 = arith.cmpi ne, %1, %c0_i32_0 : i32
    scf.if %2 {
      %cst_97 = arith.constant 0.000000e+00 : f32
      %272 = vector.broadcast %cst_97 : f32 to vector<8x32xf32>
      %c0_98 = arith.constant 0 : index
      %c0_99 = arith.constant 0 : index
      %273 = vector.load %arg10[%c0_98, %c0_99] : memref<8x32xf32, #tpu.memory_space<vmem>>, vector<8x32xf32>
      tpu.vector_store %arg10[%c0_98, %c0_99], %272 {strides = array<i32>} : memref<8x32xf32, #tpu.memory_space<vmem>>, vector<8x32xf32>,
      %c0_100 = arith.constant 0 : index
      %c0_101 = arith.constant 0 : index
      %274 = vector.load %arg12[%c0_100, %c0_101] : memref<8x32xf32, #tpu.memory_space<vmem>>, vector<8x32xf32>
      tpu.vector_store %arg12[%c0_100, %c0_101], %272 {strides = array<i32>} : memref<8x32xf32, #tpu.memory_space<vmem>>, vector<8x32xf32>,
      %c0_102 = arith.constant 0 : index
      %c0_103 = arith.constant 0 : index
      %275 = vector.load %arg5[%c0_102, %c0_103] : memref<8x32xf32, #tpu.memory_space<vmem>>, vector<8x32xf32>
      %c0_104 = arith.constant 0 : index
      %c0_105 = arith.constant 0 : index
      %276 = vector.load %arg11[%c0_104, %c0_105] : memref<8x32xf32, #tpu.memory_space<vmem>>, vector<8x32xf32>
      tpu.vector_store %arg11[%c0_104, %c0_105], %275 {strides = array<i32>} : memref<8x32xf32, #tpu.memory_space<vmem>>, vector<8x32xf32>,
      %c0_106 = arith.constant 0 : index
      %c0_107 = arith.constant 0 : index
      %277 = vector.load %arg13[%c0_106, %c0_107] : memref<8x32xf32, #tpu.memory_space<vmem>>, vector<8x32xf32>
      tpu.vector_store %arg13[%c0_106, %c0_107], %275 {strides = array<i32>} : memref<8x32xf32, #tpu.memory_space<vmem>>, vector<8x32xf32>,
    } else {
    }
    %c0 = arith.constant 0 : index
    %c0_1 = arith.constant 0 : index
    %3 = vector.load %arg3[%c0, %c0_1] : memref<32x128xf32, #tpu.memory_space<vmem>>, vector<32x128xf32>
    %c0_2 = arith.constant 0 : index
    %c0_3 = arith.constant 0 : index
    %4 = vector.load %arg4[%c0_2, %c0_3] : memref<32x128xf32, #tpu.memory_space<vmem>>, vector<32x128xf32>
    %c0_4 = arith.constant 0 : index
    %c0_5 = arith.constant 0 : index
    %5 = vector.load %arg10[%c0_4, %c0_5] : memref<8x32xf32, #tpu.memory_space<vmem>>, vector<8x32xf32>
    %c0_6 = arith.constant 0 : index
    %c0_7 = arith.constant 0 : index
    %6 = vector.load %arg11[%c0_6, %c0_7] : memref<8x32xf32, #tpu.memory_space<vmem>>, vector<8x32xf32>
    %c0_8 = arith.constant 0 : index
    %c0_9 = arith.constant 0 : index
    %7 = vector.load %arg12[%c0_8, %c0_9] : memref<8x32xf32, #tpu.memory_space<vmem>>, vector<8x32xf32>
    %c0_10 = arith.constant 0 : index
    %c0_11 = arith.constant 0 : index
    %8 = vector.load %arg13[%c0_10, %c0_11] : memref<8x32xf32, #tpu.memory_space<vmem>>, vector<8x32xf32>
    %c0_12 = arith.constant 0 : index
    %c0_13 = arith.constant 0 : index
    %c0_14 = arith.constant 0 : index
    %9 = vector.load %arg1[%c0_12, %c0_13, %c0_14] : memref<4x8x128xf32, #tpu.memory_space<vmem>>, vector<1x8x128xf32>
    %10 = vector.shape_cast %9 : vector<1x8x128xf32> to vector<8x128xf32>
    %cst = arith.constant dense<0.000000e+00> : vector<8x128xf32>
    %11 = tpu.matmul %5, %3, %cst {dimension_numbers = #tpu.dot_dimension_numbers<[1], [0], [0], [1], [0, 0, 1, 1], [], []>, precision = #tpu.contract_precision<fp32>} : vector<8x32xf32>, vector<32x128xf32>, vector<8x128xf32> -> vector<8x128xf32>
    %12 = arith.addf %10, %11 : vector<8x128xf32>
    %13 = vector.extract_strided_slice %12 {offsets = [0, 0], sizes = [8, 32], strides = [1, 1]} : vector<8x128xf32> to vector<8x32xf32>
    %14 = arith.negf %13 : vector<8x32xf32>
    %15 = math.exp %14 : vector<8x32xf32>
    %cst_15 = arith.constant 1.000000e+00 : f32
    %16 = vector.broadcast %cst_15 : f32 to vector<8x32xf32>
    %17 = arith.addf %16, %15 : vector<8x32xf32>
    %18 = arith.divf %16, %17 : vector<8x32xf32>
    %19 = vector.extract_strided_slice %12 {offsets = [0, 32], sizes = [8, 32], strides = [1, 1]} : vector<8x128xf32> to vector<8x32xf32>
    %20 = arith.negf %19 : vector<8x32xf32>
    %21 = math.exp %20 : vector<8x32xf32>
    %cst_16 = arith.constant 1.000000e+00 : f32
    %22 = vector.broadcast %cst_16 : f32 to vector<8x32xf32>
    %23 = arith.addf %22, %21 : vector<8x32xf32>
    %24 = arith.divf %22, %23 : vector<8x32xf32>
    %25 = vector.extract_strided_slice %12 {offsets = [0, 64], sizes = [8, 32], strides = [1, 1]} : vector<8x128xf32> to vector<8x32xf32>
    %26 = math.tanh %25 : vector<8x32xf32>
    %27 = vector.extract_strided_slice %12 {offsets = [0, 96], sizes = [8, 32], strides = [1, 1]} : vector<8x128xf32> to vector<8x32xf32>
    %28 = arith.negf %27 : vector<8x32xf32>
    %29 = math.exp %28 : vector<8x32xf32>
    %cst_17 = arith.constant 1.000000e+00 : f32
    %30 = vector.broadcast %cst_17 : f32 to vector<8x32xf32>
    %31 = arith.addf %30, %29 : vector<8x32xf32>
    %32 = arith.divf %30, %31 : vector<8x32xf32>
    %33 = arith.mulf %24, %6 : vector<8x32xf32>
    %34 = arith.mulf %18, %26 : vector<8x32xf32>
    %35 = arith.addf %33, %34 : vector<8x32xf32>
    %36 = math.tanh %35 : vector<8x32xf32>
    %37 = arith.mulf %32, %36 : vector<8x32xf32>
    %c3 = arith.constant 3 : index
    %c0_18 = arith.constant 0 : index
    %c0_19 = arith.constant 0 : index
    %38 = vector.load %arg2[%c3, %c0_18, %c0_19] : memref<4x8x128xf32, #tpu.memory_space<vmem>>, vector<1x8x128xf32>
    %39 = vector.shape_cast %38 : vector<1x8x128xf32> to vector<8x128xf32>
    %cst_20 = arith.constant dense<0.000000e+00> : vector<8x128xf32>
    %40 = tpu.matmul %7, %4, %cst_20 {dimension_numbers = #tpu.dot_dimension_numbers<[1], [0], [0], [1], [0, 0, 1, 1], [], []>, precision = #tpu.contract_precision<fp32>} : vector<8x32xf32>, vector<32x128xf32>, vector<8x128xf32> -> vector<8x128xf32>
    %41 = arith.addf %39, %40 : vector<8x128xf32>
    %42 = vector.extract_strided_slice %41 {offsets = [0, 0], sizes = [8, 32], strides = [1, 1]} : vector<8x128xf32> to vector<8x32xf32>
    %43 = arith.negf %42 : vector<8x32xf32>
    %44 = math.exp %43 : vector<8x32xf32>
    %cst_21 = arith.constant 1.000000e+00 : f32
    %45 = vector.broadcast %cst_21 : f32 to vector<8x32xf32>
    %46 = arith.addf %45, %44 : vector<8x32xf32>
    %47 = arith.divf %45, %46 : vector<8x32xf32>
    %48 = vector.extract_strided_slice %41 {offsets = [0, 32], sizes = [8, 32], strides = [1, 1]} : vector<8x128xf32> to vector<8x32xf32>
    %49 = arith.negf %48 : vector<8x32xf32>
    %50 = math.exp %49 : vector<8x32xf32>
    %cst_22 = arith.constant 1.000000e+00 : f32
    %51 = vector.broadcast %cst_22 : f32 to vector<8x32xf32>
    %52 = arith.addf %51, %50 : vector<8x32xf32>
    %53 = arith.divf %51, %52 : vector<8x32xf32>
    %54 = vector.extract_strided_slice %41 {offsets = [0, 64], sizes = [8, 32], strides = [1, 1]} : vector<8x128xf32> to vector<8x32xf32>
    %55 = math.tanh %54 : vector<8x32xf32>
    %56 = vector.extract_strided_slice %41 {offsets = [0, 96], sizes = [8, 32], strides = [1, 1]} : vector<8x128xf32> to vector<8x32xf32>
    %57 = arith.negf %56 : vector<8x32xf32>
    %58 = math.exp %57 : vector<8x32xf32>
    %cst_23 = arith.constant 1.000000e+00 : f32
    %59 = vector.broadcast %cst_23 : f32 to vector<8x32xf32>
    %60 = arith.addf %59, %58 : vector<8x32xf32>
    %61 = arith.divf %59, %60 : vector<8x32xf32>
    %62 = arith.mulf %53, %8 : vector<8x32xf32>
    %63 = arith.mulf %47, %55 : vector<8x32xf32>
    %64 = arith.addf %62, %63 : vector<8x32xf32>
    %65 = math.tanh %64 : vector<8x32xf32>
    %66 = arith.mulf %61, %65 : vector<8x32xf32>
    %c0_24 = arith.constant 0 : index
    %c0_25 = arith.constant 0 : index
    %c0_26 = arith.constant 0 : index
    %67 = vector.load %arg6[%c0_24, %c0_25, %c0_26] : memref<4x8x32xf32, #tpu.memory_space<vmem>>, vector<1x8x32xf32>
    %68 = vector.shape_cast %67 : vector<1x8x32xf32> to vector<8x32xf32>
    %69 = vector.shape_cast %37 : vector<8x32xf32> to vector<1x8x32xf32>
    tpu.vector_store %arg6[%c0_24, %c0_25, %c0_26], %69 {strides = array<i32>} : memref<4x8x32xf32, #tpu.memory_space<vmem>>, vector<1x8x32xf32>,
    %c3_27 = arith.constant 3 : index
    %c0_28 = arith.constant 0 : index
    %c0_29 = arith.constant 0 : index
    %70 = vector.load %arg7[%c3_27, %c0_28, %c0_29] : memref<4x8x32xf32, #tpu.memory_space<vmem>>, vector<1x8x32xf32>
    %71 = vector.shape_cast %70 : vector<1x8x32xf32> to vector<8x32xf32>
    %72 = vector.shape_cast %66 : vector<8x32xf32> to vector<1x8x32xf32>
    tpu.vector_store %arg7[%c3_27, %c0_28, %c0_29], %72 {strides = array<i32>} : memref<4x8x32xf32, #tpu.memory_space<vmem>>, vector<1x8x32xf32>,
    %c1 = arith.constant 1 : index
    %c0_30 = arith.constant 0 : index
    %c0_31 = arith.constant 0 : index
    %73 = vector.load %arg1[%c1, %c0_30, %c0_31] : memref<4x8x128xf32, #tpu.memory_space<vmem>>, vector<1x8x128xf32>
    %74 = vector.shape_cast %73 : vector<1x8x128xf32> to vector<8x128xf32>
    %cst_32 = arith.constant dense<0.000000e+00> : vector<8x128xf32>
    %75 = tpu.matmul %37, %3, %cst_32 {dimension_numbers = #tpu.dot_dimension_numbers<[1], [0], [0], [1], [0, 0, 1, 1], [], []>, precision = #tpu.contract_precision<fp32>} : vector<8x32xf32>, vector<32x128xf32>, vector<8x128xf32> -> vector<8x128xf32>
    %76 = arith.addf %74, %75 : vector<8x128xf32>
    %77 = vector.extract_strided_slice %76 {offsets = [0, 0], sizes = [8, 32], strides = [1, 1]} : vector<8x128xf32> to vector<8x32xf32>
    %78 = arith.negf %77 : vector<8x32xf32>
    %79 = math.exp %78 : vector<8x32xf32>
    %cst_33 = arith.constant 1.000000e+00 : f32
    %80 = vector.broadcast %cst_33 : f32 to vector<8x32xf32>
    %81 = arith.addf %80, %79 : vector<8x32xf32>
    %82 = arith.divf %80, %81 : vector<8x32xf32>
    %83 = vector.extract_strided_slice %76 {offsets = [0, 32], sizes = [8, 32], strides = [1, 1]} : vector<8x128xf32> to vector<8x32xf32>
    %84 = arith.negf %83 : vector<8x32xf32>
    %85 = math.exp %84 : vector<8x32xf32>
    %cst_34 = arith.constant 1.000000e+00 : f32
    %86 = vector.broadcast %cst_34 : f32 to vector<8x32xf32>
    %87 = arith.addf %86, %85 : vector<8x32xf32>
    %88 = arith.divf %86, %87 : vector<8x32xf32>
    %89 = vector.extract_strided_slice %76 {offsets = [0, 64], sizes = [8, 32], strides = [1, 1]} : vector<8x128xf32> to vector<8x32xf32>
    %90 = math.tanh %89 : vector<8x32xf32>
    %91 = vector.extract_strided_slice %76 {offsets = [0, 96], sizes = [8, 32], strides = [1, 1]} : vector<8x128xf32> to vector<8x32xf32>
    %92 = arith.negf %91 : vector<8x32xf32>
    %93 = math.exp %92 : vector<8x32xf32>
    %cst_35 = arith.constant 1.000000e+00 : f32
    %94 = vector.broadcast %cst_35 : f32 to vector<8x32xf32>
    %95 = arith.addf %94, %93 : vector<8x32xf32>
    %96 = arith.divf %94, %95 : vector<8x32xf32>
    %97 = arith.mulf %88, %35 : vector<8x32xf32>
    %98 = arith.mulf %82, %90 : vector<8x32xf32>
    %99 = arith.addf %97, %98 : vector<8x32xf32>
    %100 = math.tanh %99 : vector<8x32xf32>
    %101 = arith.mulf %96, %100 : vector<8x32xf32>
    %c2 = arith.constant 2 : index
    %c0_36 = arith.constant 0 : index
    %c0_37 = arith.constant 0 : index
    %102 = vector.load %arg2[%c2, %c0_36, %c0_37] : memref<4x8x128xf32, #tpu.memory_space<vmem>>, vector<1x8x128xf32>
    %103 = vector.shape_cast %102 : vector<1x8x128xf32> to vector<8x128xf32>
    %cst_38 = arith.constant dense<0.000000e+00> : vector<8x128xf32>
    %104 = tpu.matmul %66, %4, %cst_38 {dimension_numbers = #tpu.dot_dimension_numbers<[1], [0], [0], [1], [0, 0, 1, 1], [], []>, precision = #tpu.contract_precision<fp32>} : vector<8x32xf32>, vector<32x128xf32>, vector<8x128xf32> -> vector<8x128xf32>
    %105 = arith.addf %103, %104 : vector<8x128xf32>
    %106 = vector.extract_strided_slice %105 {offsets = [0, 0], sizes = [8, 32], strides = [1, 1]} : vector<8x128xf32> to vector<8x32xf32>
    %107 = arith.negf %106 : vector<8x32xf32>
    %108 = math.exp %107 : vector<8x32xf32>
    %cst_39 = arith.constant 1.000000e+00 : f32
    %109 = vector.broadcast %cst_39 : f32 to vector<8x32xf32>
    %110 = arith.addf %109, %108 : vector<8x32xf32>
    %111 = arith.divf %109, %110 : vector<8x32xf32>
    %112 = vector.extract_strided_slice %105 {offsets = [0, 32], sizes = [8, 32], strides = [1, 1]} : vector<8x128xf32> to vector<8x32xf32>
    %113 = arith.negf %112 : vector<8x32xf32>
    %114 = math.exp %113 : vector<8x32xf32>
    %cst_40 = arith.constant 1.000000e+00 : f32
    %115 = vector.broadcast %cst_40 : f32 to vector<8x32xf32>
    %116 = arith.addf %115, %114 : vector<8x32xf32>
    %117 = arith.divf %115, %116 : vector<8x32xf32>
    %118 = vector.extract_strided_slice %105 {offsets = [0, 64], sizes = [8, 32], strides = [1, 1]} : vector<8x128xf32> to vector<8x32xf32>
    %119 = math.tanh %118 : vector<8x32xf32>
    %120 = vector.extract_strided_slice %105 {offsets = [0, 96], sizes = [8, 32], strides = [1, 1]} : vector<8x128xf32> to vector<8x32xf32>
    %121 = arith.negf %120 : vector<8x32xf32>
    %122 = math.exp %121 : vector<8x32xf32>
    %cst_41 = arith.constant 1.000000e+00 : f32
    %123 = vector.broadcast %cst_41 : f32 to vector<8x32xf32>
    %124 = arith.addf %123, %122 : vector<8x32xf32>
    %125 = arith.divf %123, %124 : vector<8x32xf32>
    %126 = arith.mulf %117, %64 : vector<8x32xf32>
    %127 = arith.mulf %111, %119 : vector<8x32xf32>
    %128 = arith.addf %126, %127 : vector<8x32xf32>
    %129 = math.tanh %128 : vector<8x32xf32>
    %130 = arith.mulf %125, %129 : vector<8x32xf32>
    %c1_42 = arith.constant 1 : index
    %c0_43 = arith.constant 0 : index
    %c0_44 = arith.constant 0 : index
    %131 = vector.load %arg6[%c1_42, %c0_43, %c0_44] : memref<4x8x32xf32, #tpu.memory_space<vmem>>, vector<1x8x32xf32>
    %132 = vector.shape_cast %131 : vector<1x8x32xf32> to vector<8x32xf32>
    %133 = vector.shape_cast %101 : vector<8x32xf32> to vector<1x8x32xf32>
    tpu.vector_store %arg6[%c1_42, %c0_43, %c0_44], %133 {strides = array<i32>} : memref<4x8x32xf32, #tpu.memory_space<vmem>>, vector<1x8x32xf32>,
    %c2_45 = arith.constant 2 : index
    %c0_46 = arith.constant 0 : index
    %c0_47 = arith.constant 0 : index
    %134 = vector.load %arg7[%c2_45, %c0_46, %c0_47] : memref<4x8x32xf32, #tpu.memory_space<vmem>>, vector<1x8x32xf32>
    %135 = vector.shape_cast %134 : vector<1x8x32xf32> to vector<8x32xf32>
    %136 = vector.shape_cast %130 : vector<8x32xf32> to vector<1x8x32xf32>
    tpu.vector_store %arg7[%c2_45, %c0_46, %c0_47], %136 {strides = array<i32>} : memref<4x8x32xf32, #tpu.memory_space<vmem>>, vector<1x8x32xf32>,
    %c2_48 = arith.constant 2 : index
    %c0_49 = arith.constant 0 : index
    %c0_50 = arith.constant 0 : index
    %137 = vector.load %arg1[%c2_48, %c0_49, %c0_50] : memref<4x8x128xf32, #tpu.memory_space<vmem>>, vector<1x8x128xf32>
    %138 = vector.shape_cast %137 : vector<1x8x128xf32> to vector<8x128xf32>
    %cst_51 = arith.constant dense<0.000000e+00> : vector<8x128xf32>
    %139 = tpu.matmul %101, %3, %cst_51 {dimension_numbers = #tpu.dot_dimension_numbers<[1], [0], [0], [1], [0, 0, 1, 1], [], []>, precision = #tpu.contract_precision<fp32>} : vector<8x32xf32>, vector<32x128xf32>, vector<8x128xf32> -> vector<8x128xf32>
    %140 = arith.addf %138, %139 : vector<8x128xf32>
    %141 = vector.extract_strided_slice %140 {offsets = [0, 0], sizes = [8, 32], strides = [1, 1]} : vector<8x128xf32> to vector<8x32xf32>
    %142 = arith.negf %141 : vector<8x32xf32>
    %143 = math.exp %142 : vector<8x32xf32>
    %cst_52 = arith.constant 1.000000e+00 : f32
    %144 = vector.broadcast %cst_52 : f32 to vector<8x32xf32>
    %145 = arith.addf %144, %143 : vector<8x32xf32>
    %146 = arith.divf %144, %145 : vector<8x32xf32>
    %147 = vector.extract_strided_slice %140 {offsets = [0, 32], sizes = [8, 32], strides = [1, 1]} : vector<8x128xf32> to vector<8x32xf32>
    %148 = arith.negf %147 : vector<8x32xf32>
    %149 = math.exp %148 : vector<8x32xf32>
    %cst_53 = arith.constant 1.000000e+00 : f32
    %150 = vector.broadcast %cst_53 : f32 to vector<8x32xf32>
    %151 = arith.addf %150, %149 : vector<8x32xf32>
    %152 = arith.divf %150, %151 : vector<8x32xf32>
    %153 = vector.extract_strided_slice %140 {offsets = [0, 64], sizes = [8, 32], strides = [1, 1]} : vector<8x128xf32> to vector<8x32xf32>
    %154 = math.tanh %153 : vector<8x32xf32>
    %155 = vector.extract_strided_slice %140 {offsets = [0, 96], sizes = [8, 32], strides = [1, 1]} : vector<8x128xf32> to vector<8x32xf32>
    %156 = arith.negf %155 : vector<8x32xf32>
    %157 = math.exp %156 : vector<8x32xf32>
    %cst_54 = arith.constant 1.000000e+00 : f32
    %158 = vector.broadcast %cst_54 : f32 to vector<8x32xf32>
    %159 = arith.addf %158, %157 : vector<8x32xf32>
    %160 = arith.divf %158, %159 : vector<8x32xf32>
    %161 = arith.mulf %152, %99 : vector<8x32xf32>
    %162 = arith.mulf %146, %154 : vector<8x32xf32>
    %163 = arith.addf %161, %162 : vector<8x32xf32>
    %164 = math.tanh %163 : vector<8x32xf32>
    %165 = arith.mulf %160, %164 : vector<8x32xf32>
    %c1_55 = arith.constant 1 : index
    %c0_56 = arith.constant 0 : index
    %c0_57 = arith.constant 0 : index
    %166 = vector.load %arg2[%c1_55, %c0_56, %c0_57] : memref<4x8x128xf32, #tpu.memory_space<vmem>>, vector<1x8x128xf32>
    %167 = vector.shape_cast %166 : vector<1x8x128xf32> to vector<8x128xf32>
    %cst_58 = arith.constant dense<0.000000e+00> : vector<8x128xf32>
    %168 = tpu.matmul %130, %4, %cst_58 {dimension_numbers = #tpu.dot_dimension_numbers<[1], [0], [0], [1], [0, 0, 1, 1], [], []>, precision = #tpu.contract_precision<fp32>} : vector<8x32xf32>, vector<32x128xf32>, vector<8x128xf32> -> vector<8x128xf32>
    %169 = arith.addf %167, %168 : vector<8x128xf32>
    %170 = vector.extract_strided_slice %169 {offsets = [0, 0], sizes = [8, 32], strides = [1, 1]} : vector<8x128xf32> to vector<8x32xf32>
    %171 = arith.negf %170 : vector<8x32xf32>
    %172 = math.exp %171 : vector<8x32xf32>
    %cst_59 = arith.constant 1.000000e+00 : f32
    %173 = vector.broadcast %cst_59 : f32 to vector<8x32xf32>
    %174 = arith.addf %173, %172 : vector<8x32xf32>
    %175 = arith.divf %173, %174 : vector<8x32xf32>
    %176 = vector.extract_strided_slice %169 {offsets = [0, 32], sizes = [8, 32], strides = [1, 1]} : vector<8x128xf32> to vector<8x32xf32>
    %177 = arith.negf %176 : vector<8x32xf32>
    %178 = math.exp %177 : vector<8x32xf32>
    %cst_60 = arith.constant 1.000000e+00 : f32
    %179 = vector.broadcast %cst_60 : f32 to vector<8x32xf32>
    %180 = arith.addf %179, %178 : vector<8x32xf32>
    %181 = arith.divf %179, %180 : vector<8x32xf32>
    %182 = vector.extract_strided_slice %169 {offsets = [0, 64], sizes = [8, 32], strides = [1, 1]} : vector<8x128xf32> to vector<8x32xf32>
    %183 = math.tanh %182 : vector<8x32xf32>
    %184 = vector.extract_strided_slice %169 {offsets = [0, 96], sizes = [8, 32], strides = [1, 1]} : vector<8x128xf32> to vector<8x32xf32>
    %185 = arith.negf %184 : vector<8x32xf32>
    %186 = math.exp %185 : vector<8x32xf32>
    %cst_61 = arith.constant 1.000000e+00 : f32
    %187 = vector.broadcast %cst_61 : f32 to vector<8x32xf32>
    %188 = arith.addf %187, %186 : vector<8x32xf32>
    %189 = arith.divf %187, %188 : vector<8x32xf32>
    %190 = arith.mulf %181, %128 : vector<8x32xf32>
    %191 = arith.mulf %175, %183 : vector<8x32xf32>
    %192 = arith.addf %190, %191 : vector<8x32xf32>
    %193 = math.tanh %192 : vector<8x32xf32>
    %194 = arith.mulf %189, %193 : vector<8x32xf32>
    %c2_62 = arith.constant 2 : index
    %c0_63 = arith.constant 0 : index
    %c0_64 = arith.constant 0 : index
    %195 = vector.load %arg6[%c2_62, %c0_63, %c0_64] : memref<4x8x32xf32, #tpu.memory_space<vmem>>, vector<1x8x32xf32>
    %196 = vector.shape_cast %195 : vector<1x8x32xf32> to vector<8x32xf32>
    %197 = vector.shape_cast %165 : vector<8x32xf32> to vector<1x8x32xf32>
    tpu.vector_store %arg6[%c2_62, %c0_63, %c0_64], %197 {strides = array<i32>} : memref<4x8x32xf32, #tpu.memory_space<vmem>>, vector<1x8x32xf32>,
    %c1_65 = arith.constant 1 : index
    %c0_66 = arith.constant 0 : index
    %c0_67 = arith.constant 0 : index
    %198 = vector.load %arg7[%c1_65, %c0_66, %c0_67] : memref<4x8x32xf32, #tpu.memory_space<vmem>>, vector<1x8x32xf32>
    %199 = vector.shape_cast %198 : vector<1x8x32xf32> to vector<8x32xf32>
    %200 = vector.shape_cast %194 : vector<8x32xf32> to vector<1x8x32xf32>
    tpu.vector_store %arg7[%c1_65, %c0_66, %c0_67], %200 {strides = array<i32>} : memref<4x8x32xf32, #tpu.memory_space<vmem>>, vector<1x8x32xf32>,
    %c3_68 = arith.constant 3 : index
    %c0_69 = arith.constant 0 : index
    %c0_70 = arith.constant 0 : index
    %201 = vector.load %arg1[%c3_68, %c0_69, %c0_70] : memref<4x8x128xf32, #tpu.memory_space<vmem>>, vector<1x8x128xf32>
    %202 = vector.shape_cast %201 : vector<1x8x128xf32> to vector<8x128xf32>
    %cst_71 = arith.constant dense<0.000000e+00> : vector<8x128xf32>
    %203 = tpu.matmul %165, %3, %cst_71 {dimension_numbers = #tpu.dot_dimension_numbers<[1], [0], [0], [1], [0, 0, 1, 1], [], []>, precision = #tpu.contract_precision<fp32>} : vector<8x32xf32>, vector<32x128xf32>, vector<8x128xf32> -> vector<8x128xf32>
    %204 = arith.addf %202, %203 : vector<8x128xf32>
    %205 = vector.extract_strided_slice %204 {offsets = [0, 0], sizes = [8, 32], strides = [1, 1]} : vector<8x128xf32> to vector<8x32xf32>
    %206 = arith.negf %205 : vector<8x32xf32>
    %207 = math.exp %206 : vector<8x32xf32>
    %cst_72 = arith.constant 1.000000e+00 : f32
    %208 = vector.broadcast %cst_72 : f32 to vector<8x32xf32>
    %209 = arith.addf %208, %207 : vector<8x32xf32>
    %210 = arith.divf %208, %209 : vector<8x32xf32>
    %211 = vector.extract_strided_slice %204 {offsets = [0, 32], sizes = [8, 32], strides = [1, 1]} : vector<8x128xf32> to vector<8x32xf32>
    %212 = arith.negf %211 : vector<8x32xf32>
    %213 = math.exp %212 : vector<8x32xf32>
    %cst_73 = arith.constant 1.000000e+00 : f32
    %214 = vector.broadcast %cst_73 : f32 to vector<8x32xf32>
    %215 = arith.addf %214, %213 : vector<8x32xf32>
    %216 = arith.divf %214, %215 : vector<8x32xf32>
    %217 = vector.extract_strided_slice %204 {offsets = [0, 64], sizes = [8, 32], strides = [1, 1]} : vector<8x128xf32> to vector<8x32xf32>
    %218 = math.tanh %217 : vector<8x32xf32>
    %219 = vector.extract_strided_slice %204 {offsets = [0, 96], sizes = [8, 32], strides = [1, 1]} : vector<8x128xf32> to vector<8x32xf32>
    %220 = arith.negf %219 : vector<8x32xf32>
    %221 = math.exp %220 : vector<8x32xf32>
    %cst_74 = arith.constant 1.000000e+00 : f32
    %222 = vector.broadcast %cst_74 : f32 to vector<8x32xf32>
    %223 = arith.addf %222, %221 : vector<8x32xf32>
    %224 = arith.divf %222, %223 : vector<8x32xf32>
    %225 = arith.mulf %216, %163 : vector<8x32xf32>
    %226 = arith.mulf %210, %218 : vector<8x32xf32>
    %227 = arith.addf %225, %226 : vector<8x32xf32>
    %228 = math.tanh %227 : vector<8x32xf32>
    %229 = arith.mulf %224, %228 : vector<8x32xf32>
    %c0_75 = arith.constant 0 : index
    %c0_76 = arith.constant 0 : index
    %c0_77 = arith.constant 0 : index
    %230 = vector.load %arg2[%c0_75, %c0_76, %c0_77] : memref<4x8x128xf32, #tpu.memory_space<vmem>>, vector<1x8x128xf32>
    %231 = vector.shape_cast %230 : vector<1x8x128xf32> to vector<8x128xf32>
    %cst_78 = arith.constant dense<0.000000e+00> : vector<8x128xf32>
    %232 = tpu.matmul %194, %4, %cst_78 {dimension_numbers = #tpu.dot_dimension_numbers<[1], [0], [0], [1], [0, 0, 1, 1], [], []>, precision = #tpu.contract_precision<fp32>} : vector<8x32xf32>, vector<32x128xf32>, vector<8x128xf32> -> vector<8x128xf32>
    %233 = arith.addf %231, %232 : vector<8x128xf32>
    %234 = vector.extract_strided_slice %233 {offsets = [0, 0], sizes = [8, 32], strides = [1, 1]} : vector<8x128xf32> to vector<8x32xf32>
    %235 = arith.negf %234 : vector<8x32xf32>
    %236 = math.exp %235 : vector<8x32xf32>
    %cst_79 = arith.constant 1.000000e+00 : f32
    %237 = vector.broadcast %cst_79 : f32 to vector<8x32xf32>
    %238 = arith.addf %237, %236 : vector<8x32xf32>
    %239 = arith.divf %237, %238 : vector<8x32xf32>
    %240 = vector.extract_strided_slice %233 {offsets = [0, 32], sizes = [8, 32], strides = [1, 1]} : vector<8x128xf32> to vector<8x32xf32>
    %241 = arith.negf %240 : vector<8x32xf32>
    %242 = math.exp %241 : vector<8x32xf32>
    %cst_80 = arith.constant 1.000000e+00 : f32
    %243 = vector.broadcast %cst_80 : f32 to vector<8x32xf32>
    %244 = arith.addf %243, %242 : vector<8x32xf32>
    %245 = arith.divf %243, %244 : vector<8x32xf32>
    %246 = vector.extract_strided_slice %233 {offsets = [0, 64], sizes = [8, 32], strides = [1, 1]} : vector<8x128xf32> to vector<8x32xf32>
    %247 = math.tanh %246 : vector<8x32xf32>
    %248 = vector.extract_strided_slice %233 {offsets = [0, 96], sizes = [8, 32], strides = [1, 1]} : vector<8x128xf32> to vector<8x32xf32>
    %249 = arith.negf %248 : vector<8x32xf32>
    %250 = math.exp %249 : vector<8x32xf32>
    %cst_81 = arith.constant 1.000000e+00 : f32
    %251 = vector.broadcast %cst_81 : f32 to vector<8x32xf32>
    %252 = arith.addf %251, %250 : vector<8x32xf32>
    %253 = arith.divf %251, %252 : vector<8x32xf32>
    %254 = arith.mulf %245, %192 : vector<8x32xf32>
    %255 = arith.mulf %239, %247 : vector<8x32xf32>
    %256 = arith.addf %254, %255 : vector<8x32xf32>
    %257 = math.tanh %256 : vector<8x32xf32>
    %258 = arith.mulf %253, %257 : vector<8x32xf32>
    %c3_82 = arith.constant 3 : index
    %c0_83 = arith.constant 0 : index
    %c0_84 = arith.constant 0 : index
    %259 = vector.load %arg6[%c3_82, %c0_83, %c0_84] : memref<4x8x32xf32, #tpu.memory_space<vmem>>, vector<1x8x32xf32>
    %260 = vector.shape_cast %259 : vector<1x8x32xf32> to vector<8x32xf32>
    %261 = vector.shape_cast %229 : vector<8x32xf32> to vector<1x8x32xf32>
    tpu.vector_store %arg6[%c3_82, %c0_83, %c0_84], %261 {strides = array<i32>} : memref<4x8x32xf32, #tpu.memory_space<vmem>>, vector<1x8x32xf32>,
    %c0_85 = arith.constant 0 : index
    %c0_86 = arith.constant 0 : index
    %c0_87 = arith.constant 0 : index
    %262 = vector.load %arg7[%c0_85, %c0_86, %c0_87] : memref<4x8x32xf32, #tpu.memory_space<vmem>>, vector<1x8x32xf32>
    %263 = vector.shape_cast %262 : vector<1x8x32xf32> to vector<8x32xf32>
    %264 = vector.shape_cast %258 : vector<8x32xf32> to vector<1x8x32xf32>
    tpu.vector_store %arg7[%c0_85, %c0_86, %c0_87], %264 {strides = array<i32>} : memref<4x8x32xf32, #tpu.memory_space<vmem>>, vector<1x8x32xf32>,
    %c0_88 = arith.constant 0 : index
    %c0_89 = arith.constant 0 : index
    %265 = vector.load %arg10[%c0_88, %c0_89] : memref<8x32xf32, #tpu.memory_space<vmem>>, vector<8x32xf32>
    tpu.vector_store %arg10[%c0_88, %c0_89], %229 {strides = array<i32>} : memref<8x32xf32, #tpu.memory_space<vmem>>, vector<8x32xf32>,
    %c0_90 = arith.constant 0 : index
    %c0_91 = arith.constant 0 : index
    %266 = vector.load %arg11[%c0_90, %c0_91] : memref<8x32xf32, #tpu.memory_space<vmem>>, vector<8x32xf32>
    tpu.vector_store %arg11[%c0_90, %c0_91], %227 {strides = array<i32>} : memref<8x32xf32, #tpu.memory_space<vmem>>, vector<8x32xf32>,
    %c0_92 = arith.constant 0 : index
    %c0_93 = arith.constant 0 : index
    %267 = vector.load %arg12[%c0_92, %c0_93] : memref<8x32xf32, #tpu.memory_space<vmem>>, vector<8x32xf32>
    tpu.vector_store %arg12[%c0_92, %c0_93], %258 {strides = array<i32>} : memref<8x32xf32, #tpu.memory_space<vmem>>, vector<8x32xf32>,
    %c0_94 = arith.constant 0 : index
    %c0_95 = arith.constant 0 : index
    %268 = vector.load %arg13[%c0_94, %c0_95] : memref<8x32xf32, #tpu.memory_space<vmem>>, vector<8x32xf32>
    tpu.vector_store %arg13[%c0_94, %c0_95], %256 {strides = array<i32>} : memref<8x32xf32, #tpu.memory_space<vmem>>, vector<8x32xf32>,
    %c3_i32 = arith.constant 3 : i32
    %269 = arith.cmpi eq, %arg0, %c3_i32 : i32
    %270 = arith.extui %269 : i1 to i32
    %c0_i32_96 = arith.constant 0 : i32
    %271 = arith.cmpi ne, %270, %c0_i32_96 : i32
    scf.if %271 {
      %c0_97 = arith.constant 0 : index
      %c0_98 = arith.constant 0 : index
      %c0_99 = arith.constant 0 : index
      %272 = vector.load %arg8[%c0_97, %c0_98, %c0_99] : memref<2x8x32xf32, #tpu.memory_space<vmem>>, vector<1x8x32xf32>
      %273 = vector.shape_cast %272 : vector<1x8x32xf32> to vector<8x32xf32>
      %274 = vector.shape_cast %229 : vector<8x32xf32> to vector<1x8x32xf32>
      tpu.vector_store %arg8[%c0_97, %c0_98, %c0_99], %274 {strides = array<i32>} : memref<2x8x32xf32, #tpu.memory_space<vmem>>, vector<1x8x32xf32>,
      %c1_100 = arith.constant 1 : index
      %c0_101 = arith.constant 0 : index
      %c0_102 = arith.constant 0 : index
      %275 = vector.load %arg8[%c1_100, %c0_101, %c0_102] : memref<2x8x32xf32, #tpu.memory_space<vmem>>, vector<1x8x32xf32>
      %276 = vector.shape_cast %275 : vector<1x8x32xf32> to vector<8x32xf32>
      %277 = vector.shape_cast %258 : vector<8x32xf32> to vector<1x8x32xf32>
      tpu.vector_store %arg8[%c1_100, %c0_101, %c0_102], %277 {strides = array<i32>} : memref<2x8x32xf32, #tpu.memory_space<vmem>>, vector<1x8x32xf32>,
      %c0_103 = arith.constant 0 : index
      %c0_104 = arith.constant 0 : index
      %c0_105 = arith.constant 0 : index
      %278 = vector.load %arg9[%c0_103, %c0_104, %c0_105] : memref<2x8x32xf32, #tpu.memory_space<vmem>>, vector<1x8x32xf32>
      %279 = vector.shape_cast %278 : vector<1x8x32xf32> to vector<8x32xf32>
      %280 = vector.shape_cast %227 : vector<8x32xf32> to vector<1x8x32xf32>
      tpu.vector_store %arg9[%c0_103, %c0_104, %c0_105], %280 {strides = array<i32>} : memref<2x8x32xf32, #tpu.memory_space<vmem>>, vector<1x8x32xf32>,
      %c1_106 = arith.constant 1 : index
      %c0_107 = arith.constant 0 : index
      %c0_108 = arith.constant 0 : index
      %281 = vector.load %arg9[%c1_106, %c0_107, %c0_108] : memref<2x8x32xf32, #tpu.memory_space<vmem>>, vector<1x8x32xf32>
      %282 = vector.shape_cast %281 : vector<1x8x32xf32> to vector<8x32xf32>
      %283 = vector.shape_cast %256 : vector<8x32xf32> to vector<1x8x32xf32>
      tpu.vector_store %arg9[%c1_106, %c0_107, %c0_108], %283 {strides = array<i32>} : memref<2x8x32xf32, #tpu.memory_space<vmem>>, vector<1x8x32xf32>,
    } else {
    }
    return
  }
  func.func @transform_0(%arg0: i32) -> (i32, i32, i32) {
    %c0_i32 = arith.constant 0 : i32
    %c0_i32_0 = arith.constant 0 : i32
    %c0_i32_1 = arith.constant 0 : i32
    return %arg0, %c0_i32, %c0_i32_0 : i32, i32, i32
  }
  func.func @transform_1(%arg0: i32) -> (i32, i32, i32) {
    %c3_i32 = arith.constant 3 : i32
    %0 = arith.subi %c3_i32, %arg0 : i32
    %c0_i32 = arith.constant 0 : i32
    %c0_i32_0 = arith.constant 0 : i32
    %c0_i32_1 = arith.constant 0 : i32
    return %0, %c0_i32, %c0_i32_0 : i32, i32, i32
  }
  func.func @transform_2(%arg0: i32) -> (i32, i32) {
    %c0_i32 = arith.constant 0 : i32
    %c0_i32_0 = arith.constant 0 : i32
    %c0_i32_1 = arith.constant 0 : i32
    return %c0_i32, %c0_i32_0 : i32, i32
  }
  func.func @transform_3(%arg0: i32) -> (i32, i32) {
    %c0_i32 = arith.constant 0 : i32
    %c0_i32_0 = arith.constant 0 : i32
    %c0_i32_1 = arith.constant 0 : i32
    return %c0_i32, %c0_i32_0 : i32, i32
  }
  func.func @transform_4(%arg0: i32) -> (i32, i32) {
    %c0_i32 = arith.constant 0 : i32
    %c0_i32_0 = arith.constant 0 : i32
    %c0_i32_1 = arith.constant 0 : i32
    return %c0_i32, %c0_i32_0 : i32, i32
  }
  func.func @transform_5(%arg0: i32) -> (i32, i32, i32) {
    %c0_i32 = arith.constant 0 : i32
    %c0_i32_0 = arith.constant 0 : i32
    %c0_i32_1 = arith.constant 0 : i32
    return %arg0, %c0_i32, %c0_i32_0 : i32, i32, i32
  }
  func.func @transform_6(%arg0: i32) -> (i32, i32, i32) {
    %c3_i32 = arith.constant 3 : i32
    %0 = arith.subi %c3_i32, %arg0 : i32
    %c0_i32 = arith.constant 0 : i32
    %c0_i32_0 = arith.constant 0 : i32
    %c0_i32_1 = arith.constant 0 : i32
    return %0, %c0_i32, %c0_i32_0 : i32, i32, i32
  }
  func.func @transform_7(%arg0: i32) -> (i32, i32, i32) {
    %c0_i32 = arith.constant 0 : i32
    %c0_i32_0 = arith.constant 0 : i32
    %c0_i32_1 = arith.constant 0 : i32
    %c0_i32_2 = arith.constant 0 : i32
    return %c0_i32, %c0_i32_0, %c0_i32_1 : i32, i32, i32
  }
  func.func @transform_8(%arg0: i32) -> (i32, i32, i32) {
    %c0_i32 = arith.constant 0 : i32
    %c0_i32_0 = arith.constant 0 : i32
    %c0_i32_1 = arith.constant 0 : i32
    %c0_i32_2 = arith.constant 0 : i32
    return %c0_i32, %c0_i32_0, %c0_i32_1 : i32, i32, i32
  }
}

</mosaic_0001>

<llo_original>
// kernel: bilstm_forward.1
$region0: #{bilstm_forward.1}
  #allocation0 [shape = 'u32[]', space=smem, size = 0x4, offset = 0x4, fixed_abs, tag = 'smem constant byte address 0x4 - core index']
  #allocation1 [shape = 'u32[144,128]{1,0:T(1,128)}', space=vmem, size = 0x12000, scoped, tag = 'internal scratch']
  #allocation2 [shape = 'f32[8,32]{1,0:T(8,128)}', space=vmem, size = 0x1000, scoped, tag = 'scratch operand']
  #allocation3 [shape = 'f32[8,32]{1,0:T(8,128)}', space=vmem, size = 0x1000, scoped, tag = 'scratch operand']
  #allocation4 [shape = 'f32[8,32]{1,0:T(8,128)}', space=vmem, size = 0x1000, scoped, tag = 'scratch operand']
  #allocation5 [shape = 'f32[8,32]{1,0:T(8,128)}', space=vmem, size = 0x1000, scoped, tag = 'scratch operand']
  %s0 = inlined_call_operand.hbm [shape: f32[16,8,128], index: 0, kind: input, shape index: {}]
  %s1 = inlined_call_operand.hbm [shape: f32[16,8,128], index: 1, kind: input, shape index: {}]
  %s2 = inlined_call_operand.hbm [shape: f32[32,128], index: 2, kind: input, shape index: {}]
  %s3 = inlined_call_operand.hbm [shape: f32[32,128], index: 3, kind: input, shape index: {}]
  %s4 = inlined_call_operand.hbm [shape: f32[8,32], index: 4, kind: input, shape index: {}]
  %s5 = inlined_call_operand.hbm [shape: f32[16,8,32], index: 5, kind: output, shape index: {0}]
  %s6 = inlined_call_operand.hbm [shape: f32[16,8,32], index: 6, kind: output, shape index: {1}]
  %s7 = inlined_call_operand.hbm [shape: f32[2,8,32], index: 7, kind: output, shape index: {2}]
  %s8 = inlined_call_operand.hbm [shape: f32[2,8,32], index: 8, kind: output, shape index: {3}]
  %9 = xla_tuple %s5, %s6, %s7, %s8
  %s10 = sld [smem:[#allocation0]]
  $region105: #{bilstm_forward.1} parent=0
    _
  %s12 = ssub.s32 1, %s10
  %s13 = scalar_select 0, %s12, %s10
  $region1: #{bilstm_forward.1} parent=0
    #allocation6 [shape = 'u8[32768]{0}', space=vmem, size = 0x8000, scoped, tag = 'input window, operand 0']
    #allocation7 [shape = 's32[2]{0}', space=sflag, size = 0x8, scoped, tag = 'scoped memory for bilstm_forward.1']
    #allocation8 [shape = 's32[2]{0}', space=sflag, size = 0x8, scoped, tag = 'scoped memory for bilstm_forward.1']
    #allocation9 [shape = 'u8[32768]{0}', space=vmem, size = 0x8000, scoped, tag = 'input window, operand 1']
    #allocation10 [shape = 's32[2]{0}', space=sflag, size = 0x8, scoped, tag = 'scoped memory for bilstm_forward.1']
    #allocation11 [shape = 'u8[16384]{0}', space=vmem, size = 0x4000, scoped, tag = 'input window, operand 2, single buffered']
    #allocation12 [shape = 'u8[16384]{0}', space=vmem, size = 0x4000, scoped, tag = 'input window, operand 3, single buffered']
    #allocation13 [shape = 's32[1]{0}', space=sflag, size = 0x4, scoped, tag = 'scoped memory for bilstm_forward.1']
    #allocation14 [shape = 'u8[4096]{0}', space=vmem, size = 0x1000, scoped, tag = 'input window, operand 4, single buffered']
    #allocation15 [shape = 'u8[32768]{0}', space=vmem, size = 0x8000, scoped, tag = 'output window, operand 0']
    #allocation16 [shape = 'u8[32768]{0}', space=vmem, size = 0x8000, scoped, tag = 'output window, operand 1']
    #allocation17 [shape = 's32[2]{0}', space=sflag, size = 0x8, scoped, tag = 'scoped memory for bilstm_forward.1']
    #allocation18 [shape = 'u8[8192]{0}', space=vmem, size = 0x2000, scoped, tag = 'output window, operand 2, single buffered']
    #allocation19 [shape = 'u8[8192]{0}', space=vmem, size = 0x2000, scoped, tag = 'output window, operand 3, single buffered']
    #allocation20 [shape = 's32[1]{0}', space=sflag, size = 0x4, scoped, tag = 'scoped memory for bilstm_forward.1']
    %14 = vsyncpa [#allocation7], 0
    %s15 = scalar_lea.sflag [#allocation7], 1
    %16 = vsyncpa %s15, 0
    %17 = vsyncpa [#allocation10], 0
    %s18 = scalar_lea.sflag [#allocation10], 1
    %19 = vsyncpa %s18, 0
    %20 = vsyncpa [#allocation13], 0
    %21 = vsyncpa [#allocation8], 0
    %s22 = scalar_lea.sflag [#allocation8], 1
    %23 = vsyncpa %s22, 0
    %24 = vsyncpa [#allocation17], 0
    %s25 = scalar_lea.sflag [#allocation17], 1
    %26 = vsyncpa %s25, 0
    %27 = vsyncpa [#allocation20], 0
    loop: start=0, step=1, limit=6
    $region2: #{bilstm_forward.1} parent=1 // loop_pre_header
      _
    $region3: #{bilstm_forward.1} parent=1 // loop_header
      %s29 = sphi 0, %s33
      %p30 = scmp.ge.s32.totalorder %s29, 6
      %s39 = sphi 0, %s41
      %s42 = sphi 0, %s39
      %s43 = sphi 0, %s42
      %s59 = sphi 0, %s43
      %s67 = sphi 0, %s69
      %s70 = sphi 0, %s67
      %s71 = sphi 0, %s70
      %s87 = sphi 0, %s71
      %s91 = sphi 0, %s91
      %s93 = sphi 0, %s91
      %s94 = sphi 0, %s93
      %s108 = sphi 0, %s94
      %s112 = sphi 0, %s112
      %s114 = sphi 0, %s112
      %s115 = sphi 0, %s114
      %s129 = sphi 0, %s115
      %s133 = sphi 0, %s133
      %s135 = sphi 0, %s133
      %s136 = sphi 0, %s135
      %s150 = sphi 0, %s136
      %s156 = sphi 0, %s158
      %s159 = sphi 0, %s156
      %s160 = sphi 0, %s159
      %s176 = sphi 0, %s160
      %s184 = sphi 0, %s186
      %s187 = sphi 0, %s184
      %s188 = sphi 0, %s187
      %s204 = sphi 0, %s188
      %s208 = sphi 0, %s208
      %s210 = sphi 0, %s208
      %s211 = sphi 0, %s210
      %s225 = sphi 0, %s211
      %s229 = sphi 0, %s229
      %s231 = sphi 0, %s229
      %s232 = sphi 0, %s231
      %s246 = sphi 0, %s232
    $region4: #{bilstm_forward.1} parent=1 // loop_header_branch
      %32 = sbr.rel (%p30) target = $region8
    $region5: #{bilstm_forward.1} parent=1 // loop_body
      %s34 = ssub.s32 %s29, 1
      %s35 = ssub.s32 %s29, 2
      %s36 = sadd.s32 %s29, 1
      %s37 = ssub.s32 %s29, %s36
      %p38 = scmp.eq.s32.totalorder %s37, 0
      %s40 = sadd.s32 %s39, 1
      %s41 = scalar_select %p38, %s39, %s40
      %p44 = pneg %p38
      %p45 = scmp.eq.s32.totalorder %s29, 3
      %p46 = por %p44, %p45
      %p47 = scmp.ne.s32.totalorder %s39, %s42
      %p48 = scmp.eq.s32.totalorder %s29, 0
      %p49 = por %p47, %p48
      %p50 = scmp.ne.s32.totalorder %s39, %s42
      %p51 = scmp.eq.s32.totalorder %s34, 3
      %p52 = por %p50, %p51
      %p53 = scmp.ne.s32.totalorder %s42, %s43
      %p54 = scmp.eq.s32.totalorder %s34, 0
      %p55 = por %p53, %p54
      %p56 = scmp.ne.s32.totalorder %s42, %s43
      %p57 = scmp.eq.s32.totalorder %s35, 3
      %p58 = por %p56, %p57
      %p60 = scmp.ne.s32.totalorder %s43, %s59
      %p61 = scmp.eq.s32.totalorder %s35, 0
      %p62 = por %p60, %p61
      %s63 = ssub.s32 3, %s29
      %s64 = ssub.s32 3, %s36
      %s65 = ssub.s32 %s63, %s64
      %p66 = scmp.eq.s32.totalorder %s65, 0
      %s68 = sadd.s32 %s67, 1
      %s69 = scalar_select %p66, %s67, %s68
      %p72 = pneg %p66
      %p73 = scmp.eq.s32.totalorder %s29, 3
      %p74 = por %p72, %p73
      %p75 = scmp.ne.s32.totalorder %s67, %s70
      %p76 = scmp.eq.s32.totalorder %s29, 0
      %p77 = por %p75, %p76
      %p78 = scmp.ne.s32.totalorder %s67, %s70
      %p79 = scmp.eq.s32.totalorder %s34, 3
      %p80 = por %p78, %p79
      %p81 = scmp.ne.s32.totalorder %s70, %s71
      %p82 = scmp.eq.s32.totalorder %s34, 0
      %p83 = por %p81, %p82
      %p84 = scmp.ne.s32.totalorder %s70, %s71
      %p85 = scmp.eq.s32.totalorder %s35, 3
      %p86 = por %p84, %p85
      %p88 = scmp.ne.s32.totalorder %s71, %s87
      %p89 = scmp.eq.s32.totalorder %s35, 0
      %p90 = por %p88, %p89
      %s92 = sadd.s32 %s91, 1
      %p95 = scmp.eq.s32.totalorder %s29, 3
      %p96 = scmp.ne.s32.totalorder %s91, %s93
      %p97 = scmp.eq.s32.totalorder %s29, 0
      %p98 = por %p96, %p97
      %p99 = scmp.ne.s32.totalorder %s91, %s93
      %p100 = scmp.eq.s32.totalorder %s34, 3
      %p101 = por %p99, %p100
      %p102 = scmp.ne.s32.totalorder %s93, %s94
      %p103 = scmp.eq.s32.totalorder %s34, 0
      %p104 = por %p102, %p103
      %p105 = scmp.ne.s32.totalorder %s93, %s94
      %p106 = scmp.eq.s32.totalorder %s35, 3
      %p107 = por %p105, %p106
      %p109 = scmp.ne.s32.totalorder %s94, %s108
      %p110 = scmp.eq.s32.totalorder %s35, 0
      %p111 = por %p109, %p110
      %s113 = sadd.s32 %s112, 1
      %p116 = scmp.eq.s32.totalorder %s29, 3
      %p117 = scmp.ne.s32.totalorder %s112, %s114
      %p118 = scmp.eq.s32.totalorder %s29, 0
      %p119 = por %p117, %p118
      %p120 = scmp.ne.s32.totalorder %s112, %s114
      %p121 = scmp.eq.s32.totalorder %s34, 3
      %p122 = por %p120, %p121
      %p123 = scmp.ne.s32.totalorder %s114, %s115
      %p124 = scmp.eq.s32.totalorder %s34, 0
      %p125 = por %p123, %p124
      %p126 = scmp.ne.s32.totalorder %s114, %s115
      %p127 = scmp.eq.s32.totalorder %s35, 3
      %p128 = por %p126, %p127
      %p130 = scmp.ne.s32.totalorder %s115, %s129
      %p131 = scmp.eq.s32.totalorder %s35, 0
      %p132 = por %p130, %p131
      %s134 = sadd.s32 %s133, 1
      %p137 = scmp.eq.s32.totalorder %s29, 3
      %p138 = scmp.ne.s32.totalorder %s133, %s135
      %p139 = scmp.eq.s32.totalorder %s29, 0
      %p140 = por %p138, %p139
      %p141 = scmp.ne.s32.totalorder %s133, %s135
      %p142 = scmp.eq.s32.totalorder %s34, 3
      %p143 = por %p141, %p142
      %p144 = scmp.ne.s32.totalorder %s135, %s136
      %p145 = scmp.eq.s32.totalorder %s34, 0
      %p146 = por %p144, %p145
      %p147 = scmp.ne.s32.totalorder %s135, %s136
      %p148 = scmp.eq.s32.totalorder %s35, 3
      %p149 = por %p147, %p148
      %p151 = scmp.ne.s32.totalorder %s136, %s150
      %p152 = scmp.eq.s32.totalorder %s35, 0
      %p153 = por %p151, %p152
      %s154 = ssub.s32 %s29, %s36
      %p155 = scmp.eq.s32.totalorder %s154, 0
      %s157 = sadd.s32 %s156, 1
      %s158 = scalar_select %p155, %s156, %s157
      %p161 = pneg %p155
      %p162 = scmp.eq.s32.totalorder %s29, 3
      %p163 = por %p161, %p162
      %p164 = scmp.ne.s32.totalorder %s156, %s159
      %p165 = scmp.eq.s32.totalorder %s29, 0
      %p166 = por %p164, %p165
      %p167 = scmp.ne.s32.totalorder %s156, %s159
      %p168 = scmp.eq.s32.totalorder %s34, 3
      %p169 = por %p167, %p168
      %p170 = scmp.ne.s32.totalorder %s159, %s160
      %p171 = scmp.eq.s32.totalorder %s34, 0
      %p172 = por %p170, %p171
      %p173 = scmp.ne.s32.totalorder %s159, %s160
      %p174 = scmp.eq.s32.totalorder %s35, 3
      %p175 = por %p173, %p174
      %p177 = scmp.ne.s32.totalorder %s160, %s176
      %p178 = scmp.eq.s32.totalorder %s35, 0
      %p179 = por %p177, %p178
      %s180 = ssub.s32 3, %s29
      %s181 = ssub.s32 3, %s36
      %s182 = ssub.s32 %s180, %s181
      %p183 = scmp.eq.s32.totalorder %s182, 0
      %s185 = sadd.s32 %s184, 1
      %s186 = scalar_select %p183, %s184, %s185
      %p189 = pneg %p183
      %p190 = scmp.eq.s32.totalorder %s29, 3
      %p191 = por %p189, %p190
      %p192 = scmp.ne.s32.totalorder %s184, %s187
      %p193 = scmp.eq.s32.totalorder %s29, 0
      %p194 = por %p192, %p193
      %p195 = scmp.ne.s32.totalorder %s184, %s187
      %p196 = scmp.eq.s32.totalorder %s34, 3
      %p197 = por %p195, %p196
      %p198 = scmp.ne.s32.totalorder %s187, %s188
      %p199 = scmp.eq.s32.totalorder %s34, 0
      %p200 = por %p198, %p199
      %p201 = scmp.ne.s32.totalorder %s187, %s188
      %p202 = scmp.eq.s32.totalorder %s35, 3
      %p203 = por %p201, %p202
      %p205 = scmp.ne.s32.totalorder %s188, %s204
      %p206 = scmp.eq.s32.totalorder %s35, 0
      %p207 = por %p205, %p206
      %s209 = sadd.s32 %s208, 1
      %p212 = scmp.eq.s32.totalorder %s29, 3
      %p213 = scmp.ne.s32.totalorder %s208, %s210
      %p214 = scmp.eq.s32.totalorder %s29, 0
      %p215 = por %p213, %p214
      %p216 = scmp.ne.s32.totalorder %s208, %s210
      %p217 = scmp.eq.s32.totalorder %s34, 3
      %p218 = por %p216, %p217
      %p219 = scmp.ne.s32.totalorder %s210, %s211
      %p220 = scmp.eq.s32.totalorder %s34, 0
      %p221 = por %p219, %p220
      %p222 = scmp.ne.s32.totalorder %s210, %s211
      %p223 = scmp.eq.s32.totalorder %s35, 3
      %p224 = por %p222, %p223
      %p226 = scmp.ne.s32.totalorder %s211, %s225
      %p227 = scmp.eq.s32.totalorder %s35, 0
      %p228 = por %p226, %p227
      %s230 = sadd.s32 %s229, 1
      %p233 = scmp.eq.s32.totalorder %s29, 3
      %p234 = scmp.ne.s32.totalorder %s229, %s231
      %p235 = scmp.eq.s32.totalorder %s29, 0
      %p236 = por %p234, %p235
      %p237 = scmp.ne.s32.totalorder %s229, %s231
      %p238 = scmp.eq.s32.totalorder %s34, 3
      %p239 = por %p237, %p238
      %p240 = scmp.ne.s32.totalorder %s231, %s232
      %p241 = scmp.eq.s32.totalorder %s34, 0
      %p242 = por %p240, %p241
      %p243 = scmp.ne.s32.totalorder %s231, %s232
      %p244 = scmp.eq.s32.totalorder %s35, 3
      %p245 = por %p243, %p244
      %p247 = scmp.ne.s32.totalorder %s232, %s246
      %p248 = scmp.eq.s32.totalorder %s35, 0
      %p249 = por %p247, %p248
      %p250 = scmp.le.s32.totalorder 1, %s29
      %p251 = scmp.lt.s32.totalorder %s29, 5
      %p252 = pnand %p250, %p251
      %p253 = pneg %p252
      // Predicated region
      $region9: #{bilstm_forward.1} parent=5 // pred_check
        _
      $region10: #{bilstm_forward.1} parent=5 // pred_check_branch
        %255 = sbr.rel (%p252) target = $region12
      $region11: #{bilstm_forward.1} parent=5 // pred_region
        %s256 = ssub.s32 %s29, 1
        // Predicated region
        $region13: #{bilstm_forward.1} parent=11 // pred_check
          %p257 = pneg %p104
        $region14: #{bilstm_forward.1} parent=11 // pred_check_branch
          %259 = sbr.rel (%p257) target = $region16
        $region15: #{bilstm_forward.1} parent=11 // pred_region
          %s261 = ssub.s32 512, 512
          %262 = vsyncadd [#allocation10], %s261
          %s263 = sshll.u32 [#allocation11], 4
          %s264 = int_to_ptr.vmem [resolvable:$true] %s263
          %269 = dma.hbm_to_vmem [thread:$0]  %s2, 512, %s264, [#allocation10], 128, 128, 8
        $region16: #{bilstm_forward.1} parent=11 // pred_fallthru
          _
        // Predicated region
        $region17: #{bilstm_forward.1} parent=11 // pred_check
          %p270 = pneg %p125
        $region18: #{bilstm_forward.1} parent=11 // pred_check_branch
          %272 = sbr.rel (%p270) target = $region20
        $region19: #{bilstm_forward.1} parent=11 // pred_region
          %s274 = ssub.s32 512, 512
          %275 = vsyncadd [#allocation13], %s274
          %s276 = sshll.u32 [#allocation12], 4
          %s277 = int_to_ptr.vmem [resolvable:$true] %s276
          %282 = dma.hbm_to_vmem [thread:$0]  %s3, 512, %s277, [#allocation13], 128, 128, 8
        $region20: #{bilstm_forward.1} parent=11 // pred_fallthru
          _
        // Predicated region
        $region21: #{bilstm_forward.1} parent=11 // pred_check
          %p283 = pneg %p146
        $region22: #{bilstm_forward.1} parent=11 // pred_check_branch
          %285 = sbr.rel (%p283) target = $region24
        $region23: #{bilstm_forward.1} parent=11 // pred_region
          %s287 = ssub.s32 128, 128
          %288 = vsyncadd [#allocation13], %s287
          %s290 = sshll.u32 [#allocation14], 4
          %s291 = int_to_ptr.vmem [resolvable:$true] %s290
          %293 = dma.hbm_to_vmem [thread:$0]  %s4, 128, %s291, [#allocation13]
        $region24: #{bilstm_forward.1} parent=11 // pred_fallthru
          _
      $region12: #{bilstm_forward.1} parent=5 // pred_fallthru
        _
      %p294 = scmp.lt.s32.totalorder %s29, 4
      // Predicated region
      $region25: #{bilstm_forward.1} parent=5 // pred_check
        %p295 = pneg %p294
      $region26: #{bilstm_forward.1} parent=5 // pred_check_branch
        %297 = sbr.rel (%p295) target = $region28
      $region27: #{bilstm_forward.1} parent=5 // pred_region
        // Predicated region
        $region29: #{bilstm_forward.1} parent=27 // pred_check
          %p298 = pneg %p49
        $region30: #{bilstm_forward.1} parent=27 // pred_check_branch
          %300 = sbr.rel (%p298) target = $region32
        $region31: #{bilstm_forward.1} parent=27 // pred_region
          %s301 = sand.u32 %s39, 1
          %s302 = scalar_lea.sflag [#allocation7], %s301
          %s303 = sand.u32 %s39, 1
          %s304 = smul.addr %s303, 32
          %s305 = scalar_lea.vmem [#allocation6], %s304
          %s306 = smul.u32 4, %s29
          %s308 = ssub.s32 512, 512
          %309 = vsyncadd %s302, %s308
          %s310 = smul.addr %s306, 128
          %s311 = scalar_lea.hbm %s0, %s310
          %s312 = sshll.u32 %s305, 4
          %s313 = int_to_ptr.vmem [resolvable:$true] %s312
          %318 = dma.hbm_to_vmem [thread:$0]  %s311, 512, %s313, %s302, 128, 128, 8
        $region32: #{bilstm_forward.1} parent=27 // pred_fallthru
          _
        // Predicated region
        $region33: #{bilstm_forward.1} parent=27 // pred_check
          %p319 = pneg %p77
        $region34: #{bilstm_forward.1} parent=27 // pred_check_branch
          %321 = sbr.rel (%p319) target = $region36
        $region35: #{bilstm_forward.1} parent=27 // pred_region
          %s322 = sand.u32 %s29, 1
          %s323 = scalar_lea.sflag [#allocation10], %s322
          %s324 = sand.u32 %s67, 1
          %s325 = smul.addr %s324, 32
          %s326 = scalar_lea.vmem [#allocation9], %s325
          %s327 = ssub.s32 3, %s29
          %s328 = smul.u32 4, %s327
          %s330 = ssub.s32 512, 512
          %331 = vsyncadd %s323, %s330
          %s332 = smul.addr %s328, 128
          %s333 = scalar_lea.hbm %s1, %s332
          %s334 = sshll.u32 %s326, 4
          %s335 = int_to_ptr.vmem [resolvable:$true] %s334
          %340 = dma.hbm_to_vmem [thread:$0]  %s333, 512, %s335, %s323, 128, 128, 8
        $region36: #{bilstm_forward.1} parent=27 // pred_fallthru
          _
      $region28: #{bilstm_forward.1} parent=5 // pred_fallthru
        _
      %p341 = scmp.le.s32.totalorder 1, %s29
      %p342 = scmp.lt.s32.totalorder %s29, 5
      %p343 = pnand %p341, %p342
      %p344 = pneg %p343
      // Predicated region
      $region37: #{bilstm_forward.1} parent=5 // pred_check
        _
      $region38: #{bilstm_forward.1} parent=5 // pred_check_branch
        %346 = sbr.rel (%p343) target = $region40
      $region39: #{bilstm_forward.1} parent=5 // pred_region
        %s347 = ssub.s32 %s29, 1
        %s348 = sand.u32 %s42, 1
        %s349 = scalar_lea.sflag [#allocation7], %s348
        %s350 = sand.u32 %s42, 1
        %s351 = smul.addr %s350, 32
        %s352 = scalar_lea.vmem [#allocation6], %s351
        // Predicated region
        $region41: #{bilstm_forward.1} parent=39 // pred_check
          %p353 = pneg %p55
        $region42: #{bilstm_forward.1} parent=39 // pred_check_branch
          %355 = sbr.rel (%p353) target = $region44
        $region43: #{bilstm_forward.1} parent=39 // pred_region
          %356 = dma.done %s349, 512
        $region44: #{bilstm_forward.1} parent=39 // pred_fallthru
          _
        %s357 = sand.u32 %s34, 1
        %s358 = scalar_lea.sflag [#allocation10], %s357
        %s359 = sand.u32 %s70, 1
        %s360 = smul.addr %s359, 32
        %s361 = scalar_lea.vmem [#allocation9], %s360
        // Predicated region
        $region45: #{bilstm_forward.1} parent=39 // pred_check
          %p362 = pneg %p83
        $region46: #{bilstm_forward.1} parent=39 // pred_check_branch
          %364 = sbr.rel (%p362) target = $region48
        $region47: #{bilstm_forward.1} parent=39 // pred_region
          %365 = dma.done %s358, 512
        $region48: #{bilstm_forward.1} parent=39 // pred_fallthru
          _
        // Predicated region
        $region49: #{bilstm_forward.1} parent=39 // pred_check
          %p366 = pneg %p104
        $region50: #{bilstm_forward.1} parent=39 // pred_check_branch
          %368 = sbr.rel (%p366) target = $region52
        $region51: #{bilstm_forward.1} parent=39 // pred_region
          %369 = dma.done [#allocation10], 512
        $region52: #{bilstm_forward.1} parent=39 // pred_fallthru
          _
        // Predicated region
        $region53: #{bilstm_forward.1} parent=39 // pred_check
          %p370 = pneg %p125
        $region54: #{bilstm_forward.1} parent=39 // pred_check_branch
          %372 = sbr.rel (%p370) target = $region56
        $region55: #{bilstm_forward.1} parent=39 // pred_region
          %373 = dma.done [#allocation13], 512
        $region56: #{bilstm_forward.1} parent=39 // pred_fallthru
          _
        // Predicated region
        $region57: #{bilstm_forward.1} parent=39 // pred_check
          %p374 = pneg %p146
        $region58: #{bilstm_forward.1} parent=39 // pred_check_branch
          %376 = sbr.rel (%p374) target = $region60
        $region59: #{bilstm_forward.1} parent=39 // pred_region
          %377 = dma.done [#allocation13], 128
        $region60: #{bilstm_forward.1} parent=39 // pred_fallthru
          _
        %s378 = sand.u32 %s42, 1
        %s379 = scalar_lea.sflag [#allocation7], %s378
        %s380 = sand.u32 %s42, 1
        %s381 = smul.addr %s380, 32
        %s382 = scalar_lea.vmem [#allocation6], %s381
        %p383 = pneg %p55
        %p384 = pneg %p52
        %s385 = sand.u32 %s34, 1
        %s386 = scalar_lea.sflag [#allocation10], %s385
        %s387 = sand.u32 %s70, 1
        %s388 = smul.addr %s387, 32
        %s389 = scalar_lea.vmem [#allocation9], %s388
        %p390 = pneg %p83
        %p391 = pneg %p80
        %p392 = pneg %p104
        %p393 = pneg %p101
        %p394 = pneg %p125
        %p395 = pneg %p122
        %p396 = pneg %p146
        %p397 = pneg %p143
        %p398 = pneg %p172
        %p399 = pneg %p169
        %s400 = sand.u32 %s159, 1
        %s401 = scalar_lea.sflag [#allocation8], %s400
        %s402 = sand.u32 %s159, 1
        %s403 = smul.addr %s402, 32
        %s404 = scalar_lea.vmem [#allocation15], %s403
        %p405 = pneg %p200
        %p406 = pneg %p197
        %s407 = sand.u32 %s34, 1
        %s408 = scalar_lea.sflag [#allocation17], %s407
        %s409 = sand.u32 %s187, 1
        %s410 = smul.addr %s409, 32
        %s411 = scalar_lea.vmem [#allocation16], %s410
        %p412 = pneg %p221
        %p413 = pneg %p218
        %p414 = pneg %p242
        %p415 = pneg %p239
        %s416 = smul.u32 4, %s34
        %s417 = ssub.s32 3, %s34
        %s418 = smul.u32 4, %s417
        %s419 = smul.u32 4, %s34
        %s420 = ssub.s32 3, %s34
        %s421 = smul.u32 4, %s420
        %p422 = scmp.eq.s32.totalorder %s34, 0
        // Predicated region
        $region61: #{bilstm_forward.1} parent=39 // pred_check
          %p423 = pneg %p422
        $region62: #{bilstm_forward.1} parent=39 // pred_check_branch
          %425 = sbr.rel (%p423) target = $region64
        $region63: #{bilstm_forward.1} parent=39 // pred_region
          %vm426 = vcmask 261120
          %427 = vst.msk [vmem:[#allocation2] sm:$0xff] %vm426, 0.0
          %428 = vst.msk [vmem:[#allocation4] sm:$0xff] %vm426, 0.0
          %v429 = vld [vmem:[#allocation14] sm:$0xff]
          %430 = vst.msk [vmem:[#allocation3] sm:$0xff] %vm426, %v429
          %431 = vst.msk [vmem:[#allocation5] sm:$0xff] %vm426, %v429
        $region64: #{bilstm_forward.1} parent=39 // pred_fallthru
          _
        %v432 = vld [vmem:[#allocation11] sm:$0xff]
        %v433 = vld [vmem:[#allocation11 + $0x8] sm:$0xff]
        %v434 = vld [vmem:[#allocation11 + $0x10] sm:$0xff]
        %v435 = vld [vmem:[#allocation11 + $0x18] sm:$0xff]
        %v436 = vld [vmem:[#allocation12] sm:$0xff]
        %v437 = vld [vmem:[#allocation12 + $0x8] sm:$0xff]
        %v438 = vld [vmem:[#allocation12 + $0x10] sm:$0xff]
        %v439 = vld [vmem:[#allocation12 + $0x18] sm:$0xff]
        %v440 = vld [vmem:[#allocation2] sm:$0xff]
        %v441 = vld [vmem:[#allocation3] sm:$0xff]
        %v442 = vld [vmem:[#allocation4] sm:$0xff]
        %v443 = vld [vmem:[#allocation5] sm:$0xff]
        %v444 = vld [vmem:[%s352] sm:$0xff]
        %vm445 = vcmask 261120
        %v447 = vsel %vm445, %v440, 0
        %449 = vmatprep.subr.mxu0 0.0
        %v450 = vand.u32 %v432, 4294901760
        %451 = vmatpush1.msra.mxu0 %v450
        %452 = vmatprep.subr.mxu0 0.0
        %v453 = vand.u32 %v433, 4294901760
        %454 = vmatpush1.msra.mxu0 %v453
        %455 = vmatprep.subr.mxu0 0.0
        %v456 = vand.u32 %v434, 4294901760
        %457 = vmatpush1.msra.mxu0 %v456
        %458 = vmatprep.subr.mxu0 0.0
        %v459 = vand.u32 %v435, 4294901760
        %460 = vmatpush1.msra.mxu0 %v459
        %461 = vmatprep.subr.mxu0 0.0
        %462 = vmatpush1.msra.mxu0 0.0
        %463 = vmatprep.subr.mxu0 0.0
        %464 = vmatpush1.msra.mxu0 0.0
        %465 = vmatprep.subr.mxu0 0.0
        %466 = vmatpush1.msra.mxu0 0.0
        %467 = vmatprep.subr.mxu0 0.0
        %468 = vmatpush1.msra.mxu0 0.0
        %469 = vmatprep.subr.mxu0 0.0
        %470 = vmatpush1.msra.mxu0 0.0
        %471 = vmatprep.subr.mxu0 0.0
        %472 = vmatpush1.msra.mxu0 0.0
        %473 = vmatprep.subr.mxu0 0.0
        %474 = vmatpush1.msra.mxu0 0.0
        %475 = vmatprep.subr.mxu0 0.0
        %476 = vmatpush1.msra.mxu0 0.0
        %477 = vmatprep.subr.mxu0 0.0
        %478 = vmatpush1.msra.mxu0 0.0
        %479 = vmatprep.subr.mxu0 0.0
        %480 = vmatpush1.msra.mxu0 0.0
        %481 = vmatprep.subr.mxu0 0.0
        %482 = vmatpush1.msra.mxu0 0.0
        %483 = vmatprep.subr.mxu0 0.0
        %484 = vmatpush1.msra.mxu0 0.0
        %485 = vmatprep.subr.mxu0 0.0
        %486 = vmatpush1.msra.mxu0 0.0
        %487 = vmatprep.subr.mxu0 0.0
        %488 = vmatpush1.msra.mxu0 0.0
        %489 = vmatprep.subr.mxu0 0.0
        %490 = vmatpush1.msra.mxu0 0.0
        %491 = vmatprep.subr.mxu0 0.0
        %492 = vmatpush1.msra.mxu0 0.0
        %493 = vmatprep.subr.mxu0 0.0
        %494 = vmatpush1.msra.mxu0 0.0
        %495 = vmatprep.subr.mxu0 0.0
        %496 = vmatpush1.msra.mxu0 0.0
        %497 = vmatprep.subr.mxu0 0.0
        %498 = vmatpush1.msra.mxu0 0.0
        %499 = vmatprep.subr.mxu0 0.0
        %500 = vmatpush1.msra.mxu0 0.0
        %501 = vmatprep.subr.mxu0 0.0
        %502 = vmatpush1.msra.mxu0 0.0
        %503 = vmatprep.subr.mxu0 0.0
        %504 = vmatpush1.msra.mxu0 0.0
        %505 = vmatprep.subr.mxu0 0.0
        %506 = vmatpush1.msra.mxu0 0.0
        %507 = vmatprep.subr.mxu0 0.0
        %508 = vmatpush1.msra.mxu0 0.0
        %509 = vmatprep.subr.mxu0 0.0
        %510 = vmatpush1.msra.mxu0 0.0
        %511 = vmatprep.subr.mxu0 0.0
        %512 = vmatpush1.msra.mxu0 0.0
        %513 = vmatprep.subr.mxu0 0.0
        %514 = vmatpush1.msra.mxu0 0.0
        %515 = vmatprep.subr.mxu0 0.0
        %516 = vmatpush1.msra.mxu0 0.0
        %517 = vmatprep.mubr.f32.mxu0 0.0
        %v518 = vand.u32 %v447, 4294901760
        %v519 = vsub.f32 %v447, %v518
        %v520 = vand.u32 %v519, 4294901760
        %v521 = vsub.f32 %v519, %v520
        %v522 = vand.u32 %v521, 4294901760
        %523 = vmatmul.mubr.f32.gmra.mrb[0].mxu0 %v522
        %v524 = vpop.f32.mrb[0].mxu0
        %v525 = vadd.f32 0.0, %v524
        %v526 = vpop.f32.mrb[0].mxu0
        %527 = vdwg.mxu0
        %528 = vmatprep.subr.mxu0 0.0
        %v529 = vand.u32 %v432, 4294901760
        %v530 = vsub.f32 %v432, %v529
        %v531 = vand.u32 %v530, 4294901760
        %v532 = vsub.f32 %v530, %v531
        %v533 = vand.u32 %v532, 4294901760
        %534 = vmatpush1.msra.mxu0 %v533
        %535 = vmatprep.subr.mxu0 0.0
        %v536 = vand.u32 %v433, 4294901760
        %v537 = vsub.f32 %v433, %v536
        %v538 = vand.u32 %v537, 4294901760
        %v539 = vsub.f32 %v537, %v538
        %v540 = vand.u32 %v539, 4294901760
        %541 = vmatpush1.msra.mxu0 %v540
        %542 = vmatprep.subr.mxu0 0.0
        %v543 = vand.u32 %v434, 4294901760
        %v544 = vsub.f32 %v434, %v543
        %v545 = vand.u32 %v544, 4294901760
        %v546 = vsub.f32 %v544, %v545
        %v547 = vand.u32 %v546, 4294901760
        %548 = vmatpush1.msra.mxu0 %v547
        %549 = vmatprep.subr.mxu0 0.0
        %v550 = vand.u32 %v435, 4294901760
        %v551 = vsub.f32 %v435, %v550
        %v552 = vand.u32 %v551, 4294901760
        %v553 = vsub.f32 %v551, %v552
        %v554 = vand.u32 %v553, 4294901760
        %555 = vmatpush1.msra.mxu0 %v554
        %556 = vmatprep.subr.mxu0 0.0
        %557 = vmatpush1.msra.mxu0 0.0
        %558 = vmatprep.subr.mxu0 0.0
        %559 = vmatpush1.msra.mxu0 0.0
        %560 = vmatprep.subr.mxu0 0.0
        %561 = vmatpush1.msra.mxu0 0.0
        %562 = vmatprep.subr.mxu0 0.0
        %563 = vmatpush1.msra.mxu0 0.0
        %564 = vmatprep.subr.mxu0 0.0
        %565 = vmatpush1.msra.mxu0 0.0
        %566 = vmatprep.subr.mxu0 0.0
        %567 = vmatpush1.msra.mxu0 0.0
        %568 = vmatprep.subr.mxu0 0.0
        %569 = vmatpush1.msra.mxu0 0.0
        %570 = vmatprep.subr.mxu0 0.0
        %571 = vmatpush1.msra.mxu0 0.0
        %572 = vmatprep.subr.mxu0 0.0
        %573 = vmatpush1.msra.mxu0 0.0
        %574 = vmatprep.subr.mxu0 0.0
        %575 = vmatpush1.msra.mxu0 0.0
        %576 = vmatprep.subr.mxu0 0.0
        %577 = vmatpush1.msra.mxu0 0.0
        %578 = vmatprep.subr.mxu0 0.0
        %579 = vmatpush1.msra.mxu0 0.0
        %580 = vmatprep.subr.mxu0 0.0
        %581 = vmatpush1.msra.mxu0 0.0
        %582 = vmatprep.subr.mxu0 0.0
        %583 = vmatpush1.msra.mxu0 0.0
        %584 = vmatprep.subr.mxu0 0.0
        %585 = vmatpush1.msra.mxu0 0.0
        %586 = vmatprep.subr.mxu0 0.0
        %587 = vmatpush1.msra.mxu0 0.0
        %588 = vmatprep.subr.mxu0 0.0
        %589 = vmatpush1.msra.mxu0 0.0
        %590 = vmatprep.subr.mxu0 0.0
        %591 = vmatpush1.msra.mxu0 0.0
        %592 = vmatprep.subr.mxu0 0.0
        %593 = vmatpush1.msra.mxu0 0.0
        %594 = vmatprep.subr.mxu0 0.0
        %595 = vmatpush1.msra.mxu0 0.0
        %596 = vmatprep.subr.mxu0 0.0
        %597 = vmatpush1.msra.mxu0 0.0
        %598 = vmatprep.subr.mxu0 0.0
        %599 = vmatpush1.msra.mxu0 0.0
        %600 = vmatprep.subr.mxu0 0.0
        %601 = vmatpush1.msra.mxu0 0.0
        %602 = vmatprep.subr.mxu0 0.0
        %603 = vmatpush1.msra.mxu0 0.0
        %604 = vmatprep.subr.mxu0 0.0
        %605 = vmatpush1.msra.mxu0 0.0
        %606 = vmatprep.subr.mxu0 0.0
        %607 = vmatpush1.msra.mxu0 0.0
        %608 = vmatprep.subr.mxu0 0.0
        %609 = vmatpush1.msra.mxu0 0.0
        %610 = vmatprep.subr.mxu0 0.0
        %611 = vmatpush1.msra.mxu0 0.0
        %612 = vmatprep.mubr.f32.mxu0 0.0
        %v613 = vand.u32 %v447, 4294901760
        %614 = vmatmul.mubr.f32.gmra.mrb[0].mxu0 %v613
        %v615 = vpop.f32.mrb[0].mxu0
        %v616 = vadd.f32 %v525, %v615
        %v617 = vpop.f32.mrb[0].mxu0
        %618 = vdwg.mxu0
        %619 = vmatprep.subr.mxu0 0.0
        %v620 = vand.u32 %v432, 4294901760
        %v621 = vsub.f32 %v432, %v620
        %622 = vmatpush1.msra.mxu0 %v621
        %623 = vmatprep.subr.mxu0 0.0
        %v624 = vand.u32 %v433, 4294901760
        %v625 = vsub.f32 %v433, %v624
        %626 = vmatpush1.msra.mxu0 %v625
        %627 = vmatprep.subr.mxu0 0.0
        %v628 = vand.u32 %v434, 4294901760
        %v629 = vsub.f32 %v434, %v628
        %630 = vmatpush1.msra.mxu0 %v629
        %631 = vmatprep.subr.mxu0 0.0
        %v632 = vand.u32 %v435, 4294901760
        %v633 = vsub.f32 %v435, %v632
        %634 = vmatpush1.msra.mxu0 %v633
        %635 = vmatprep.subr.mxu0 0.0
        %636 = vmatpush1.msra.mxu0 0.0
        %637 = vmatprep.subr.mxu0 0.0
        %638 = vmatpush1.msra.mxu0 0.0
        %639 = vmatprep.subr.mxu0 0.0
        %640 = vmatpush1.msra.mxu0 0.0
        %641 = vmatprep.subr.mxu0 0.0
        %642 = vmatpush1.msra.mxu0 0.0
        %643 = vmatprep.subr.mxu0 0.0
        %644 = vmatpush1.msra.mxu0 0.0
        %645 = vmatprep.subr.mxu0 0.0
        %646 = vmatpush1.msra.mxu0 0.0
        %647 = vmatprep.subr.mxu0 0.0
        %648 = vmatpush1.msra.mxu0 0.0
        %649 = vmatprep.subr.mxu0 0.0
        %650 = vmatpush1.msra.mxu0 0.0
        %651 = vmatprep.subr.mxu0 0.0
        %652 = vmatpush1.msra.mxu0 0.0
        %653 = vmatprep.subr.mxu0 0.0
        %654 = vmatpush1.msra.mxu0 0.0
        %655 = vmatprep.subr.mxu0 0.0
        %656 = vmatpush1.msra.mxu0 0.0
        %657 = vmatprep.subr.mxu0 0.0
        %658 = vmatpush1.msra.mxu0 0.0
        %659 = vmatprep.subr.mxu0 0.0
        %660 = vmatpush1.msra.mxu0 0.0
        %661 = vmatprep.subr.mxu0 0.0
        %662 = vmatpush1.msra.mxu0 0.0
        %663 = vmatprep.subr.mxu0 0.0
        %664 = vmatpush1.msra.mxu0 0.0
        %665 = vmatprep.subr.mxu0 0.0
        %666 = vmatpush1.msra.mxu0 0.0
        %667 = vmatprep.subr.mxu0 0.0
        %668 = vmatpush1.msra.mxu0 0.0
        %669 = vmatprep.subr.mxu0 0.0
        %670 = vmatpush1.msra.mxu0 0.0
        %671 = vmatprep.subr.mxu0 0.0
        %672 = vmatpush1.msra.mxu0 0.0
        %673 = vmatprep.subr.mxu0 0.0
        %674 = vmatpush1.msra.mxu0 0.0
        %675 = vmatprep.subr.mxu0 0.0
        %676 = vmatpush1.msra.mxu0 0.0
        %677 = vmatprep.subr.mxu0 0.0
        %678 = vmatpush1.msra.mxu0 0.0
        %679 = vmatprep.subr.mxu0 0.0
        %680 = vmatpush1.msra.mxu0 0.0
        %681 = vmatprep.subr.mxu0 0.0
        %682 = vmatpush1.msra.mxu0 0.0
        %683 = vmatprep.subr.mxu0 0.0
        %684 = vmatpush1.msra.mxu0 0.0
        %685 = vmatprep.subr.mxu0 0.0
        %686 = vmatpush1.msra.mxu0 0.0
        %687 = vmatprep.subr.mxu0 0.0
        %688 = vmatpush1.msra.mxu0 0.0
        %689 = vmatprep.subr.mxu0 0.0
        %690 = vmatpush1.msra.mxu0 0.0
        %691 = vmatprep.mubr.f32.mxu0 0.0
        %v692 = vand.u32 %v447, 4294901760
        %v693 = vsub.f32 %v447, %v692
        %694 = vmatmul.mubr.f32.gmra.mrb[0].mxu0 %v693
        %v695 = vpop.f32.mrb[0].mxu0
        %v696 = vadd.f32 %v616, %v695
        %v697 = vpop.f32.mrb[0].mxu0
        %698 = vdwg.mxu0
        %699 = vmatprep.subr.mxu0 0.0
        %v700 = vand.u32 %v432, 4294901760
        %701 = vmatpush1.msra.mxu0 %v700
        %702 = vmatprep.subr.mxu0 0.0
        %v703 = vand.u32 %v433, 4294901760
        %704 = vmatpush1.msra.mxu0 %v703
        %705 = vmatprep.subr.mxu0 0.0
        %v706 = vand.u32 %v434, 4294901760
        %707 = vmatpush1.msra.mxu0 %v706
        %708 = vmatprep.subr.mxu0 0.0
        %v709 = vand.u32 %v435, 4294901760
        %710 = vmatpush1.msra.mxu0 %v709
        %711 = vmatprep.subr.mxu0 0.0
        %712 = vmatpush1.msra.mxu0 0.0
        %713 = vmatprep.subr.mxu0 0.0
        %714 = vmatpush1.msra.mxu0 0.0
        %715 = vmatprep.subr.mxu0 0.0
        %716 = vmatpush1.msra.mxu0 0.0
        %717 = vmatprep.subr.mxu0 0.0
        %718 = vmatpush1.msra.mxu0 0.0
        %719 = vmatprep.subr.mxu0 0.0
        %720 = vmatpush1.msra.mxu0 0.0
        %721 = vmatprep.subr.mxu0 0.0
        %722 = vmatpush1.msra.mxu0 0.0
        %723 = vmatprep.subr.mxu0 0.0
        %724 = vmatpush1.msra.mxu0 0.0
        %725 = vmatprep.subr.mxu0 0.0
        %726 = vmatpush1.msra.mxu0 0.0
        %727 = vmatprep.subr.mxu0 0.0
        %728 = vmatpush1.msra.mxu0 0.0
        %729 = vmatprep.subr.mxu0 0.0
        %730 = vmatpush1.msra.mxu0 0.0
        %731 = vmatprep.subr.mxu0 0.0
        %732 = vmatpush1.msra.mxu0 0.0
        %733 = vmatprep.subr.mxu0 0.0
        %734 = vmatpush1.msra.mxu0 0.0
        %735 = vmatprep.subr.mxu0 0.0
        %736 = vmatpush1.msra.mxu0 0.0
        %737 = vmatprep.subr.mxu0 0.0
        %738 = vmatpush1.msra.mxu0 0.0
        %739 = vmatprep.subr.mxu0 0.0
        %740 = vmatpush1.msra.mxu0 0.0
        %741 = vmatprep.subr.mxu0 0.0
        %742 = vmatpush1.msra.mxu0 0.0
        %743 = vmatprep.subr.mxu0 0.0
        %744 = vmatpush1.msra.mxu0 0.0
        %745 = vmatprep.subr.mxu0 0.0
        %746 = vmatpush1.msra.mxu0 0.0
        %747 = vmatprep.subr.mxu0 0.0
        %748 = vmatpush1.msra.mxu0 0.0
        %749 = vmatprep.subr.mxu0 0.0
        %750 = vmatpush1.msra.mxu0 0.0
        %751 = vmatprep.subr.mxu0 0.0
        %752 = vmatpush1.msra.mxu0 0.0
        %753 = vmatprep.subr.mxu0 0.0
        %754 = vmatpush1.msra.mxu0 0.0
        %755 = vmatprep.subr.mxu0 0.0
        %756 = vmatpush1.msra.mxu0 0.0
        %757 = vmatprep.subr.mxu0 0.0
        %758 = vmatpush1.msra.mxu0 0.0
        %759 = vmatprep.subr.mxu0 0.0
        %760 = vmatpush1.msra.mxu0 0.0
        %761 = vmatprep.subr.mxu0 0.0
        %762 = vmatpush1.msra.mxu0 0.0
        %763 = vmatprep.subr.mxu0 0.0
        %764 = vmatpush1.msra.mxu0 0.0
        %765 = vmatprep.subr.mxu0 0.0
        %766 = vmatpush1.msra.mxu0 0.0
        %767 = vmatprep.mubr.f32.mxu0 0.0
        %v768 = vand.u32 %v447, 4294901760
        %v769 = vsub.f32 %v447, %v768
        %v770 = vand.u32 %v769, 4294901760
        %771 = vmatmul.mubr.f32.gmra.mrb[0].mxu0 %v770
        %v772 = vpop.f32.mrb[0].mxu0
        %v773 = vadd.f32 %v696, %v772
        %v774 = vpop.f32.mrb[0].mxu0
        %775 = vdwg.mxu0
        %776 = vmatprep.subr.mxu0 0.0
        %v777 = vand.u32 %v432, 4294901760
        %v778 = vsub.f32 %v432, %v777
        %v779 = vand.u32 %v778, 4294901760
        %780 = vmatpush1.msra.mxu0 %v779
        %781 = vmatprep.subr.mxu0 0.0
        %v782 = vand.u32 %v433, 4294901760
        %v783 = vsub.f32 %v433, %v782
        %v784 = vand.u32 %v783, 4294901760
        %785 = vmatpush1.msra.mxu0 %v784
        %786 = vmatprep.subr.mxu0 0.0
        %v787 = vand.u32 %v434, 4294901760
        %v788 = vsub.f32 %v434, %v787
        %v789 = vand.u32 %v788, 4294901760
        %790 = vmatpush1.msra.mxu0 %v789
        %791 = vmatprep.subr.mxu0 0.0
        %v792 = vand.u32 %v435, 4294901760
        %v793 = vsub.f32 %v435, %v792
        %v794 = vand.u32 %v793, 4294901760
        %795 = vmatpush1.msra.mxu0 %v794
        %796 = vmatprep.subr.mxu0 0.0
        %797 = vmatpush1.msra.mxu0 0.0
        %798 = vmatprep.subr.mxu0 0.0
        %799 = vmatpush1.msra.mxu0 0.0
        %800 = vmatprep.subr.mxu0 0.0
        %801 = vmatpush1.msra.mxu0 0.0
        %802 = vmatprep.subr.mxu0 0.0
        %803 = vmatpush1.msra.mxu0 0.0
        %804 = vmatprep.subr.mxu0 0.0
        %805 = vmatpush1.msra.mxu0 0.0
        %806 = vmatprep.subr.mxu0 0.0
        %807 = vmatpush1.msra.mxu0 0.0
        %808 = vmatprep.subr.mxu0 0.0
        %809 = vmatpush1.msra.mxu0 0.0
        %810 = vmatprep.subr.mxu0 0.0
        %811 = vmatpush1.msra.mxu0 0.0
        %812 = vmatprep.subr.mxu0 0.0
        %813 = vmatpush1.msra.mxu0 0.0
        %814 = vmatprep.subr.mxu0 0.0
        %815 = vmatpush1.msra.mxu0 0.0
        %816 = vmatprep.subr.mxu0 0.0
        %817 = vmatpush1.msra.mxu0 0.0
        %818 = vmatprep.subr.mxu0 0.0
        %819 = vmatpush1.msra.mxu0 0.0
        %820 = vmatprep.subr.mxu0 0.0
        %821 = vmatpush1.msra.mxu0 0.0
        %822 = vmatprep.subr.mxu0 0.0
        %823 = vmatpush1.msra.mxu0 0.0
        %824 = vmatprep.subr.mxu0 0.0
        %825 = vmatpush1.msra.mxu0 0.0
        %826 = vmatprep.subr.mxu0 0.0
        %827 = vmatpush1.msra.mxu0 0.0
        %828 = vmatprep.subr.mxu0 0.0
        %829 = vmatpush1.msra.mxu0 0.0
        %830 = vmatprep.subr.mxu0 0.0
        %831 = vmatpush1.msra.mxu0 0.0
        %832 = vmatprep.subr.mxu0 0.0
        %833 = vmatpush1.msra.mxu0 0.0
        %834 = vmatprep.subr.mxu0 0.0
        %835 = vmatpush1.msra.mxu0 0.0
        %836 = vmatprep.subr.mxu0 0.0
        %837 = vmatpush1.msra.mxu0 0.0
        %838 = vmatprep.subr.mxu0 0.0
        %839 = vmatpush1.msra.mxu0 0.0
        %840 = vmatprep.subr.mxu0 0.0
        %841 = vmatpush1.msra.mxu0 0.0
        %842 = vmatprep.subr.mxu0 0.0
        %843 = vmatpush1.msra.mxu0 0.0
        %844 = vmatprep.subr.mxu0 0.0
        %845 = vmatpush1.msra.mxu0 0.0
        %846 = vmatprep.subr.mxu0 0.0
        %847 = vmatpush1.msra.mxu0 0.0
        %848 = vmatprep.subr.mxu0 0.0
        %849 = vmatpush1.msra.mxu0 0.0
        %850 = vmatprep.subr.mxu0 0.0
        %851 = vmatpush1.msra.mxu0 0.0
        %852 = vmatprep.mubr.f32.mxu0 0.0
        %v853 = vand.u32 %v447, 4294901760
        %854 = vmatmul.mubr.f32.gmra.mrb[0].mxu0 %v853
        %v855 = vpop.f32.mrb[0].mxu0
        %v856 = vadd.f32 %v773, %v855
        %v857 = vpop.f32.mrb[0].mxu0
        %858 = vdwg.mxu0
        %859 = vmatprep.subr.mxu0 0.0
        %v860 = vand.u32 %v432, 4294901760
        %861 = vmatpush1.msra.mxu0 %v860
        %862 = vmatprep.subr.mxu0 0.0
        %v863 = vand.u32 %v433, 4294901760
        %864 = vmatpush1.msra.mxu0 %v863
        %865 = vmatprep.subr.mxu0 0.0
        %v866 = vand.u32 %v434, 4294901760
        %867 = vmatpush1.msra.mxu0 %v866
        %868 = vmatprep.subr.mxu0 0.0
        %v869 = vand.u32 %v435, 4294901760
        %870 = vmatpush1.msra.mxu0 %v869
        %871 = vmatprep.subr.mxu0 0.0
        %872 = vmatpush1.msra.mxu0 0.0
        %873 = vmatprep.subr.mxu0 0.0
        %874 = vmatpush1.msra.mxu0 0.0
        %875 = vmatprep.subr.mxu0 0.0
        %876 = vmatpush1.msra.mxu0 0.0
        %877 = vmatprep.subr.mxu0 0.0
        %878 = vmatpush1.msra.mxu0 0.0
        %879 = vmatprep.subr.mxu0 0.0
        %880 = vmatpush1.msra.mxu0 0.0
        %881 = vmatprep.subr.mxu0 0.0
        %882 = vmatpush1.msra.mxu0 0.0
        %883 = vmatprep.subr.mxu0 0.0
        %884 = vmatpush1.msra.mxu0 0.0
        %885 = vmatprep.subr.mxu0 0.0
        %886 = vmatpush1.msra.mxu0 0.0
        %887 = vmatprep.subr.mxu0 0.0
        %888 = vmatpush1.msra.mxu0 0.0
        %889 = vmatprep.subr.mxu0 0.0
        %890 = vmatpush1.msra.mxu0 0.0
        %891 = vmatprep.subr.mxu0 0.0
        %892 = vmatpush1.msra.mxu0 0.0
        %893 = vmatprep.subr.mxu0 0.0
        %894 = vmatpush1.msra.mxu0 0.0
        %895 = vmatprep.subr.mxu0 0.0
        %896 = vmatpush1.msra.mxu0 0.0
        %897 = vmatprep.subr.mxu0 0.0
        %898 = vmatpush1.msra.mxu0 0.0
        %899 = vmatprep.subr.mxu0 0.0
        %900 = vmatpush1.msra.mxu0 0.0
        %901 = vmatprep.subr.mxu0 0.0
        %902 = vmatpush1.msra.mxu0 0.0
        %903 = vmatprep.subr.mxu0 0.0
        %904 = vmatpush1.msra.mxu0 0.0
        %905 = vmatprep.subr.mxu0 0.0
        %906 = vmatpush1.msra.mxu0 0.0
        %907 = vmatprep.subr.mxu0 0.0
        %908 = vmatpush1.msra.mxu0 0.0
        %909 = vmatprep.subr.mxu0 0.0
        %910 = vmatpush1.msra.mxu0 0.0
        %911 = vmatprep.subr.mxu0 0.0
        %912 = vmatpush1.msra.mxu0 0.0
        %913 = vmatprep.subr.mxu0 0.0
        %914 = vmatpush1.msra.mxu0 0.0
        %915 = vmatprep.subr.mxu0 0.0
        %916 = vmatpush1.msra.mxu0 0.0
        %917 = vmatprep.subr.mxu0 0.0
        %918 = vmatpush1.msra.mxu0 0.0
        %919 = vmatprep.subr.mxu0 0.0
        %920 = vmatpush1.msra.mxu0 0.0
        %921 = vmatprep.subr.mxu0 0.0
        %922 = vmatpush1.msra.mxu0 0.0
        %923 = vmatprep.subr.mxu0 0.0
        %924 = vmatpush1.msra.mxu0 0.0
        %925 = vmatprep.subr.mxu0 0.0
        %926 = vmatpush1.msra.mxu0 0.0
        %927 = vmatprep.mubr.f32.mxu0 0.0
        %v928 = vand.u32 %v447, 4294901760
        %929 = vmatmul.mubr.f32.gmra.mrb[0].mxu0 %v928
        %v930 = vpop.f32.mrb[0].mxu0
        %v931 = vadd.f32 %v856, %v930
        %v932 = vpop.f32.mrb[0].mxu0
        %933 = vdwg.mxu0
        %v934 = vadd.f32 %v444, %v931
        %v935 = vxor.u32 %v934, 2147483648
        %v936 = vmul.f32 %v935, 1.442695
        %v937 = vpow.pop %v936
        %v938 = vadd.f32 %v937, 1.0
        %v939 = vrcp.pop %v938
        %v940 = vmul.f32 1.0, %v939
        %v941 = vtanh.pop %v934
        %943 = vrot.lane.b32.xlu0 %v441, 32
        %v944 = vpop.permute.xlu0 %943
        %v946 = vmul.f32 %v940, %v944
        %948 = vrot.lane.b32.xlu0 %v941, 64
        %v949 = vpop.permute.xlu0 %948
        %v951 = vmul.f32 %v940, %v949
        %953 = vrot.lane.b32.xlu0 %v951, 32
        %v954 = vpop.permute.xlu0 %953
        %v956 = vadd.f32 %v946, %v954
        %v957 = vtanh.pop %v956
        %959 = vrot.lane.b32.xlu0 %v957, 64
        %v960 = vpop.permute.xlu0 %959
        %v962 = vmul.f32 %v940, %v960
        %s963 = scalar_lea.vmem %s361, 24 [#allocation9]
        %v964 = vld [vmem:[%s963] sm:$0xff]
        %v966 = vsel %vm445, %v442, 0
        %968 = vmatprep.subr.mxu0 0.0
        %v969 = vand.u32 %v436, 4294901760
        %970 = vmatpush1.msra.mxu0 %v969
        %971 = vmatprep.subr.mxu0 0.0
        %v972 = vand.u32 %v437, 4294901760
        %973 = vmatpush1.msra.mxu0 %v972
        %974 = vmatprep.subr.mxu0 0.0
        %v975 = vand.u32 %v438, 4294901760
        %976 = vmatpush1.msra.mxu0 %v975
        %977 = vmatprep.subr.mxu0 0.0
        %v978 = vand.u32 %v439, 4294901760
        %979 = vmatpush1.msra.mxu0 %v978
        %980 = vmatprep.subr.mxu0 0.0
        %981 = vmatpush1.msra.mxu0 0.0
        %982 = vmatprep.subr.mxu0 0.0
        %983 = vmatpush1.msra.mxu0 0.0
        %984 = vmatprep.subr.mxu0 0.0
        %985 = vmatpush1.msra.mxu0 0.0
        %986 = vmatprep.subr.mxu0 0.0
        %987 = vmatpush1.msra.mxu0 0.0
        %988 = vmatprep.subr.mxu0 0.0
        %989 = vmatpush1.msra.mxu0 0.0
        %990 = vmatprep.subr.mxu0 0.0
        %991 = vmatpush1.msra.mxu0 0.0
        %992 = vmatprep.subr.mxu0 0.0
        %993 = vmatpush1.msra.mxu0 0.0
        %994 = vmatprep.subr.mxu0 0.0
        %995 = vmatpush1.msra.mxu0 0.0
        %996 = vmatprep.subr.mxu0 0.0
        %997 = vmatpush1.msra.mxu0 0.0
        %998 = vmatprep.subr.mxu0 0.0
        %999 = vmatpush1.msra.mxu0 0.0
        %1000 = vmatprep.subr.mxu0 0.0
        %1001 = vmatpush1.msra.mxu0 0.0
        %1002 = vmatprep.subr.mxu0 0.0
        %1003 = vmatpush1.msra.mxu0 0.0
        %1004 = vmatprep.subr.mxu0 0.0
        %1005 = vmatpush1.msra.mxu0 0.0
        %1006 = vmatprep.subr.mxu0 0.0
        %1007 = vmatpush1.msra.mxu0 0.0
        %1008 = vmatprep.subr.mxu0 0.0
        %1009 = vmatpush1.msra.mxu0 0.0
        %1010 = vmatprep.subr.mxu0 0.0
        %1011 = vmatpush1.msra.mxu0 0.0
        %1012 = vmatprep.subr.mxu0 0.0
        %1013 = vmatpush1.msra.mxu0 0.0
        %1014 = vmatprep.subr.mxu0 0.0
        %1015 = vmatpush1.msra.mxu0 0.0
        %1016 = vmatprep.subr.mxu0 0.0
        %1017 = vmatpush1.msra.mxu0 0.0
        %1018 = vmatprep.subr.mxu0 0.0
        %1019 = vmatpush1.msra.mxu0 0.0
        %1020 = vmatprep.subr.mxu0 0.0
        %1021 = vmatpush1.msra.mxu0 0.0
        %1022 = vmatprep.subr.mxu0 0.0
        %1023 = vmatpush1.msra.mxu0 0.0
        %1024 = vmatprep.subr.mxu0 0.0
        %1025 = vmatpush1.msra.mxu0 0.0
        %1026 = vmatprep.subr.mxu0 0.0
        %1027 = vmatpush1.msra.mxu0 0.0
        %1028 = vmatprep.subr.mxu0 0.0
        %1029 = vmatpush1.msra.mxu0 0.0
        %1030 = vmatprep.subr.mxu0 0.0
        %1031 = vmatpush1.msra.mxu0 0.0
        %1032 = vmatprep.subr.mxu0 0.0
        %1033 = vmatpush1.msra.mxu0 0.0
        %1034 = vmatprep.subr.mxu0 0.0
        %1035 = vmatpush1.msra.mxu0 0.0
        %1036 = vmatprep.mubr.f32.mxu0 0.0
        %v1037 = vand.u32 %v966, 4294901760
        %v1038 = vsub.f32 %v966, %v1037
        %v1039 = vand.u32 %v1038, 4294901760
        %v1040 = vsub.f32 %v1038, %v1039
        %v1041 = vand.u32 %v1040, 4294901760
        %1042 = vmatmul.mubr.f32.gmra.mrb[0].mxu0 %v1041
        %v1043 = vpop.f32.mrb[0].mxu0
        %v1044 = vadd.f32 0.0, %v1043
        %v1045 = vpop.f32.mrb[0].mxu0
        %1046 = vdwg.mxu0
        %1047 = vmatprep.subr.mxu0 0.0
        %v1048 = vand.u32 %v436, 4294901760
        %v1049 = vsub.f32 %v436, %v1048
        %v1050 = vand.u32 %v1049, 4294901760
        %v1051 = vsub.f32 %v1049, %v1050
        %v1052 = vand.u32 %v1051, 4294901760
        %1053 = vmatpush1.msra.mxu0 %v1052
        %1054 = vmatprep.subr.mxu0 0.0
        %v1055 = vand.u32 %v437, 4294901760
        %v1056 = vsub.f32 %v437, %v1055
        %v1057 = vand.u32 %v1056, 4294901760
        %v1058 = vsub.f32 %v1056, %v1057
        %v1059 = vand.u32 %v1058, 4294901760
        %1060 = vmatpush1.msra.mxu0 %v1059
        %1061 = vmatprep.subr.mxu0 0.0
        %v1062 = vand.u32 %v438, 4294901760
        %v1063 = vsub.f32 %v438, %v1062
        %v1064 = vand.u32 %v1063, 4294901760
        %v1065 = vsub.f32 %v1063, %v1064
        %v1066 = vand.u32 %v1065, 4294901760
        %1067 = vmatpush1.msra.mxu0 %v1066
        %1068 = vmatprep.subr.mxu0 0.0
        %v1069 = vand.u32 %v439, 4294901760
        %v1070 = vsub.f32 %v439, %v1069
        %v1071 = vand.u32 %v1070, 4294901760
        %v1072 = vsub.f32 %v1070, %v1071
        %v1073 = vand.u32 %v1072, 4294901760
        %1074 = vmatpush1.msra.mxu0 %v1073
        %1075 = vmatprep.subr.mxu0 0.0
        %1076 = vmatpush1.msra.mxu0 0.0
        %1077 = vmatprep.subr.mxu0 0.0
        %1078 = vmatpush1.msra.mxu0 0.0
        %1079 = vmatprep.subr.mxu0 0.0
        %1080 = vmatpush1.msra.mxu0 0.0
        %1081 = vmatprep.subr.mxu0 0.0
        %1082 = vmatpush1.msra.mxu0 0.0
        %1083 = vmatprep.subr.mxu0 0.0
        %1084 = vmatpush1.msra.mxu0 0.0
        %1085 = vmatprep.subr.mxu0 0.0
        %1086 = vmatpush1.msra.mxu0 0.0
        %1087 = vmatprep.subr.mxu0 0.0
        %1088 = vmatpush1.msra.mxu0 0.0
        %1089 = vmatprep.subr.mxu0 0.0
        %1090 = vmatpush1.msra.mxu0 0.0
        %1091 = vmatprep.subr.mxu0 0.0
        %1092 = vmatpush1.msra.mxu0 0.0
        %1093 = vmatprep.subr.mxu0 0.0
        %1094 = vmatpush1.msra.mxu0 0.0
        %1095 = vmatprep.subr.mxu0 0.0
        %1096 = vmatpush1.msra.mxu0 0.0
        %1097 = vmatprep.subr.mxu0 0.0
        %1098 = vmatpush1.msra.mxu0 0.0
        %1099 = vmatprep.subr.mxu0 0.0
        %1100 = vmatpush1.msra.mxu0 0.0
        %1101 = vmatprep.subr.mxu0 0.0
        %1102 = vmatpush1.msra.mxu0 0.0
        %1103 = vmatprep.subr.mxu0 0.0
        %1104 = vmatpush1.msra.mxu0 0.0
        %1105 = vmatprep.subr.mxu0 0.0
        %1106 = vmatpush1.msra.mxu0 0.0
        %1107 = vmatprep.subr.mxu0 0.0
        %1108 = vmatpush1.msra.mxu0 0.0
        %1109 = vmatprep.subr.mxu0 0.0
        %1110 = vmatpush1.msra.mxu0 0.0
        %1111 = vmatprep.subr.mxu0 0.0
        %1112 = vmatpush1.msra.mxu0 0.0
        %1113 = vmatprep.subr.mxu0 0.0
        %1114 = vmatpush1.msra.mxu0 0.0
        %1115 = vmatprep.subr.mxu0 0.0
        %1116 = vmatpush1.msra.mxu0 0.0
        %1117 = vmatprep.subr.mxu0 0.0
        %1118 = vmatpush1.msra.mxu0 0.0
        %1119 = vmatprep.subr.mxu0 0.0
        %1120 = vmatpush1.msra.mxu0 0.0
        %1121 = vmatprep.subr.mxu0 0.0
        %1122 = vmatpush1.msra.mxu0 0.0
        %1123 = vmatprep.subr.mxu0 0.0
        %1124 = vmatpush1.msra.mxu0 0.0
        %1125 = vmatprep.subr.mxu0 0.0
        %1126 = vmatpush1.msra.mxu0 0.0
        %1127 = vmatprep.subr.mxu0 0.0
        %1128 = vmatpush1.msra.mxu0 0.0
        %1129 = vmatprep.subr.mxu0 0.0
        %1130 = vmatpush1.msra.mxu0 0.0
        %1131 = vmatprep.mubr.f32.mxu0 0.0
        %v1132 = vand.u32 %v966, 4294901760
        %1133 = vmatmul.mubr.f32.gmra.mrb[0].mxu0 %v1132
        %v1134 = vpop.f32.mrb[0].mxu0
        %v1135 = vadd.f32 %v1044, %v1134
        %v1136 = vpop.f32.mrb[0].mxu0
        %1137 = vdwg.mxu0
        %1138 = vmatprep.subr.mxu0 0.0
        %v1139 = vand.u32 %v436, 4294901760
        %v1140 = vsub.f32 %v436, %v1139
        %1141 = vmatpush1.msra.mxu0 %v1140
        %1142 = vmatprep.subr.mxu0 0.0
        %v1143 = vand.u32 %v437, 4294901760
        %v1144 = vsub.f32 %v437, %v1143
        %1145 = vmatpush1.msra.mxu0 %v1144
        %1146 = vmatprep.subr.mxu0 0.0
        %v1147 = vand.u32 %v438, 4294901760
        %v1148 = vsub.f32 %v438, %v1147
        %1149 = vmatpush1.msra.mxu0 %v1148
        %1150 = vmatprep.subr.mxu0 0.0
        %v1151 = vand.u32 %v439, 4294901760
        %v1152 = vsub.f32 %v439, %v1151
        %1153 = vmatpush1.msra.mxu0 %v1152
        %1154 = vmatprep.subr.mxu0 0.0
        %1155 = vmatpush1.msra.mxu0 0.0
        %1156 = vmatprep.subr.mxu0 0.0
        %1157 = vmatpush1.msra.mxu0 0.0
        %1158 = vmatprep.subr.mxu0 0.0
        %1159 = vmatpush1.msra.mxu0 0.0
        %1160 = vmatprep.subr.mxu0 0.0
        %1161 = vmatpush1.msra.mxu0 0.0
        %1162 = vmatprep.subr.mxu0 0.0
        %1163 = vmatpush1.msra.mxu0 0.0
        %1164 = vmatprep.subr.mxu0 0.0
        %1165 = vmatpush1.msra.mxu0 0.0
        %1166 = vmatprep.subr.mxu0 0.0
        %1167 = vmatpush1.msra.mxu0 0.0
        %1168 = vmatprep.subr.mxu0 0.0
        %1169 = vmatpush1.msra.mxu0 0.0
        %1170 = vmatprep.subr.mxu0 0.0
        %1171 = vmatpush1.msra.mxu0 0.0
        %1172 = vmatprep.subr.mxu0 0.0
        %1173 = vmatpush1.msra.mxu0 0.0
        %1174 = vmatprep.subr.mxu0 0.0
        %1175 = vmatpush1.msra.mxu0 0.0
        %1176 = vmatprep.subr.mxu0 0.0
        %1177 = vmatpush1.msra.mxu0 0.0
        %1178 = vmatprep.subr.mxu0 0.0
        %1179 = vmatpush1.msra.mxu0 0.0
        %1180 = vmatprep.subr.mxu0 0.0
        %1181 = vmatpush1.msra.mxu0 0.0
        %1182 = vmatprep.subr.mxu0 0.0
        %1183 = vmatpush1.msra.mxu0 0.0
        %1184 = vmatprep.subr.mxu0 0.0
        %1185 = vmatpush1.msra.mxu0 0.0
        %1186 = vmatprep.subr.mxu0 0.0
        %1187 = vmatpush1.msra.mxu0 0.0
        %1188 = vmatprep.subr.mxu0 0.0
        %1189 = vmatpush1.msra.mxu0 0.0
        %1190 = vmatprep.subr.mxu0 0.0
        %1191 = vmatpush1.msra.mxu0 0.0
        %1192 = vmatprep.subr.mxu0 0.0
        %1193 = vmatpush1.msra.mxu0 0.0
        %1194 = vmatprep.subr.mxu0 0.0
        %1195 = vmatpush1.msra.mxu0 0.0
        %1196 = vmatprep.subr.mxu0 0.0
        %1197 = vmatpush1.msra.mxu0 0.0
        %1198 = vmatprep.subr.mxu0 0.0
        %1199 = vmatpush1.msra.mxu0 0.0
        %1200 = vmatprep.subr.mxu0 0.0
        %1201 = vmatpush1.msra.mxu0 0.0
        %1202 = vmatprep.subr.mxu0 0.0
        %1203 = vmatpush1.msra.mxu0 0.0
        %1204 = vmatprep.subr.mxu0 0.0
        %1205 = vmatpush1.msra.mxu0 0.0
        %1206 = vmatprep.subr.mxu0 0.0
        %1207 = vmatpush1.msra.mxu0 0.0
        %1208 = vmatprep.subr.mxu0 0.0
        %1209 = vmatpush1.msra.mxu0 0.0
        %1210 = vmatprep.mubr.f32.mxu0 0.0
        %v1211 = vand.u32 %v966, 4294901760
        %v1212 = vsub.f32 %v966, %v1211
        %1213 = vmatmul.mubr.f32.gmra.mrb[0].mxu0 %v1212
        %v1214 = vpop.f32.mrb[0].mxu0
        %v1215 = vadd.f32 %v1135, %v1214
        %v1216 = vpop.f32.mrb[0].mxu0
        %1217 = vdwg.mxu0
        %1218 = vmatprep.subr.mxu0 0.0
        %v1219 = vand.u32 %v436, 4294901760
        %1220 = vmatpush1.msra.mxu0 %v1219
        %1221 = vmatprep.subr.mxu0 0.0
        %v1222 = vand.u32 %v437, 4294901760
        %1223 = vmatpush1.msra.mxu0 %v1222
        %1224 = vmatprep.subr.mxu0 0.0
        %v1225 = vand.u32 %v438, 4294901760
        %1226 = vmatpush1.msra.mxu0 %v1225
        %1227 = vmatprep.subr.mxu0 0.0
        %v1228 = vand.u32 %v439, 4294901760
        %1229 = vmatpush1.msra.mxu0 %v1228
        %1230 = vmatprep.subr.mxu0 0.0
        %1231 = vmatpush1.msra.mxu0 0.0
        %1232 = vmatprep.subr.mxu0 0.0
        %1233 = vmatpush1.msra.mxu0 0.0
        %1234 = vmatprep.subr.mxu0 0.0
        %1235 = vmatpush1.msra.mxu0 0.0
        %1236 = vmatprep.subr.mxu0 0.0
        %1237 = vmatpush1.msra.mxu0 0.0
        %1238 = vmatprep.subr.mxu0 0.0
        %1239 = vmatpush1.msra.mxu0 0.0
        %1240 = vmatprep.subr.mxu0 0.0
        %1241 = vmatpush1.msra.mxu0 0.0
        %1242 = vmatprep.subr.mxu0 0.0
        %1243 = vmatpush1.msra.mxu0 0.0
        %1244 = vmatprep.subr.mxu0 0.0
        %1245 = vmatpush1.msra.mxu0 0.0
        %1246 = vmatprep.subr.mxu0 0.0
        %1247 = vmatpush1.msra.mxu0 0.0
        %1248 = vmatprep.subr.mxu0 0.0
        %1249 = vmatpush1.msra.mxu0 0.0
        %1250 = vmatprep.subr.mxu0 0.0
        %1251 = vmatpush1.msra.mxu0 0.0
        %1252 = vmatprep.subr.mxu0 0.0
        %1253 = vmatpush1.msra.mxu0 0.0
        %1254 = vmatprep.subr.mxu0 0.0
        %1255 = vmatpush1.msra.mxu0 0.0
        %1256 = vmatprep.subr.mxu0 0.0
        %1257 = vmatpush1.msra.mxu0 0.0
        %1258 = vmatprep.subr.mxu0 0.0
        %1259 = vmatpush1.msra.mxu0 0.0
        %1260 = vmatprep.subr.mxu0 0.0
        %1261 = vmatpush1.msra.mxu0 0.0
        %1262 = vmatprep.subr.mxu0 0.0
        %1263 = vmatpush1.msra.mxu0 0.0
        %1264 = vmatprep.subr.mxu0 0.0
        %1265 = vmatpush1.msra.mxu0 0.0
        %1266 = vmatprep.subr.mxu0 0.0
        %1267 = vmatpush1.msra.mxu0 0.0
        %1268 = vmatprep.subr.mxu0 0.0
        %1269 = vmatpush1.msra.mxu0 0.0
        %1270 = vmatprep.subr.mxu0 0.0
        %1271 = vmatpush1.msra.mxu0 0.0
        %1272 = vmatprep.subr.mxu0 0.0
        %1273 = vmatpush1.msra.mxu0 0.0
        %1274 = vmatprep.subr.mxu0 0.0
        %1275 = vmatpush1.msra.mxu0 0.0
        %1276 = vmatprep.subr.mxu0 0.0
        %1277 = vmatpush1.msra.mxu0 0.0
        %1278 = vmatprep.subr.mxu0 0.0
        %1279 = vmatpush1.msra.mxu0 0.0
        %1280 = vmatprep.subr.mxu0 0.0
        %1281 = vmatpush1.msra.mxu0 0.0
        %1282 = vmatprep.subr.mxu0 0.0
        %1283 = vmatpush1.msra.mxu0 0.0
        %1284 = vmatprep.subr.mxu0 0.0
        %1285 = vmatpush1.msra.mxu0 0.0
        %1286 = vmatprep.mubr.f32.mxu0 0.0
        %v1287 = vand.u32 %v966, 4294901760
        %v1288 = vsub.f32 %v966, %v1287
        %v1289 = vand.u32 %v1288, 4294901760
        %1290 = vmatmul.mubr.f32.gmra.mrb[0].mxu0 %v1289
        %v1291 = vpop.f32.mrb[0].mxu0
        %v1292 = vadd.f32 %v1215, %v1291
        %v1293 = vpop.f32.mrb[0].mxu0
        %1294 = vdwg.mxu0
        %1295 = vmatprep.subr.mxu0 0.0
        %v1296 = vand.u32 %v436, 4294901760
        %v1297 = vsub.f32 %v436, %v1296
        %v1298 = vand.u32 %v1297, 4294901760
        %1299 = vmatpush1.msra.mxu0 %v1298
        %1300 = vmatprep.subr.mxu0 0.0
        %v1301 = vand.u32 %v437, 4294901760
        %v1302 = vsub.f32 %v437, %v1301
        %v1303 = vand.u32 %v1302, 4294901760
        %1304 = vmatpush1.msra.mxu0 %v1303
        %1305 = vmatprep.subr.mxu0 0.0
        %v1306 = vand.u32 %v438, 4294901760
        %v1307 = vsub.f32 %v438, %v1306
        %v1308 = vand.u32 %v1307, 4294901760
        %1309 = vmatpush1.msra.mxu0 %v1308
        %1310 = vmatprep.subr.mxu0 0.0
        %v1311 = vand.u32 %v439, 4294901760
        %v1312 = vsub.f32 %v439, %v1311
        %v1313 = vand.u32 %v1312, 4294901760
        %1314 = vmatpush1.msra.mxu0 %v1313
        %1315 = vmatprep.subr.mxu0 0.0
        %1316 = vmatpush1.msra.mxu0 0.0
        %1317 = vmatprep.subr.mxu0 0.0
        %1318 = vmatpush1.msra.mxu0 0.0
        %1319 = vmatprep.subr.mxu0 0.0
        %1320 = vmatpush1.msra.mxu0 0.0
        %1321 = vmatprep.subr.mxu0 0.0
        %1322 = vmatpush1.msra.mxu0 0.0
        %1323 = vmatprep.subr.mxu0 0.0
        %1324 = vmatpush1.msra.mxu0 0.0
        %1325 = vmatprep.subr.mxu0 0.0
        %1326 = vmatpush1.msra.mxu0 0.0
        %1327 = vmatprep.subr.mxu0 0.0
        %1328 = vmatpush1.msra.mxu0 0.0
        %1329 = vmatprep.subr.mxu0 0.0
        %1330 = vmatpush1.msra.mxu0 0.0
        %1331 = vmatprep.subr.mxu0 0.0
        %1332 = vmatpush1.msra.mxu0 0.0
        %1333 = vmatprep.subr.mxu0 0.0
        %1334 = vmatpush1.msra.mxu0 0.0
        %1335 = vmatprep.subr.mxu0 0.0
        %1336 = vmatpush1.msra.mxu0 0.0
        %1337 = vmatprep.subr.mxu0 0.0
        %1338 = vmatpush1.msra.mxu0 0.0
        %1339 = vmatprep.subr.mxu0 0.0
        %1340 = vmatpush1.msra.mxu0 0.0
        %1341 = vmatprep.subr.mxu0 0.0
        %1342 = vmatpush1.msra.mxu0 0.0
        %1343 = vmatprep.subr.mxu0 0.0
        %1344 = vmatpush1.msra.mxu0 0.0
        %1345 = vmatprep.subr.mxu0 0.0
        %1346 = vmatpush1.msra.mxu0 0.0
        %1347 = vmatprep.subr.mxu0 0.0
        %1348 = vmatpush1.msra.mxu0 0.0
        %1349 = vmatprep.subr.mxu0 0.0
        %1350 = vmatpush1.msra.mxu0 0.0
        %1351 = vmatprep.subr.mxu0 0.0
        %1352 = vmatpush1.msra.mxu0 0.0
        %1353 = vmatprep.subr.mxu0 0.0
        %1354 = vmatpush1.msra.mxu0 0.0
        %1355 = vmatprep.subr.mxu0 0.0
        %1356 = vmatpush1.msra.mxu0 0.0
        %1357 = vmatprep.subr.mxu0 0.0
        %1358 = vmatpush1.msra.mxu0 0.0
        %1359 = vmatprep.subr.mxu0 0.0
        %1360 = vmatpush1.msra.mxu0 0.0
        %1361 = vmatprep.subr.mxu0 0.0
        %1362 = vmatpush1.msra.mxu0 0.0
        %1363 = vmatprep.subr.mxu0 0.0
        %1364 = vmatpush1.msra.mxu0 0.0
        %1365 = vmatprep.subr.mxu0 0.0
        %1366 = vmatpush1.msra.mxu0 0.0
        %1367 = vmatprep.subr.mxu0 0.0
        %1368 = vmatpush1.msra.mxu0 0.0
        %1369 = vmatprep.subr.mxu0 0.0
        %1370 = vmatpush1.msra.mxu0 0.0
        %1371 = vmatprep.mubr.f32.mxu0 0.0
        %v1372 = vand.u32 %v966, 4294901760
        %1373 = vmatmul.mubr.f32.gmra.mrb[0].mxu0 %v1372
        %v1374 = vpop.f32.mrb[0].mxu0
        %v1375 = vadd.f32 %v1292, %v1374
        %v1376 = vpop.f32.mrb[0].mxu0
        %1377 = vdwg.mxu0
        %1378 = vmatprep.subr.mxu0 0.0
        %v1379 = vand.u32 %v436, 4294901760
        %1380 = vmatpush1.msra.mxu0 %v1379
        %1381 = vmatprep.subr.mxu0 0.0
        %v1382 = vand.u32 %v437, 4294901760
        %1383 = vmatpush1.msra.mxu0 %v1382
        %1384 = vmatprep.subr.mxu0 0.0
        %v1385 = vand.u32 %v438, 4294901760
        %1386 = vmatpush1.msra.mxu0 %v1385
        %1387 = vmatprep.subr.mxu0 0.0
        %v1388 = vand.u32 %v439, 4294901760
        %1389 = vmatpush1.msra.mxu0 %v1388
        %1390 = vmatprep.subr.mxu0 0.0
        %1391 = vmatpush1.msra.mxu0 0.0
        %1392 = vmatprep.subr.mxu0 0.0
        %1393 = vmatpush1.msra.mxu0 0.0
        %1394 = vmatprep.subr.mxu0 0.0
        %1395 = vmatpush1.msra.mxu0 0.0
        %1396 = vmatprep.subr.mxu0 0.0
        %1397 = vmatpush1.msra.mxu0 0.0
        %1398 = vmatprep.subr.mxu0 0.0
        %1399 = vmatpush1.msra.mxu0 0.0
        %1400 = vmatprep.subr.mxu0 0.0
        %1401 = vmatpush1.msra.mxu0 0.0
        %1402 = vmatprep.subr.mxu0 0.0
        %1403 = vmatpush1.msra.mxu0 0.0
        %1404 = vmatprep.subr.mxu0 0.0
        %1405 = vmatpush1.msra.mxu0 0.0
        %1406 = vmatprep.subr.mxu0 0.0
        %1407 = vmatpush1.msra.mxu0 0.0
        %1408 = vmatprep.subr.mxu0 0.0
        %1409 = vmatpush1.msra.mxu0 0.0
        %1410 = vmatprep.subr.mxu0 0.0
        %1411 = vmatpush1.msra.mxu0 0.0
        %1412 = vmatprep.subr.mxu0 0.0
        %1413 = vmatpush1.msra.mxu0 0.0
        %1414 = vmatprep.subr.mxu0 0.0
        %1415 = vmatpush1.msra.mxu0 0.0
        %1416 = vmatprep.subr.mxu0 0.0
        %1417 = vmatpush1.msra.mxu0 0.0
        %1418 = vmatprep.subr.mxu0 0.0
        %1419 = vmatpush1.msra.mxu0 0.0
        %1420 = vmatprep.subr.mxu0 0.0
        %1421 = vmatpush1.msra.mxu0 0.0
        %1422 = vmatprep.subr.mxu0 0.0
        %1423 = vmatpush1.msra.mxu0 0.0
        %1424 = vmatprep.subr.mxu0 0.0
        %1425 = vmatpush1.msra.mxu0 0.0
        %1426 = vmatprep.subr.mxu0 0.0
        %1427 = vmatpush1.msra.mxu0 0.0
        %1428 = vmatprep.subr.mxu0 0.0
        %1429 = vmatpush1.msra.mxu0 0.0
        %1430 = vmatprep.subr.mxu0 0.0
        %1431 = vmatpush1.msra.mxu0 0.0
        %1432 = vmatprep.subr.mxu0 0.0
        %1433 = vmatpush1.msra.mxu0 0.0
        %1434 = vmatprep.subr.mxu0 0.0
        %1435 = vmatpush1.msra.mxu0 0.0
        %1436 = vmatprep.subr.mxu0 0.0
        %1437 = vmatpush1.msra.mxu0 0.0
        %1438 = vmatprep.subr.mxu0 0.0
        %1439 = vmatpush1.msra.mxu0 0.0
        %1440 = vmatprep.subr.mxu0 0.0
        %1441 = vmatpush1.msra.mxu0 0.0
        %1442 = vmatprep.subr.mxu0 0.0
        %1443 = vmatpush1.msra.mxu0 0.0
        %1444 = vmatprep.subr.mxu0 0.0
        %1445 = vmatpush1.msra.mxu0 0.0
        %1446 = vmatprep.mubr.f32.mxu0 0.0
        %v1447 = vand.u32 %v966, 4294901760
        %1448 = vmatmul.mubr.f32.gmra.mrb[0].mxu0 %v1447
        %v1449 = vpop.f32.mrb[0].mxu0
        %v1450 = vadd.f32 %v1375, %v1449
        %v1451 = vpop.f32.mrb[0].mxu0
        %1452 = vdwg.mxu0
        %v1453 = vadd.f32 %v964, %v1450
        %v1454 = vxor.u32 %v1453, 2147483648
        %v1455 = vmul.f32 %v1454, 1.442695
        %v1456 = vpow.pop %v1455
        %v1457 = vadd.f32 %v1456, 1.0
        %v1458 = vrcp.pop %v1457
        %v1459 = vmul.f32 1.0, %v1458
        %v1460 = vtanh.pop %v1453
        %1462 = vrot.lane.b32.xlu0 %v443, 32
        %v1463 = vpop.permute.xlu0 %1462
        %v1465 = vmul.f32 %v1459, %v1463
        %1467 = vrot.lane.b32.xlu0 %v1460, 64
        %v1468 = vpop.permute.xlu0 %1467
        %v1470 = vmul.f32 %v1459, %v1468
        %1472 = vrot.lane.b32.xlu0 %v1470, 32
        %v1473 = vpop.permute.xlu0 %1472
        %v1475 = vadd.f32 %v1465, %v1473
        %v1476 = vtanh.pop %v1475
        %1478 = vrot.lane.b32.xlu0 %v1476, 64
        %v1479 = vpop.permute.xlu0 %1478
        %v1481 = vmul.f32 %v1459, %v1479
        %1483 = vrot.lane.b32.xlu0 %v962, 32
        %v1484 = vpop.permute.xlu0 %1483
        %1486 = vst.msk [vmem:[%s404] sm:$0xff] %vm445, %v1484
        %1488 = vrot.lane.b32.xlu0 %v1481, 32
        %v1489 = vpop.permute.xlu0 %1488
        %s1491 = scalar_lea.vmem %s411, 24 [#allocation16]
        %1492 = vst.msk [vmem:[%s1491] sm:$0xff] %vm445, %v1489
        %s1493 = scalar_lea.vmem %s352, 8 [#allocation6]
        %v1494 = vld [vmem:[%s1493] sm:$0xff]
        %v1495 = vsel %vm445, %v1484, 0
        %1497 = vmatprep.subr.mxu0 0.0
        %v1498 = vand.u32 %v432, 4294901760
        %1499 = vmatpush1.msra.mxu0 %v1498
        %1500 = vmatprep.subr.mxu0 0.0
        %v1501 = vand.u32 %v433, 4294901760
        %1502 = vmatpush1.msra.mxu0 %v1501
        %1503 = vmatprep.subr.mxu0 0.0
        %v1504 = vand.u32 %v434, 4294901760
        %1505 = vmatpush1.msra.mxu0 %v1504
        %1506 = vmatprep.subr.mxu0 0.0
        %v1507 = vand.u32 %v435, 4294901760
        %1508 = vmatpush1.msra.mxu0 %v1507
        %1509 = vmatprep.subr.mxu0 0.0
        %1510 = vmatpush1.msra.mxu0 0.0
        %1511 = vmatprep.subr.mxu0 0.0
        %1512 = vmatpush1.msra.mxu0 0.0
        %1513 = vmatprep.subr.mxu0 0.0
        %1514 = vmatpush1.msra.mxu0 0.0
        %1515 = vmatprep.subr.mxu0 0.0
        %1516 = vmatpush1.msra.mxu0 0.0
        %1517 = vmatprep.subr.mxu0 0.0
        %1518 = vmatpush1.msra.mxu0 0.0
        %1519 = vmatprep.subr.mxu0 0.0
        %1520 = vmatpush1.msra.mxu0 0.0
        %1521 = vmatprep.subr.mxu0 0.0
        %1522 = vmatpush1.msra.mxu0 0.0
        %1523 = vmatprep.subr.mxu0 0.0
        %1524 = vmatpush1.msra.mxu0 0.0
        %1525 = vmatprep.subr.mxu0 0.0
        %1526 = vmatpush1.msra.mxu0 0.0
        %1527 = vmatprep.subr.mxu0 0.0
        %1528 = vmatpush1.msra.mxu0 0.0
        %1529 = vmatprep.subr.mxu0 0.0
        %1530 = vmatpush1.msra.mxu0 0.0
        %1531 = vmatprep.subr.mxu0 0.0
        %1532 = vmatpush1.msra.mxu0 0.0
        %1533 = vmatprep.subr.mxu0 0.0
        %1534 = vmatpush1.msra.mxu0 0.0
        %1535 = vmatprep.subr.mxu0 0.0
        %1536 = vmatpush1.msra.mxu0 0.0
        %1537 = vmatprep.subr.mxu0 0.0
        %1538 = vmatpush1.msra.mxu0 0.0
        %1539 = vmatprep.subr.mxu0 0.0
        %1540 = vmatpush1.msra.mxu0 0.0
        %1541 = vmatprep.subr.mxu0 0.0
        %1542 = vmatpush1.msra.mxu0 0.0
        %1543 = vmatprep.subr.mxu0 0.0
        %1544 = vmatpush1.msra.mxu0 0.0
        %1545 = vmatprep.subr.mxu0 0.0
        %1546 = vmatpush1.msra.mxu0 0.0
        %1547 = vmatprep.subr.mxu0 0.0
        %1548 = vmatpush1.msra.mxu0 0.0
        %1549 = vmatprep.subr.mxu0 0.0
        %1550 = vmatpush1.msra.mxu0 0.0
        %1551 = vmatprep.subr.mxu0 0.0
        %1552 = vmatpush1.msra.mxu0 0.0
        %1553 = vmatprep.subr.mxu0 0.0
        %1554 = vmatpush1.msra.mxu0 0.0
        %1555 = vmatprep.subr.mxu0 0.0
        %1556 = vmatpush1.msra.mxu0 0.0
        %1557 = vmatprep.subr.mxu0 0.0
        %1558 = vmatpush1.msra.mxu0 0.0
        %1559 = vmatprep.subr.mxu0 0.0
        %1560 = vmatpush1.msra.mxu0 0.0
        %1561 = vmatprep.subr.mxu0 0.0
        %1562 = vmatpush1.msra.mxu0 0.0
        %1563 = vmatprep.subr.mxu0 0.0
        %1564 = vmatpush1.msra.mxu0 0.0
        %1565 = vmatprep.mubr.f32.mxu0 0.0
        %v1566 = vand.u32 %v1495, 4294901760
        %v1567 = vsub.f32 %v1495, %v1566
        %v1568 = vand.u32 %v1567, 4294901760
        %v1569 = vsub.f32 %v1567, %v1568
        %v1570 = vand.u32 %v1569, 4294901760
        %1571 = vmatmul.mubr.f32.gmra.mrb[0].mxu0 %v1570
        %v1572 = vpop.f32.mrb[0].mxu0
        %v1573 = vadd.f32 0.0, %v1572
        %v1574 = vpop.f32.mrb[0].mxu0
        %1575 = vdwg.mxu0
        %1576 = vmatprep.subr.mxu0 0.0
        %v1577 = vand.u32 %v432, 4294901760
        %v1578 = vsub.f32 %v432, %v1577
        %v1579 = vand.u32 %v1578, 4294901760
        %v1580 = vsub.f32 %v1578, %v1579
        %v1581 = vand.u32 %v1580, 4294901760
        %1582 = vmatpush1.msra.mxu0 %v1581
        %1583 = vmatprep.subr.mxu0 0.0
        %v1584 = vand.u32 %v433, 4294901760
        %v1585 = vsub.f32 %v433, %v1584
        %v1586 = vand.u32 %v1585, 4294901760
        %v1587 = vsub.f32 %v1585, %v1586
        %v1588 = vand.u32 %v1587, 4294901760
        %1589 = vmatpush1.msra.mxu0 %v1588
        %1590 = vmatprep.subr.mxu0 0.0
        %v1591 = vand.u32 %v434, 4294901760
        %v1592 = vsub.f32 %v434, %v1591
        %v1593 = vand.u32 %v1592, 4294901760
        %v1594 = vsub.f32 %v1592, %v1593
        %v1595 = vand.u32 %v1594, 4294901760
        %1596 = vmatpush1.msra.mxu0 %v1595
        %1597 = vmatprep.subr.mxu0 0.0
        %v1598 = vand.u32 %v435, 4294901760
        %v1599 = vsub.f32 %v435, %v1598
        %v1600 = vand.u32 %v1599, 4294901760
        %v1601 = vsub.f32 %v1599, %v1600
        %v1602 = vand.u32 %v1601, 4294901760
        %1603 = vmatpush1.msra.mxu0 %v1602
        %1604 = vmatprep.subr.mxu0 0.0
        %1605 = vmatpush1.msra.mxu0 0.0
        %1606 = vmatprep.subr.mxu0 0.0
        %1607 = vmatpush1.msra.mxu0 0.0
        %1608 = vmatprep.subr.mxu0 0.0
        %1609 = vmatpush1.msra.mxu0 0.0
        %1610 = vmatprep.subr.mxu0 0.0
        %1611 = vmatpush1.msra.mxu0 0.0
        %1612 = vmatprep.subr.mxu0 0.0
        %1613 = vmatpush1.msra.mxu0 0.0
        %1614 = vmatprep.subr.mxu0 0.0
        %1615 = vmatpush1.msra.mxu0 0.0
        %1616 = vmatprep.subr.mxu0 0.0
        %1617 = vmatpush1.msra.mxu0 0.0
        %1618 = vmatprep.subr.mxu0 0.0
        %1619 = vmatpush1.msra.mxu0 0.0
        %1620 = vmatprep.subr.mxu0 0.0
        %1621 = vmatpush1.msra.mxu0 0.0
        %1622 = vmatprep.subr.mxu0 0.0
        %1623 = vmatpush1.msra.mxu0 0.0
        %1624 = vmatprep.subr.mxu0 0.0
        %1625 = vmatpush1.msra.mxu0 0.0
        %1626 = vmatprep.subr.mxu0 0.0
        %1627 = vmatpush1.msra.mxu0 0.0
        %1628 = vmatprep.subr.mxu0 0.0
        %1629 = vmatpush1.msra.mxu0 0.0
        %1630 = vmatprep.subr.mxu0 0.0
        %1631 = vmatpush1.msra.mxu0 0.0
        %1632 = vmatprep.subr.mxu0 0.0
        %1633 = vmatpush1.msra.mxu0 0.0
        %1634 = vmatprep.subr.mxu0 0.0
        %1635 = vmatpush1.msra.mxu0 0.0
        %1636 = vmatprep.subr.mxu0 0.0
        %1637 = vmatpush1.msra.mxu0 0.0
        %1638 = vmatprep.subr.mxu0 0.0
        %1639 = vmatpush1.msra.mxu0 0.0
        %1640 = vmatprep.subr.mxu0 0.0
        %1641 = vmatpush1.msra.mxu0 0.0
        %1642 = vmatprep.subr.mxu0 0.0
        %1643 = vmatpush1.msra.mxu0 0.0
        %1644 = vmatprep.subr.mxu0 0.0
        %1645 = vmatpush1.msra.mxu0 0.0
        %1646 = vmatprep.subr.mxu0 0.0
        %1647 = vmatpush1.msra.mxu0 0.0
        %1648 = vmatprep.subr.mxu0 0.0
        %1649 = vmatpush1.msra.mxu0 0.0
        %1650 = vmatprep.subr.mxu0 0.0
        %1651 = vmatpush1.msra.mxu0 0.0
        %1652 = vmatprep.subr.mxu0 0.0
        %1653 = vmatpush1.msra.mxu0 0.0
        %1654 = vmatprep.subr.mxu0 0.0
        %1655 = vmatpush1.msra.mxu0 0.0
        %1656 = vmatprep.subr.mxu0 0.0
        %1657 = vmatpush1.msra.mxu0 0.0
        %1658 = vmatprep.subr.mxu0 0.0
        %1659 = vmatpush1.msra.mxu0 0.0
        %1660 = vmatprep.mubr.f32.mxu0 0.0
        %v1661 = vand.u32 %v1495, 4294901760
        %1662 = vmatmul.mubr.f32.gmra.mrb[0].mxu0 %v1661
        %v1663 = vpop.f32.mrb[0].mxu0
        %v1664 = vadd.f32 %v1573, %v1663
        %v1665 = vpop.f32.mrb[0].mxu0
        %1666 = vdwg.mxu0
        %1667 = vmatprep.subr.mxu0 0.0
        %v1668 = vand.u32 %v432, 4294901760
        %v1669 = vsub.f32 %v432, %v1668
        %1670 = vmatpush1.msra.mxu0 %v1669
        %1671 = vmatprep.subr.mxu0 0.0
        %v1672 = vand.u32 %v433, 4294901760
        %v1673 = vsub.f32 %v433, %v1672
        %1674 = vmatpush1.msra.mxu0 %v1673
        %1675 = vmatprep.subr.mxu0 0.0
        %v1676 = vand.u32 %v434, 4294901760
        %v1677 = vsub.f32 %v434, %v1676
        %1678 = vmatpush1.msra.mxu0 %v1677
        %1679 = vmatprep.subr.mxu0 0.0
        %v1680 = vand.u32 %v435, 4294901760
        %v1681 = vsub.f32 %v435, %v1680
        %1682 = vmatpush1.msra.mxu0 %v1681
        %1683 = vmatprep.subr.mxu0 0.0
        %1684 = vmatpush1.msra.mxu0 0.0
        %1685 = vmatprep.subr.mxu0 0.0
        %1686 = vmatpush1.msra.mxu0 0.0
        %1687 = vmatprep.subr.mxu0 0.0
        %1688 = vmatpush1.msra.mxu0 0.0
        %1689 = vmatprep.subr.mxu0 0.0
        %1690 = vmatpush1.msra.mxu0 0.0
        %1691 = vmatprep.subr.mxu0 0.0
        %1692 = vmatpush1.msra.mxu0 0.0
        %1693 = vmatprep.subr.mxu0 0.0
        %1694 = vmatpush1.msra.mxu0 0.0
        %1695 = vmatprep.subr.mxu0 0.0
        %1696 = vmatpush1.msra.mxu0 0.0
        %1697 = vmatprep.subr.mxu0 0.0
        %1698 = vmatpush1.msra.mxu0 0.0
        %1699 = vmatprep.subr.mxu0 0.0
        %1700 = vmatpush1.msra.mxu0 0.0
        %1701 = vmatprep.subr.mxu0 0.0
        %1702 = vmatpush1.msra.mxu0 0.0
        %1703 = vmatprep.subr.mxu0 0.0
        %1704 = vmatpush1.msra.mxu0 0.0
        %1705 = vmatprep.subr.mxu0 0.0
        %1706 = vmatpush1.msra.mxu0 0.0
        %1707 = vmatprep.subr.mxu0 0.0
        %1708 = vmatpush1.msra.mxu0 0.0
        %1709 = vmatprep.subr.mxu0 0.0
        %1710 = vmatpush1.msra.mxu0 0.0
        %1711 = vmatprep.subr.mxu0 0.0
        %1712 = vmatpush1.msra.mxu0 0.0
        %1713 = vmatprep.subr.mxu0 0.0
        %1714 = vmatpush1.msra.mxu0 0.0
        %1715 = vmatprep.subr.mxu0 0.0
        %1716 = vmatpush1.msra.mxu0 0.0
        %1717 = vmatprep.subr.mxu0 0.0
        %1718 = vmatpush1.msra.mxu0 0.0
        %1719 = vmatprep.subr.mxu0 0.0
        %1720 = vmatpush1.msra.mxu0 0.0
        %1721 = vmatprep.subr.mxu0 0.0
        %1722 = vmatpush1.msra.mxu0 0.0
        %1723 = vmatprep.subr.mxu0 0.0
        %1724 = vmatpush1.msra.mxu0 0.0
        %1725 = vmatprep.subr.mxu0 0.0
        %1726 = vmatpush1.msra.mxu0 0.0
        %1727 = vmatprep.subr.mxu0 0.0
        %1728 = vmatpush1.msra.mxu0 0.0
        %1729 = vmatprep.subr.mxu0 0.0
        %1730 = vmatpush1.msra.mxu0 0.0
        %1731 = vmatprep.subr.mxu0 0.0
        %1732 = vmatpush1.msra.mxu0 0.0
        %1733 = vmatprep.subr.mxu0 0.0
        %1734 = vmatpush1.msra.mxu0 0.0
        %1735 = vmatprep.subr.mxu0 0.0
        %1736 = vmatpush1.msra.mxu0 0.0
        %1737 = vmatprep.subr.mxu0 0.0
        %1738 = vmatpush1.msra.mxu0 0.0
        %1739 = vmatprep.mubr.f32.mxu0 0.0
        %v1740 = vand.u32 %v1495, 4294901760
        %v1741 = vsub.f32 %v1495, %v1740
        %1742 = vmatmul.mubr.f32.gmra.mrb[0].mxu0 %v1741
        %v1743 = vpop.f32.mrb[0].mxu0
        %v1744 = vadd.f32 %v1664, %v1743
        %v1745 = vpop.f32.mrb[0].mxu0
        %1746 = vdwg.mxu0
        %1747 = vmatprep.subr.mxu0 0.0
        %v1748 = vand.u32 %v432, 4294901760
        %1749 = vmatpush1.msra.mxu0 %v1748
        %1750 = vmatprep.subr.mxu0 0.0
        %v1751 = vand.u32 %v433, 4294901760
        %1752 = vmatpush1.msra.mxu0 %v1751
        %1753 = vmatprep.subr.mxu0 0.0
        %v1754 = vand.u32 %v434, 4294901760
        %1755 = vmatpush1.msra.mxu0 %v1754
        %1756 = vmatprep.subr.mxu0 0.0
        %v1757 = vand.u32 %v435, 4294901760
        %1758 = vmatpush1.msra.mxu0 %v1757
        %1759 = vmatprep.subr.mxu0 0.0
        %1760 = vmatpush1.msra.mxu0 0.0
        %1761 = vmatprep.subr.mxu0 0.0
        %1762 = vmatpush1.msra.mxu0 0.0
        %1763 = vmatprep.subr.mxu0 0.0
        %1764 = vmatpush1.msra.mxu0 0.0
        %1765 = vmatprep.subr.mxu0 0.0
        %1766 = vmatpush1.msra.mxu0 0.0
        %1767 = vmatprep.subr.mxu0 0.0
        %1768 = vmatpush1.msra.mxu0 0.0
        %1769 = vmatprep.subr.mxu0 0.0
        %1770 = vmatpush1.msra.mxu0 0.0
        %1771 = vmatprep.subr.mxu0 0.0
        %1772 = vmatpush1.msra.mxu0 0.0
        %1773 = vmatprep.subr.mxu0 0.0
        %1774 = vmatpush1.msra.mxu0 0.0
        %1775 = vmatprep.subr.mxu0 0.0
        %1776 = vmatpush1.msra.mxu0 0.0
        %1777 = vmatprep.subr.mxu0 0.0
        %1778 = vmatpush1.msra.mxu0 0.0
        %1779 = vmatprep.subr.mxu0 0.0
        %1780 = vmatpush1.msra.mxu0 0.0
        %1781 = vmatprep.subr.mxu0 0.0
        %1782 = vmatpush1.msra.mxu0 0.0
        %1783 = vmatprep.subr.mxu0 0.0
        %1784 = vmatpush1.msra.mxu0 0.0
        %1785 = vmatprep.subr.mxu0 0.0
        %1786 = vmatpush1.msra.mxu0 0.0
        %1787 = vmatprep.subr.mxu0 0.0
        %1788 = vmatpush1.msra.mxu0 0.0
        %1789 = vmatprep.subr.mxu0 0.0
        %1790 = vmatpush1.msra.mxu0 0.0
        %1791 = vmatprep.subr.mxu0 0.0
        %1792 = vmatpush1.msra.mxu0 0.0
        %1793 = vmatprep.subr.mxu0 0.0
        %1794 = vmatpush1.msra.mxu0 0.0
        %1795 = vmatprep.subr.mxu0 0.0
        %1796 = vmatpush1.msra.mxu0 0.0
        %1797 = vmatprep.subr.mxu0 0.0
        %1798 = vmatpush1.msra.mxu0 0.0
        %1799 = vmatprep.subr.mxu0 0.0
        %1800 = vmatpush1.msra.mxu0 0.0
        %1801 = vmatprep.subr.mxu0 0.0
        %1802 = vmatpush1.msra.mxu0 0.0
        %1803 = vmatprep.subr.mxu0 0.0
        %1804 = vmatpush1.msra.mxu0 0.0
        %1805 = vmatprep.subr.mxu0 0.0
        %1806 = vmatpush1.msra.mxu0 0.0
        %1807 = vmatprep.subr.mxu0 0.0
        %1808 = vmatpush1.msra.mxu0 0.0
        %1809 = vmatprep.subr.mxu0 0.0
        %1810 = vmatpush1.msra.mxu0 0.0
        %1811 = vmatprep.subr.mxu0 0.0
        %1812 = vmatpush1.msra.mxu0 0.0
        %1813 = vmatprep.subr.mxu0 0.0
        %1814 = vmatpush1.msra.mxu0 0.0
        %1815 = vmatprep.mubr.f32.mxu0 0.0
        %v1816 = vand.u32 %v1495, 4294901760
        %v1817 = vsub.f32 %v1495, %v1816
        %v1818 = vand.u32 %v1817, 4294901760
        %1819 = vmatmul.mubr.f32.gmra.mrb[0].mxu0 %v1818
        %v1820 = vpop.f32.mrb[0].mxu0
        %v1821 = vadd.f32 %v1744, %v1820
        %v1822 = vpop.f32.mrb[0].mxu0
        %1823 = vdwg.mxu0
        %1824 = vmatprep.subr.mxu0 0.0
        %v1825 = vand.u32 %v432, 4294901760
        %v1826 = vsub.f32 %v432, %v1825
        %v1827 = vand.u32 %v1826, 4294901760
        %1828 = vmatpush1.msra.mxu0 %v1827
        %1829 = vmatprep.subr.mxu0 0.0
        %v1830 = vand.u32 %v433, 4294901760
        %v1831 = vsub.f32 %v433, %v1830
        %v1832 = vand.u32 %v1831, 4294901760
        %1833 = vmatpush1.msra.mxu0 %v1832
        %1834 = vmatprep.subr.mxu0 0.0
        %v1835 = vand.u32 %v434, 4294901760
        %v1836 = vsub.f32 %v434, %v1835
        %v1837 = vand.u32 %v1836, 4294901760
        %1838 = vmatpush1.msra.mxu0 %v1837
        %1839 = vmatprep.subr.mxu0 0.0
        %v1840 = vand.u32 %v435, 4294901760
        %v1841 = vsub.f32 %v435, %v1840
        %v1842 = vand.u32 %v1841, 4294901760
        %1843 = vmatpush1.msra.mxu0 %v1842
        %1844 = vmatprep.subr.mxu0 0.0
        %1845 = vmatpush1.msra.mxu0 0.0
        %1846 = vmatprep.subr.mxu0 0.0
        %1847 = vmatpush1.msra.mxu0 0.0
        %1848 = vmatprep.subr.mxu0 0.0
        %1849 = vmatpush1.msra.mxu0 0.0
        %1850 = vmatprep.subr.mxu0 0.0
        %1851 = vmatpush1.msra.mxu0 0.0
        %1852 = vmatprep.subr.mxu0 0.0
        %1853 = vmatpush1.msra.mxu0 0.0
        %1854 = vmatprep.subr.mxu0 0.0
        %1855 = vmatpush1.msra.mxu0 0.0
        %1856 = vmatprep.subr.mxu0 0.0
        %1857 = vmatpush1.msra.mxu0 0.0
        %1858 = vmatprep.subr.mxu0 0.0
        %1859 = vmatpush1.msra.mxu0 0.0
        %1860 = vmatprep.subr.mxu0 0.0
        %1861 = vmatpush1.msra.mxu0 0.0
        %1862 = vmatprep.subr.mxu0 0.0
        %1863 = vmatpush1.msra.mxu0 0.0
        %1864 = vmatprep.subr.mxu0 0.0
        %1865 = vmatpush1.msra.mxu0 0.0
        %1866 = vmatprep.subr.mxu0 0.0
        %1867 = vmatpush1.msra.mxu0 0.0
        %1868 = vmatprep.subr.mxu0 0.0
        %1869 = vmatpush1.msra.mxu0 0.0
        %1870 = vmatprep.subr.mxu0 0.0
        %1871 = vmatpush1.msra.mxu0 0.0
        %1872 = vmatprep.subr.mxu0 0.0
        %1873 = vmatpush1.msra.mxu0 0.0
        %1874 = vmatprep.subr.mxu0 0.0
        %1875 = vmatpush1.msra.mxu0 0.0
        %1876 = vmatprep.subr.mxu0 0.0
        %1877 = vmatpush1.msra.mxu0 0.0
        %1878 = vmatprep.subr.mxu0 0.0
        %1879 = vmatpush1.msra.mxu0 0.0
        %1880 = vmatprep.subr.mxu0 0.0
        %1881 = vmatpush1.msra.mxu0 0.0
        %1882 = vmatprep.subr.mxu0 0.0
        %1883 = vmatpush1.msra.mxu0 0.0
        %1884 = vmatprep.subr.mxu0 0.0
        %1885 = vmatpush1.msra.mxu0 0.0
        %1886 = vmatprep.subr.mxu0 0.0
        %1887 = vmatpush1.msra.mxu0 0.0
        %1888 = vmatprep.subr.mxu0 0.0
        %1889 = vmatpush1.msra.mxu0 0.0
        %1890 = vmatprep.subr.mxu0 0.0
        %1891 = vmatpush1.msra.mxu0 0.0
        %1892 = vmatprep.subr.mxu0 0.0
        %1893 = vmatpush1.msra.mxu0 0.0
        %1894 = vmatprep.subr.mxu0 0.0
        %1895 = vmatpush1.msra.mxu0 0.0
        %1896 = vmatprep.subr.mxu0 0.0
        %1897 = vmatpush1.msra.mxu0 0.0
        %1898 = vmatprep.subr.mxu0 0.0
        %1899 = vmatpush1.msra.mxu0 0.0
        %1900 = vmatprep.mubr.f32.mxu0 0.0
        %v1901 = vand.u32 %v1495, 4294901760
        %1902 = vmatmul.mubr.f32.gmra.mrb[0].mxu0 %v1901
        %v1903 = vpop.f32.mrb[0].mxu0
        %v1904 = vadd.f32 %v1821, %v1903
        %v1905 = vpop.f32.mrb[0].mxu0
        %1906 = vdwg.mxu0
        %1907 = vmatprep.subr.mxu0 0.0
        %v1908 = vand.u32 %v432, 4294901760
        %1909 = vmatpush1.msra.mxu0 %v1908
        %1910 = vmatprep.subr.mxu0 0.0
        %v1911 = vand.u32 %v433, 4294901760
        %1912 = vmatpush1.msra.mxu0 %v1911
        %1913 = vmatprep.subr.mxu0 0.0
        %v1914 = vand.u32 %v434, 4294901760
        %1915 = vmatpush1.msra.mxu0 %v1914
        %1916 = vmatprep.subr.mxu0 0.0
        %v1917 = vand.u32 %v435, 4294901760
        %1918 = vmatpush1.msra.mxu0 %v1917
        %1919 = vmatprep.subr.mxu0 0.0
        %1920 = vmatpush1.msra.mxu0 0.0
        %1921 = vmatprep.subr.mxu0 0.0
        %1922 = vmatpush1.msra.mxu0 0.0
        %1923 = vmatprep.subr.mxu0 0.0
        %1924 = vmatpush1.msra.mxu0 0.0
        %1925 = vmatprep.subr.mxu0 0.0
        %1926 = vmatpush1.msra.mxu0 0.0
        %1927 = vmatprep.subr.mxu0 0.0
        %1928 = vmatpush1.msra.mxu0 0.0
        %1929 = vmatprep.subr.mxu0 0.0
        %1930 = vmatpush1.msra.mxu0 0.0
        %1931 = vmatprep.subr.mxu0 0.0
        %1932 = vmatpush1.msra.mxu0 0.0
        %1933 = vmatprep.subr.mxu0 0.0
        %1934 = vmatpush1.msra.mxu0 0.0
        %1935 = vmatprep.subr.mxu0 0.0
        %1936 = vmatpush1.msra.mxu0 0.0
        %1937 = vmatprep.subr.mxu0 0.0
        %1938 = vmatpush1.msra.mxu0 0.0
        %1939 = vmatprep.subr.mxu0 0.0
        %1940 = vmatpush1.msra.mxu0 0.0
        %1941 = vmatprep.subr.mxu0 0.0
        %1942 = vmatpush1.msra.mxu0 0.0
        %1943 = vmatprep.subr.mxu0 0.0
        %1944 = vmatpush1.msra.mxu0 0.0
        %1945 = vmatprep.subr.mxu0 0.0
        %1946 = vmatpush1.msra.mxu0 0.0
        %1947 = vmatprep.subr.mxu0 0.0
        %1948 = vmatpush1.msra.mxu0 0.0
        %1949 = vmatprep.subr.mxu0 0.0
        %1950 = vmatpush1.msra.mxu0 0.0
        %1951 = vmatprep.subr.mxu0 0.0
        %1952 = vmatpush1.msra.mxu0 0.0
        %1953 = vmatprep.subr.mxu0 0.0
        %1954 = vmatpush1.msra.mxu0 0.0
        %1955 = vmatprep.subr.mxu0 0.0
        %1956 = vmatpush1.msra.mxu0 0.0
        %1957 = vmatprep.subr.mxu0 0.0
        %1958 = vmatpush1.msra.mxu0 0.0
        %1959 = vmatprep.subr.mxu0 0.0
        %1960 = vmatpush1.msra.mxu0 0.0
        %1961 = vmatprep.subr.mxu0 0.0
        %1962 = vmatpush1.msra.mxu0 0.0
        %1963 = vmatprep.subr.mxu0 0.0
        %1964 = vmatpush1.msra.mxu0 0.0
        %1965 = vmatprep.subr.mxu0 0.0
        %1966 = vmatpush1.msra.mxu0 0.0
        %1967 = vmatprep.subr.mxu0 0.0
        %1968 = vmatpush1.msra.mxu0 0.0
        %1969 = vmatprep.subr.mxu0 0.0
        %1970 = vmatpush1.msra.mxu0 0.0
        %1971 = vmatprep.subr.mxu0 0.0
        %1972 = vmatpush1.msra.mxu0 0.0
        %1973 = vmatprep.subr.mxu0 0.0
        %1974 = vmatpush1.msra.mxu0 0.0
        %1975 = vmatprep.mubr.f32.mxu0 0.0
        %v1976 = vand.u32 %v1495, 4294901760
        %1977 = vmatmul.mubr.f32.gmra.mrb[0].mxu0 %v1976
        %v1978 = vpop.f32.mrb[0].mxu0
        %v1979 = vadd.f32 %v1904, %v1978
        %v1980 = vpop.f32.mrb[0].mxu0
        %1981 = vdwg.mxu0
        %v1982 = vadd.f32 %v1494, %v1979
        %v1983 = vxor.u32 %v1982, 2147483648
        %v1984 = vmul.f32 %v1983, 1.442695
        %v1985 = vpow.pop %v1984
        %v1986 = vadd.f32 %v1985, 1.0
        %v1987 = vrcp.pop %v1986
        %v1988 = vmul.f32 1.0, %v1987
        %v1989 = vtanh.pop %v1982
        %v1990 = vmul.f32 %v1988, %v956
        %1992 = vrot.lane.b32.xlu0 %v1989, 64
        %v1993 = vpop.permute.xlu0 %1992
        %v1995 = vmul.f32 %v1988, %v1993
        %1997 = vrot.lane.b32.xlu0 %v1995, 32
        %v1998 = vpop.permute.xlu0 %1997
        %v2000 = vadd.f32 %v1990, %v1998
        %v2001 = vtanh.pop %v2000
        %2003 = vrot.lane.b32.xlu0 %v2001, 64
        %v2004 = vpop.permute.xlu0 %2003
        %v2006 = vmul.f32 %v1988, %v2004
        %s2007 = scalar_lea.vmem %s361, 16 [#allocation9]
        %v2008 = vld [vmem:[%s2007] sm:$0xff]
        %v2009 = vsel %vm445, %v1489, 0
        %2011 = vmatprep.subr.mxu0 0.0
        %v2012 = vand.u32 %v436, 4294901760
        %2013 = vmatpush1.msra.mxu0 %v2012
        %2014 = vmatprep.subr.mxu0 0.0
        %v2015 = vand.u32 %v437, 4294901760
        %2016 = vmatpush1.msra.mxu0 %v2015
        %2017 = vmatprep.subr.mxu0 0.0
        %v2018 = vand.u32 %v438, 4294901760
        %2019 = vmatpush1.msra.mxu0 %v2018
        %2020 = vmatprep.subr.mxu0 0.0
        %v2021 = vand.u32 %v439, 4294901760
        %2022 = vmatpush1.msra.mxu0 %v2021
        %2023 = vmatprep.subr.mxu0 0.0
        %2024 = vmatpush1.msra.mxu0 0.0
        %2025 = vmatprep.subr.mxu0 0.0
        %2026 = vmatpush1.msra.mxu0 0.0
        %2027 = vmatprep.subr.mxu0 0.0
        %2028 = vmatpush1.msra.mxu0 0.0
        %2029 = vmatprep.subr.mxu0 0.0
        %2030 = vmatpush1.msra.mxu0 0.0
        %2031 = vmatprep.subr.mxu0 0.0
        %2032 = vmatpush1.msra.mxu0 0.0
        %2033 = vmatprep.subr.mxu0 0.0
        %2034 = vmatpush1.msra.mxu0 0.0
        %2035 = vmatprep.subr.mxu0 0.0
        %2036 = vmatpush1.msra.mxu0 0.0
        %2037 = vmatprep.subr.mxu0 0.0
        %2038 = vmatpush1.msra.mxu0 0.0
        %2039 = vmatprep.subr.mxu0 0.0
        %2040 = vmatpush1.msra.mxu0 0.0
        %2041 = vmatprep.subr.mxu0 0.0
        %2042 = vmatpush1.msra.mxu0 0.0
        %2043 = vmatprep.subr.mxu0 0.0
        %2044 = vmatpush1.msra.mxu0 0.0
        %2045 = vmatprep.subr.mxu0 0.0
        %2046 = vmatpush1.msra.mxu0 0.0
        %2047 = vmatprep.subr.mxu0 0.0
        %2048 = vmatpush1.msra.mxu0 0.0
        %2049 = vmatprep.subr.mxu0 0.0
        %2050 = vmatpush1.msra.mxu0 0.0
        %2051 = vmatprep.subr.mxu0 0.0
        %2052 = vmatpush1.msra.mxu0 0.0
        %2053 = vmatprep.subr.mxu0 0.0
        %2054 = vmatpush1.msra.mxu0 0.0
        %2055 = vmatprep.subr.mxu0 0.0
        %2056 = vmatpush1.msra.mxu0 0.0
        %2057 = vmatprep.subr.mxu0 0.0
        %2058 = vmatpush1.msra.mxu0 0.0
        %2059 = vmatprep.subr.mxu0 0.0
        %2060 = vmatpush1.msra.mxu0 0.0
        %2061 = vmatprep.subr.mxu0 0.0
        %2062 = vmatpush1.msra.mxu0 0.0
        %2063 = vmatprep.subr.mxu0 0.0
        %2064 = vmatpush1.msra.mxu0 0.0
        %2065 = vmatprep.subr.mxu0 0.0
        %2066 = vmatpush1.msra.mxu0 0.0
        %2067 = vmatprep.subr.mxu0 0.0
        %2068 = vmatpush1.msra.mxu0 0.0
        %2069 = vmatprep.subr.mxu0 0.0
        %2070 = vmatpush1.msra.mxu0 0.0
        %2071 = vmatprep.subr.mxu0 0.0
        %2072 = vmatpush1.msra.mxu0 0.0
        %2073 = vmatprep.subr.mxu0 0.0
        %2074 = vmatpush1.msra.mxu0 0.0
        %2075 = vmatprep.subr.mxu0 0.0
        %2076 = vmatpush1.msra.mxu0 0.0
        %2077 = vmatprep.subr.mxu0 0.0
        %2078 = vmatpush1.msra.mxu0 0.0
        %2079 = vmatprep.mubr.f32.mxu0 0.0
        %v2080 = vand.u32 %v2009, 4294901760
        %v2081 = vsub.f32 %v2009, %v2080
        %v2082 = vand.u32 %v2081, 4294901760
        %v2083 = vsub.f32 %v2081, %v2082
        %v2084 = vand.u32 %v2083, 4294901760
        %2085 = vmatmul.mubr.f32.gmra.mrb[0].mxu0 %v2084
        %v2086 = vpop.f32.mrb[0].mxu0
        %v2087 = vadd.f32 0.0, %v2086
        %v2088 = vpop.f32.mrb[0].mxu0
        %2089 = vdwg.mxu0
        %2090 = vmatprep.subr.mxu0 0.0
        %v2091 = vand.u32 %v436, 4294901760
        %v2092 = vsub.f32 %v436, %v2091
        %v2093 = vand.u32 %v2092, 4294901760
        %v2094 = vsub.f32 %v2092, %v2093
        %v2095 = vand.u32 %v2094, 4294901760
        %2096 = vmatpush1.msra.mxu0 %v2095
        %2097 = vmatprep.subr.mxu0 0.0
        %v2098 = vand.u32 %v437, 4294901760
        %v2099 = vsub.f32 %v437, %v2098
        %v2100 = vand.u32 %v2099, 4294901760
        %v2101 = vsub.f32 %v2099, %v2100
        %v2102 = vand.u32 %v2101, 4294901760
        %2103 = vmatpush1.msra.mxu0 %v2102
        %2104 = vmatprep.subr.mxu0 0.0
        %v2105 = vand.u32 %v438, 4294901760
        %v2106 = vsub.f32 %v438, %v2105
        %v2107 = vand.u32 %v2106, 4294901760
        %v2108 = vsub.f32 %v2106, %v2107
        %v2109 = vand.u32 %v2108, 4294901760
        %2110 = vmatpush1.msra.mxu0 %v2109
        %2111 = vmatprep.subr.mxu0 0.0
        %v2112 = vand.u32 %v439, 4294901760
        %v2113 = vsub.f32 %v439, %v2112
        %v2114 = vand.u32 %v2113, 4294901760
        %v2115 = vsub.f32 %v2113, %v2114
        %v2116 = vand.u32 %v2115, 4294901760
        %2117 = vmatpush1.msra.mxu0 %v2116
        %2118 = vmatprep.subr.mxu0 0.0
        %2119 = vmatpush1.msra.mxu0 0.0
        %2120 = vmatprep.subr.mxu0 0.0
        %2121 = vmatpush1.msra.mxu0 0.0
        %2122 = vmatprep.subr.mxu0 0.0
        %2123 = vmatpush1.msra.mxu0 0.0
        %2124 = vmatprep.subr.mxu0 0.0
        %2125 = vmatpush1.msra.mxu0 0.0
        %2126 = vmatprep.subr.mxu0 0.0
        %2127 = vmatpush1.msra.mxu0 0.0
        %2128 = vmatprep.subr.mxu0 0.0
        %2129 = vmatpush1.msra.mxu0 0.0
        %2130 = vmatprep.subr.mxu0 0.0
        %2131 = vmatpush1.msra.mxu0 0.0
        %2132 = vmatprep.subr.mxu0 0.0
        %2133 = vmatpush1.msra.mxu0 0.0
        %2134 = vmatprep.subr.mxu0 0.0
        %2135 = vmatpush1.msra.mxu0 0.0
        %2136 = vmatprep.subr.mxu0 0.0
        %2137 = vmatpush1.msra.mxu0 0.0
        %2138 = vmatprep.subr.mxu0 0.0
        %2139 = vmatpush1.msra.mxu0 0.0
        %2140 = vmatprep.subr.mxu0 0.0
        %2141 = vmatpush1.msra.mxu0 0.0
        %2142 = vmatprep.subr.mxu0 0.0
        %2143 = vmatpush1.msra.mxu0 0.0
        %2144 = vmatprep.subr.mxu0 0.0
        %2145 = vmatpush1.msra.mxu0 0.0
        %2146 = vmatprep.subr.mxu0 0.0
        %2147 = vmatpush1.msra.mxu0 0.0
        %2148 = vmatprep.subr.mxu0 0.0
        %2149 = vmatpush1.msra.mxu0 0.0
        %2150 = vmatprep.subr.mxu0 0.0
        %2151 = vmatpush1.msra.mxu0 0.0
        %2152 = vmatprep.subr.mxu0 0.0
        %2153 = vmatpush1.msra.mxu0 0.0
        %2154 = vmatprep.subr.mxu0 0.0
        %2155 = vmatpush1.msra.mxu0 0.0
        %2156 = vmatprep.subr.mxu0 0.0
        %2157 = vmatpush1.msra.mxu0 0.0
        %2158 = vmatprep.subr.mxu0 0.0
        %2159 = vmatpush1.msra.mxu0 0.0
        %2160 = vmatprep.subr.mxu0 0.0
        %2161 = vmatpush1.msra.mxu0 0.0
        %2162 = vmatprep.subr.mxu0 0.0
        %2163 = vmatpush1.msra.mxu0 0.0
        %2164 = vmatprep.subr.mxu0 0.0
        %2165 = vmatpush1.msra.mxu0 0.0
        %2166 = vmatprep.subr.mxu0 0.0
        %2167 = vmatpush1.msra.mxu0 0.0
        %2168 = vmatprep.subr.mxu0 0.0
        %2169 = vmatpush1.msra.mxu0 0.0
        %2170 = vmatprep.subr.mxu0 0.0
        %2171 = vmatpush1.msra.mxu0 0.0
        %2172 = vmatprep.subr.mxu0 0.0
        %2173 = vmatpush1.msra.mxu0 0.0
        %2174 = vmatprep.mubr.f32.mxu0 0.0
        %v2175 = vand.u32 %v2009, 4294901760
        %2176 = vmatmul.mubr.f32.gmra.mrb[0].mxu0 %v2175
        %v2177 = vpop.f32.mrb[0].mxu0
        %v2178 = vadd.f32 %v2087, %v2177
        %v2179 = vpop.f32.mrb[0].mxu0
        %2180 = vdwg.mxu0
        %2181 = vmatprep.subr.mxu0 0.0
        %v2182 = vand.u32 %v436, 4294901760
        %v2183 = vsub.f32 %v436, %v2182
        %2184 = vmatpush1.msra.mxu0 %v2183
        %2185 = vmatprep.subr.mxu0 0.0
        %v2186 = vand.u32 %v437, 4294901760
        %v2187 = vsub.f32 %v437, %v2186
        %2188 = vmatpush1.msra.mxu0 %v2187
        %2189 = vmatprep.subr.mxu0 0.0
        %v2190 = vand.u32 %v438, 4294901760
        %v2191 = vsub.f32 %v438, %v2190
        %2192 = vmatpush1.msra.mxu0 %v2191
        %2193 = vmatprep.subr.mxu0 0.0
        %v2194 = vand.u32 %v439, 4294901760
        %v2195 = vsub.f32 %v439, %v2194
        %2196 = vmatpush1.msra.mxu0 %v2195
        %2197 = vmatprep.subr.mxu0 0.0
        %2198 = vmatpush1.msra.mxu0 0.0
        %2199 = vmatprep.subr.mxu0 0.0
        %2200 = vmatpush1.msra.mxu0 0.0
        %2201 = vmatprep.subr.mxu0 0.0
        %2202 = vmatpush1.msra.mxu0 0.0
        %2203 = vmatprep.subr.mxu0 0.0
        %2204 = vmatpush1.msra.mxu0 0.0
        %2205 = vmatprep.subr.mxu0 0.0
        %2206 = vmatpush1.msra.mxu0 0.0
        %2207 = vmatprep.subr.mxu0 0.0
        %2208 = vmatpush1.msra.mxu0 0.0
        %2209 = vmatprep.subr.mxu0 0.0
        %2210 = vmatpush1.msra.mxu0 0.0
        %2211 = vmatprep.subr.mxu0 0.0
        %2212 = vmatpush1.msra.mxu0 0.0
        %2213 = vmatprep.subr.mxu0 0.0
        %2214 = vmatpush1.msra.mxu0 0.0
        %2215 = vmatprep.subr.mxu0 0.0
        %2216 = vmatpush1.msra.mxu0 0.0
        %2217 = vmatprep.subr.mxu0 0.0
        %2218 = vmatpush1.msra.mxu0 0.0
        %2219 = vmatprep.subr.mxu0 0.0
        %2220 = vmatpush1.msra.mxu0 0.0
        %2221 = vmatprep.subr.mxu0 0.0
        %2222 = vmatpush1.msra.mxu0 0.0
        %2223 = vmatprep.subr.mxu0 0.0
        %2224 = vmatpush1.msra.mxu0 0.0
        %2225 = vmatprep.subr.mxu0 0.0
        %2226 = vmatpush1.msra.mxu0 0.0
        %2227 = vmatprep.subr.mxu0 0.0
        %2228 = vmatpush1.msra.mxu0 0.0
        %2229 = vmatprep.subr.mxu0 0.0
        %2230 = vmatpush1.msra.mxu0 0.0
        %2231 = vmatprep.subr.mxu0 0.0
        %2232 = vmatpush1.msra.mxu0 0.0
        %2233 = vmatprep.subr.mxu0 0.0
        %2234 = vmatpush1.msra.mxu0 0.0
        %2235 = vmatprep.subr.mxu0 0.0
        %2236 = vmatpush1.msra.mxu0 0.0
        %2237 = vmatprep.subr.mxu0 0.0
        %2238 = vmatpush1.msra.mxu0 0.0
        %2239 = vmatprep.subr.mxu0 0.0
        %2240 = vmatpush1.msra.mxu0 0.0
        %2241 = vmatprep.subr.mxu0 0.0
        %2242 = vmatpush1.msra.mxu0 0.0
        %2243 = vmatprep.subr.mxu0 0.0
        %2244 = vmatpush1.msra.mxu0 0.0
        %2245 = vmatprep.subr.mxu0 0.0
        %2246 = vmatpush1.msra.mxu0 0.0
        %2247 = vmatprep.subr.mxu0 0.0
        %2248 = vmatpush1.msra.mxu0 0.0
        %2249 = vmatprep.subr.mxu0 0.0
        %2250 = vmatpush1.msra.mxu0 0.0
        %2251 = vmatprep.subr.mxu0 0.0
        %2252 = vmatpush1.msra.mxu0 0.0
        %2253 = vmatprep.mubr.f32.mxu0 0.0
        %v2254 = vand.u32 %v2009, 4294901760
        %v2255 = vsub.f32 %v2009, %v2254
        %2256 = vmatmul.mubr.f32.gmra.mrb[0].mxu0 %v2255
        %v2257 = vpop.f32.mrb[0].mxu0
        %v2258 = vadd.f32 %v2178, %v2257
        %v2259 = vpop.f32.mrb[0].mxu0
        %2260 = vdwg.mxu0
        %2261 = vmatprep.subr.mxu0 0.0
        %v2262 = vand.u32 %v436, 4294901760
        %2263 = vmatpush1.msra.mxu0 %v2262
        %2264 = vmatprep.subr.mxu0 0.0
        %v2265 = vand.u32 %v437, 4294901760
        %2266 = vmatpush1.msra.mxu0 %v2265
        %2267 = vmatprep.subr.mxu0 0.0
        %v2268 = vand.u32 %v438, 4294901760
        %2269 = vmatpush1.msra.mxu0 %v2268
        %2270 = vmatprep.subr.mxu0 0.0
        %v2271 = vand.u32 %v439, 4294901760
        %2272 = vmatpush1.msra.mxu0 %v2271
        %2273 = vmatprep.subr.mxu0 0.0
        %2274 = vmatpush1.msra.mxu0 0.0
        %2275 = vmatprep.subr.mxu0 0.0
        %2276 = vmatpush1.msra.mxu0 0.0
        %2277 = vmatprep.subr.mxu0 0.0
        %2278 = vmatpush1.msra.mxu0 0.0
        %2279 = vmatprep.subr.mxu0 0.0
        %2280 = vmatpush1.msra.mxu0 0.0
        %2281 = vmatprep.subr.mxu0 0.0
        %2282 = vmatpush1.msra.mxu0 0.0
        %2283 = vmatprep.subr.mxu0 0.0
        %2284 = vmatpush1.msra.mxu0 0.0
        %2285 = vmatprep.subr.mxu0 0.0
        %2286 = vmatpush1.msra.mxu0 0.0
        %2287 = vmatprep.subr.mxu0 0.0
        %2288 = vmatpush1.msra.mxu0 0.0
        %2289 = vmatprep.subr.mxu0 0.0
        %2290 = vmatpush1.msra.mxu0 0.0
        %2291 = vmatprep.subr.mxu0 0.0
        %2292 = vmatpush1.msra.mxu0 0.0
        %2293 = vmatprep.subr.mxu0 0.0
        %2294 = vmatpush1.msra.mxu0 0.0
        %2295 = vmatprep.subr.mxu0 0.0
        %2296 = vmatpush1.msra.mxu0 0.0
        %2297 = vmatprep.subr.mxu0 0.0
        %2298 = vmatpush1.msra.mxu0 0.0
        %2299 = vmatprep.subr.mxu0 0.0
        %2300 = vmatpush1.msra.mxu0 0.0
        %2301 = vmatprep.subr.mxu0 0.0
        %2302 = vmatpush1.msra.mxu0 0.0
        %2303 = vmatprep.subr.mxu0 0.0
        %2304 = vmatpush1.msra.mxu0 0.0
        %2305 = vmatprep.subr.mxu0 0.0
        %2306 = vmatpush1.msra.mxu0 0.0
        %2307 = vmatprep.subr.mxu0 0.0
        %2308 = vmatpush1.msra.mxu0 0.0
        %2309 = vmatprep.subr.mxu0 0.0
        %2310 = vmatpush1.msra.mxu0 0.0
        %2311 = vmatprep.subr.mxu0 0.0
        %2312 = vmatpush1.msra.mxu0 0.0
        %2313 = vmatprep.subr.mxu0 0.0
        %2314 = vmatpush1.msra.mxu0 0.0
        %2315 = vmatprep.subr.mxu0 0.0
        %2316 = vmatpush1.msra.mxu0 0.0
        %2317 = vmatprep.subr.mxu0 0.0
        %2318 = vmatpush1.msra.mxu0 0.0
        %2319 = vmatprep.subr.mxu0 0.0
        %2320 = vmatpush1.msra.mxu0 0.0
        %2321 = vmatprep.subr.mxu0 0.0
        %2322 = vmatpush1.msra.mxu0 0.0
        %2323 = vmatprep.subr.mxu0 0.0
        %2324 = vmatpush1.msra.mxu0 0.0
        %2325 = vmatprep.subr.mxu0 0.0
        %2326 = vmatpush1.msra.mxu0 0.0
        %2327 = vmatprep.subr.mxu0 0.0
        %2328 = vmatpush1.msra.mxu0 0.0
        %2329 = vmatprep.mubr.f32.mxu0 0.0
        %v2330 = vand.u32 %v2009, 4294901760
        %v2331 = vsub.f32 %v2009, %v2330
        %v2332 = vand.u32 %v2331, 4294901760
        %2333 = vmatmul.mubr.f32.gmra.mrb[0].mxu0 %v2332
        %v2334 = vpop.f32.mrb[0].mxu0
        %v2335 = vadd.f32 %v2258, %v2334
        %v2336 = vpop.f32.mrb[0].mxu0
        %2337 = vdwg.mxu0
        %2338 = vmatprep.subr.mxu0 0.0
        %v2339 = vand.u32 %v436, 4294901760
        %v2340 = vsub.f32 %v436, %v2339
        %v2341 = vand.u32 %v2340, 4294901760
        %2342 = vmatpush1.msra.mxu0 %v2341
        %2343 = vmatprep.subr.mxu0 0.0
        %v2344 = vand.u32 %v437, 4294901760
        %v2345 = vsub.f32 %v437, %v2344
        %v2346 = vand.u32 %v2345, 4294901760
        %2347 = vmatpush1.msra.mxu0 %v2346
        %2348 = vmatprep.subr.mxu0 0.0
        %v2349 = vand.u32 %v438, 4294901760
        %v2350 = vsub.f32 %v438, %v2349
        %v2351 = vand.u32 %v2350, 4294901760
        %2352 = vmatpush1.msra.mxu0 %v2351
        %2353 = vmatprep.subr.mxu0 0.0
        %v2354 = vand.u32 %v439, 4294901760
        %v2355 = vsub.f32 %v439, %v2354
        %v2356 = vand.u32 %v2355, 4294901760
        %2357 = vmatpush1.msra.mxu0 %v2356
        %2358 = vmatprep.subr.mxu0 0.0
        %2359 = vmatpush1.msra.mxu0 0.0
        %2360 = vmatprep.subr.mxu0 0.0
        %2361 = vmatpush1.msra.mxu0 0.0
        %2362 = vmatprep.subr.mxu0 0.0
        %2363 = vmatpush1.msra.mxu0 0.0
        %2364 = vmatprep.subr.mxu0 0.0
        %2365 = vmatpush1.msra.mxu0 0.0
        %2366 = vmatprep.subr.mxu0 0.0
        %2367 = vmatpush1.msra.mxu0 0.0
        %2368 = vmatprep.subr.mxu0 0.0
        %2369 = vmatpush1.msra.mxu0 0.0
        %2370 = vmatprep.subr.mxu0 0.0
        %2371 = vmatpush1.msra.mxu0 0.0
        %2372 = vmatprep.subr.mxu0 0.0
        %2373 = vmatpush1.msra.mxu0 0.0
        %2374 = vmatprep.subr.mxu0 0.0
        %2375 = vmatpush1.msra.mxu0 0.0
        %2376 = vmatprep.subr.mxu0 0.0
        %2377 = vmatpush1.msra.mxu0 0.0
        %2378 = vmatprep.subr.mxu0 0.0
        %2379 = vmatpush1.msra.mxu0 0.0
        %2380 = vmatprep.subr.mxu0 0.0
        %2381 = vmatpush1.msra.mxu0 0.0
        %2382 = vmatprep.subr.mxu0 0.0
        %2383 = vmatpush1.msra.mxu0 0.0
        %2384 = vmatprep.subr.mxu0 0.0
        %2385 = vmatpush1.msra.mxu0 0.0
        %2386 = vmatprep.subr.mxu0 0.0
        %2387 = vmatpush1.msra.mxu0 0.0
        %2388 = vmatprep.subr.mxu0 0.0
        %2389 = vmatpush1.msra.mxu0 0.0
        %2390 = vmatprep.subr.mxu0 0.0
        %2391 = vmatpush1.msra.mxu0 0.0
        %2392 = vmatprep.subr.mxu0 0.0
        %2393 = vmatpush1.msra.mxu0 0.0
        %2394 = vmatprep.subr.mxu0 0.0
        %2395 = vmatpush1.msra.mxu0 0.0
        %2396 = vmatprep.subr.mxu0 0.0
        %2397 = vmatpush1.msra.mxu0 0.0
        %2398 = vmatprep.subr.mxu0 0.0
        %2399 = vmatpush1.msra.mxu0 0.0
        %2400 = vmatprep.subr.mxu0 0.0
        %2401 = vmatpush1.msra.mxu0 0.0
        %2402 = vmatprep.subr.mxu0 0.0
        %2403 = vmatpush1.msra.mxu0 0.0
        %2404 = vmatprep.subr.mxu0 0.0
        %2405 = vmatpush1.msra.mxu0 0.0
        %2406 = vmatprep.subr.mxu0 0.0
        %2407 = vmatpush1.msra.mxu0 0.0
        %2408 = vmatprep.subr.mxu0 0.0
        %2409 = vmatpush1.msra.mxu0 0.0
        %2410 = vmatprep.subr.mxu0 0.0
        %2411 = vmatpush1.msra.mxu0 0.0
        %2412 = vmatprep.subr.mxu0 0.0
        %2413 = vmatpush1.msra.mxu0 0.0
        %2414 = vmatprep.mubr.f32.mxu0 0.0
        %v2415 = vand.u32 %v2009, 4294901760
        %2416 = vmatmul.mubr.f32.gmra.mrb[0].mxu0 %v2415
        %v2417 = vpop.f32.mrb[0].mxu0
        %v2418 = vadd.f32 %v2335, %v2417
        %v2419 = vpop.f32.mrb[0].mxu0
        %2420 = vdwg.mxu0
        %2421 = vmatprep.subr.mxu0 0.0
        %v2422 = vand.u32 %v436, 4294901760
        %2423 = vmatpush1.msra.mxu0 %v2422
        %2424 = vmatprep.subr.mxu0 0.0
        %v2425 = vand.u32 %v437, 4294901760
        %2426 = vmatpush1.msra.mxu0 %v2425
        %2427 = vmatprep.subr.mxu0 0.0
        %v2428 = vand.u32 %v438, 4294901760
        %2429 = vmatpush1.msra.mxu0 %v2428
        %2430 = vmatprep.subr.mxu0 0.0
        %v2431 = vand.u32 %v439, 4294901760
        %2432 = vmatpush1.msra.mxu0 %v2431
        %2433 = vmatprep.subr.mxu0 0.0
        %2434 = vmatpush1.msra.mxu0 0.0
        %2435 = vmatprep.subr.mxu0 0.0
        %2436 = vmatpush1.msra.mxu0 0.0
        %2437 = vmatprep.subr.mxu0 0.0
        %2438 = vmatpush1.msra.mxu0 0.0
        %2439 = vmatprep.subr.mxu0 0.0
        %2440 = vmatpush1.msra.mxu0 0.0
        %2441 = vmatprep.subr.mxu0 0.0
        %2442 = vmatpush1.msra.mxu0 0.0
        %2443 = vmatprep.subr.mxu0 0.0
        %2444 = vmatpush1.msra.mxu0 0.0
        %2445 = vmatprep.subr.mxu0 0.0
        %2446 = vmatpush1.msra.mxu0 0.0
        %2447 = vmatprep.subr.mxu0 0.0
        %2448 = vmatpush1.msra.mxu0 0.0
        %2449 = vmatprep.subr.mxu0 0.0
        %2450 = vmatpush1.msra.mxu0 0.0
        %2451 = vmatprep.subr.mxu0 0.0
        %2452 = vmatpush1.msra.mxu0 0.0
        %2453 = vmatprep.subr.mxu0 0.0
        %2454 = vmatpush1.msra.mxu0 0.0
        %2455 = vmatprep.subr.mxu0 0.0
        %2456 = vmatpush1.msra.mxu0 0.0
        %2457 = vmatprep.subr.mxu0 0.0
        %2458 = vmatpush1.msra.mxu0 0.0
        %2459 = vmatprep.subr.mxu0 0.0
        %2460 = vmatpush1.msra.mxu0 0.0
        %2461 = vmatprep.subr.mxu0 0.0
        %2462 = vmatpush1.msra.mxu0 0.0
        %2463 = vmatprep.subr.mxu0 0.0
        %2464 = vmatpush1.msra.mxu0 0.0
        %2465 = vmatprep.subr.mxu0 0.0
        %2466 = vmatpush1.msra.mxu0 0.0
        %2467 = vmatprep.subr.mxu0 0.0
        %2468 = vmatpush1.msra.mxu0 0.0
        %2469 = vmatprep.subr.mxu0 0.0
        %2470 = vmatpush1.msra.mxu0 0.0
        %2471 = vmatprep.subr.mxu0 0.0
        %2472 = vmatpush1.msra.mxu0 0.0
        %2473 = vmatprep.subr.mxu0 0.0
        %2474 = vmatpush1.msra.mxu0 0.0
        %2475 = vmatprep.subr.mxu0 0.0
        %2476 = vmatpush1.msra.mxu0 0.0
        %2477 = vmatprep.subr.mxu0 0.0
        %2478 = vmatpush1.msra.mxu0 0.0
        %2479 = vmatprep.subr.mxu0 0.0
        %2480 = vmatpush1.msra.mxu0 0.0
        %2481 = vmatprep.subr.mxu0 0.0
        %2482 = vmatpush1.msra.mxu0 0.0
        %2483 = vmatprep.subr.mxu0 0.0
        %2484 = vmatpush1.msra.mxu0 0.0
        %2485 = vmatprep.subr.mxu0 0.0
        %2486 = vmatpush1.msra.mxu0 0.0
        %2487 = vmatprep.subr.mxu0 0.0
        %2488 = vmatpush1.msra.mxu0 0.0
        %2489 = vmatprep.mubr.f32.mxu0 0.0
        %v2490 = vand.u32 %v2009, 4294901760
        %2491 = vmatmul.mubr.f32.gmra.mrb[0].mxu0 %v2490
        %v2492 = vpop.f32.mrb[0].mxu0
        %v2493 = vadd.f32 %v2418, %v2492
        %v2494 = vpop.f32.mrb[0].mxu0
        %2495 = vdwg.mxu0
        %v2496 = vadd.f32 %v2008, %v2493
        %v2497 = vxor.u32 %v2496, 2147483648
        %v2498 = vmul.f32 %v2497, 1.442695
        %v2499 = vpow.pop %v2498
        %v2500 = vadd.f32 %v2499, 1.0
        %v2501 = vrcp.pop %v2500
        %v2502 = vmul.f32 1.0, %v2501
        %v2503 = vtanh.pop %v2496
        %v2504 = vmul.f32 %v2502, %v1475
        %2506 = vrot.lane.b32.xlu0 %v2503, 64
        %v2507 = vpop.permute.xlu0 %2506
        %v2509 = vmul.f32 %v2502, %v2507
        %2511 = vrot.lane.b32.xlu0 %v2509, 32
        %v2512 = vpop.permute.xlu0 %2511
        %v2514 = vadd.f32 %v2504, %v2512
        %v2515 = vtanh.pop %v2514
        %2517 = vrot.lane.b32.xlu0 %v2515, 64
        %v2518 = vpop.permute.xlu0 %2517
        %v2520 = vmul.f32 %v2502, %v2518
        %2522 = vrot.lane.b32.xlu0 %v2006, 32
        %v2523 = vpop.permute.xlu0 %2522
        %s2525 = scalar_lea.vmem %s404, 8 [#allocation15]
        %2526 = vst.msk [vmem:[%s2525] sm:$0xff] %vm445, %v2523
        %2528 = vrot.lane.b32.xlu0 %v2520, 32
        %v2529 = vpop.permute.xlu0 %2528
        %s2531 = scalar_lea.vmem %s411, 16 [#allocation16]
        %2532 = vst.msk [vmem:[%s2531] sm:$0xff] %vm445, %v2529
        %s2533 = scalar_lea.vmem %s352, 16 [#allocation6]
        %v2534 = vld [vmem:[%s2533] sm:$0xff]
        %v2535 = vsel %vm445, %v2523, 0
        %2537 = vmatprep.subr.mxu0 0.0
        %v2538 = vand.u32 %v432, 4294901760
        %2539 = vmatpush1.msra.mxu0 %v2538
        %2540 = vmatprep.subr.mxu0 0.0
        %v2541 = vand.u32 %v433, 4294901760
        %2542 = vmatpush1.msra.mxu0 %v2541
        %2543 = vmatprep.subr.mxu0 0.0
        %v2544 = vand.u32 %v434, 4294901760
        %2545 = vmatpush1.msra.mxu0 %v2544
        %2546 = vmatprep.subr.mxu0 0.0
        %v2547 = vand.u32 %v435, 4294901760
        %2548 = vmatpush1.msra.mxu0 %v2547
        %2549 = vmatprep.subr.mxu0 0.0
        %2550 = vmatpush1.msra.mxu0 0.0
        %2551 = vmatprep.subr.mxu0 0.0
        %2552 = vmatpush1.msra.mxu0 0.0
        %2553 = vmatprep.subr.mxu0 0.0
        %2554 = vmatpush1.msra.mxu0 0.0
        %2555 = vmatprep.subr.mxu0 0.0
        %2556 = vmatpush1.msra.mxu0 0.0
        %2557 = vmatprep.subr.mxu0 0.0
        %2558 = vmatpush1.msra.mxu0 0.0
        %2559 = vmatprep.subr.mxu0 0.0
        %2560 = vmatpush1.msra.mxu0 0.0
        %2561 = vmatprep.subr.mxu0 0.0
        %2562 = vmatpush1.msra.mxu0 0.0
        %2563 = vmatprep.subr.mxu0 0.0
        %2564 = vmatpush1.msra.mxu0 0.0
        %2565 = vmatprep.subr.mxu0 0.0
        %2566 = vmatpush1.msra.mxu0 0.0
        %2567 = vmatprep.subr.mxu0 0.0
        %2568 = vmatpush1.msra.mxu0 0.0
        %2569 = vmatprep.subr.mxu0 0.0
        %2570 = vmatpush1.msra.mxu0 0.0
        %2571 = vmatprep.subr.mxu0 0.0
        %2572 = vmatpush1.msra.mxu0 0.0
        %2573 = vmatprep.subr.mxu0 0.0
        %2574 = vmatpush1.msra.mxu0 0.0
        %2575 = vmatprep.subr.mxu0 0.0
        %2576 = vmatpush1.msra.mxu0 0.0
        %2577 = vmatprep.subr.mxu0 0.0
        %2578 = vmatpush1.msra.mxu0 0.0
        %2579 = vmatprep.subr.mxu0 0.0
        %2580 = vmatpush1.msra.mxu0 0.0
        %2581 = vmatprep.subr.mxu0 0.0
        %2582 = vmatpush1.msra.mxu0 0.0
        %2583 = vmatprep.subr.mxu0 0.0
        %2584 = vmatpush1.msra.mxu0 0.0
        %2585 = vmatprep.subr.mxu0 0.0
        %2586 = vmatpush1.msra.mxu0 0.0
        %2587 = vmatprep.subr.mxu0 0.0
        %2588 = vmatpush1.msra.mxu0 0.0
        %2589 = vmatprep.subr.mxu0 0.0
        %2590 = vmatpush1.msra.mxu0 0.0
        %2591 = vmatprep.subr.mxu0 0.0
        %2592 = vmatpush1.msra.mxu0 0.0
        %2593 = vmatprep.subr.mxu0 0.0
        %2594 = vmatpush1.msra.mxu0 0.0
        %2595 = vmatprep.subr.mxu0 0.0
        %2596 = vmatpush1.msra.mxu0 0.0
        %2597 = vmatprep.subr.mxu0 0.0
        %2598 = vmatpush1.msra.mxu0 0.0
        %2599 = vmatprep.subr.mxu0 0.0
        %2600 = vmatpush1.msra.mxu0 0.0
        %2601 = vmatprep.subr.mxu0 0.0
        %2602 = vmatpush1.msra.mxu0 0.0
        %2603 = vmatprep.subr.mxu0 0.0
        %2604 = vmatpush1.msra.mxu0 0.0
        %2605 = vmatprep.mubr.f32.mxu0 0.0
        %v2606 = vand.u32 %v2535, 4294901760
        %v2607 = vsub.f32 %v2535, %v2606
        %v2608 = vand.u32 %v2607, 4294901760
        %v2609 = vsub.f32 %v2607, %v2608
        %v2610 = vand.u32 %v2609, 4294901760
        %2611 = vmatmul.mubr.f32.gmra.mrb[0].mxu0 %v2610
        %v2612 = vpop.f32.mrb[0].mxu0
        %v2613 = vadd.f32 0.0, %v2612
        %v2614 = vpop.f32.mrb[0].mxu0
        %2615 = vdwg.mxu0
        %2616 = vmatprep.subr.mxu0 0.0
        %v2617 = vand.u32 %v432, 4294901760
        %v2618 = vsub.f32 %v432, %v2617
        %v2619 = vand.u32 %v2618, 4294901760
        %v2620 = vsub.f32 %v2618, %v2619
        %v2621 = vand.u32 %v2620, 4294901760
        %2622 = vmatpush1.msra.mxu0 %v2621
        %2623 = vmatprep.subr.mxu0 0.0
        %v2624 = vand.u32 %v433, 4294901760
        %v2625 = vsub.f32 %v433, %v2624
        %v2626 = vand.u32 %v2625, 4294901760
        %v2627 = vsub.f32 %v2625, %v2626
        %v2628 = vand.u32 %v2627, 4294901760
        %2629 = vmatpush1.msra.mxu0 %v2628
        %2630 = vmatprep.subr.mxu0 0.0
        %v2631 = vand.u32 %v434, 4294901760
        %v2632 = vsub.f32 %v434, %v2631
        %v2633 = vand.u32 %v2632, 4294901760
        %v2634 = vsub.f32 %v2632, %v2633
        %v2635 = vand.u32 %v2634, 4294901760
        %2636 = vmatpush1.msra.mxu0 %v2635
        %2637 = vmatprep.subr.mxu0 0.0
        %v2638 = vand.u32 %v435, 4294901760
        %v2639 = vsub.f32 %v435, %v2638
        %v2640 = vand.u32 %v2639, 4294901760
        %v2641 = vsub.f32 %v2639, %v2640
        %v2642 = vand.u32 %v2641, 4294901760
        %2643 = vmatpush1.msra.mxu0 %v2642
        %2644 = vmatprep.subr.mxu0 0.0
        %2645 = vmatpush1.msra.mxu0 0.0
        %2646 = vmatprep.subr.mxu0 0.0
        %2647 = vmatpush1.msra.mxu0 0.0
        %2648 = vmatprep.subr.mxu0 0.0
        %2649 = vmatpush1.msra.mxu0 0.0
        %2650 = vmatprep.subr.mxu0 0.0
        %2651 = vmatpush1.msra.mxu0 0.0
        %2652 = vmatprep.subr.mxu0 0.0
        %2653 = vmatpush1.msra.mxu0 0.0
        %2654 = vmatprep.subr.mxu0 0.0
        %2655 = vmatpush1.msra.mxu0 0.0
        %2656 = vmatprep.subr.mxu0 0.0
        %2657 = vmatpush1.msra.mxu0 0.0
        %2658 = vmatprep.subr.mxu0 0.0
        %2659 = vmatpush1.msra.mxu0 0.0
        %2660 = vmatprep.subr.mxu0 0.0
        %2661 = vmatpush1.msra.mxu0 0.0
        %2662 = vmatprep.subr.mxu0 0.0
        %2663 = vmatpush1.msra.mxu0 0.0
        %2664 = vmatprep.subr.mxu0 0.0
        %2665 = vmatpush1.msra.mxu0 0.0
        %2666 = vmatprep.subr.mxu0 0.0
        %2667 = vmatpush1.msra.mxu0 0.0
        %2668 = vmatprep.subr.mxu0 0.0
        %2669 = vmatpush1.msra.mxu0 0.0
        %2670 = vmatprep.subr.mxu0 0.0
        %2671 = vmatpush1.msra.mxu0 0.0
        %2672 = vmatprep.subr.mxu0 0.0
        %2673 = vmatpush1.msra.mxu0 0.0
        %2674 = vmatprep.subr.mxu0 0.0
        %2675 = vmatpush1.msra.mxu0 0.0
        %2676 = vmatprep.subr.mxu0 0.0
        %2677 = vmatpush1.msra.mxu0 0.0
        %2678 = vmatprep.subr.mxu0 0.0
        %2679 = vmatpush1.msra.mxu0 0.0
        %2680 = vmatprep.subr.mxu0 0.0
        %2681 = vmatpush1.msra.mxu0 0.0
        %2682 = vmatprep.subr.mxu0 0.0
        %2683 = vmatpush1.msra.mxu0 0.0
        %2684 = vmatprep.subr.mxu0 0.0
        %2685 = vmatpush1.msra.mxu0 0.0
        %2686 = vmatprep.subr.mxu0 0.0
        %2687 = vmatpush1.msra.mxu0 0.0
        %2688 = vmatprep.subr.mxu0 0.0
        %2689 = vmatpush1.msra.mxu0 0.0
        %2690 = vmatprep.subr.mxu0 0.0
        %2691 = vmatpush1.msra.mxu0 0.0
        %2692 = vmatprep.subr.mxu0 0.0
        %2693 = vmatpush1.msra.mxu0 0.0
        %2694 = vmatprep.subr.mxu0 0.0
        %2695 = vmatpush1.msra.mxu0 0.0
        %2696 = vmatprep.subr.mxu0 0.0
        %2697 = vmatpush1.msra.mxu0 0.0
        %2698 = vmatprep.subr.mxu0 0.0
        %2699 = vmatpush1.msra.mxu0 0.0
        %2700 = vmatprep.mubr.f32.mxu0 0.0
        %v2701 = vand.u32 %v2535, 4294901760
        %2702 = vmatmul.mubr.f32.gmra.mrb[0].mxu0 %v2701
        %v2703 = vpop.f32.mrb[0].mxu0
        %v2704 = vadd.f32 %v2613, %v2703
        %v2705 = vpop.f32.mrb[0].mxu0
        %2706 = vdwg.mxu0
        %2707 = vmatprep.subr.mxu0 0.0
        %v2708 = vand.u32 %v432, 4294901760
        %v2709 = vsub.f32 %v432, %v2708
        %2710 = vmatpush1.msra.mxu0 %v2709
        %2711 = vmatprep.subr.mxu0 0.0
        %v2712 = vand.u32 %v433, 4294901760
        %v2713 = vsub.f32 %v433, %v2712
        %2714 = vmatpush1.msra.mxu0 %v2713
        %2715 = vmatprep.subr.mxu0 0.0
        %v2716 = vand.u32 %v434, 4294901760
        %v2717 = vsub.f32 %v434, %v2716
        %2718 = vmatpush1.msra.mxu0 %v2717
        %2719 = vmatprep.subr.mxu0 0.0
        %v2720 = vand.u32 %v435, 4294901760
        %v2721 = vsub.f32 %v435, %v2720
        %2722 = vmatpush1.msra.mxu0 %v2721
        %2723 = vmatprep.subr.mxu0 0.0
        %2724 = vmatpush1.msra.mxu0 0.0
        %2725 = vmatprep.subr.mxu0 0.0
        %2726 = vmatpush1.msra.mxu0 0.0
        %2727 = vmatprep.subr.mxu0 0.0
        %2728 = vmatpush1.msra.mxu0 0.0
        %2729 = vmatprep.subr.mxu0 0.0
        %2730 = vmatpush1.msra.mxu0 0.0
        %2731 = vmatprep.subr.mxu0 0.0
        %2732 = vmatpush1.msra.mxu0 0.0
        %2733 = vmatprep.subr.mxu0 0.0
        %2734 = vmatpush1.msra.mxu0 0.0
        %2735 = vmatprep.subr.mxu0 0.0
        %2736 = vmatpush1.msra.mxu0 0.0
        %2737 = vmatprep.subr.mxu0 0.0
        %2738 = vmatpush1.msra.mxu0 0.0
        %2739 = vmatprep.subr.mxu0 0.0
        %2740 = vmatpush1.msra.mxu0 0.0
        %2741 = vmatprep.subr.mxu0 0.0
        %2742 = vmatpush1.msra.mxu0 0.0
        %2743 = vmatprep.subr.mxu0 0.0
        %2744 = vmatpush1.msra.mxu0 0.0
        %2745 = vmatprep.subr.mxu0 0.0
        %2746 = vmatpush1.msra.mxu0 0.0
        %2747 = vmatprep.subr.mxu0 0.0
        %2748 = vmatpush1.msra.mxu0 0.0
        %2749 = vmatprep.subr.mxu0 0.0
        %2750 = vmatpush1.msra.mxu0 0.0
        %2751 = vmatprep.subr.mxu0 0.0
        %2752 = vmatpush1.msra.mxu0 0.0
        %2753 = vmatprep.subr.mxu0 0.0
        %2754 = vmatpush1.msra.mxu0 0.0
        %2755 = vmatprep.subr.mxu0 0.0
        %2756 = vmatpush1.msra.mxu0 0.0
        %2757 = vmatprep.subr.mxu0 0.0
        %2758 = vmatpush1.msra.mxu0 0.0
        %2759 = vmatprep.subr.mxu0 0.0
        %2760 = vmatpush1.msra.mxu0 0.0
        %2761 = vmatprep.subr.mxu0 0.0
        %2762 = vmatpush1.msra.mxu0 0.0
        %2763 = vmatprep.subr.mxu0 0.0
        %2764 = vmatpush1.msra.mxu0 0.0
        %2765 = vmatprep.subr.mxu0 0.0
        %2766 = vmatpush1.msra.mxu0 0.0
        %2767 = vmatprep.subr.mxu0 0.0
        %2768 = vmatpush1.msra.mxu0 0.0
        %2769 = vmatprep.subr.mxu0 0.0
        %2770 = vmatpush1.msra.mxu0 0.0
        %2771 = vmatprep.subr.mxu0 0.0
        %2772 = vmatpush1.msra.mxu0 0.0
        %2773 = vmatprep.subr.mxu0 0.0
        %2774 = vmatpush1.msra.mxu0 0.0
        %2775 = vmatprep.subr.mxu0 0.0
        %2776 = vmatpush1.msra.mxu0 0.0
        %2777 = vmatprep.subr.mxu0 0.0
        %2778 = vmatpush1.msra.mxu0 0.0
        %2779 = vmatprep.mubr.f32.mxu0 0.0
        %v2780 = vand.u32 %v2535, 4294901760
        %v2781 = vsub.f32 %v2535, %v2780
        %2782 = vmatmul.mubr.f32.gmra.mrb[0].mxu0 %v2781
        %v2783 = vpop.f32.mrb[0].mxu0
        %v2784 = vadd.f32 %v2704, %v2783
        %v2785 = vpop.f32.mrb[0].mxu0
        %2786 = vdwg.mxu0
        %2787 = vmatprep.subr.mxu0 0.0
        %v2788 = vand.u32 %v432, 4294901760
        %2789 = vmatpush1.msra.mxu0 %v2788
        %2790 = vmatprep.subr.mxu0 0.0
        %v2791 = vand.u32 %v433, 4294901760
        %2792 = vmatpush1.msra.mxu0 %v2791
        %2793 = vmatprep.subr.mxu0 0.0
        %v2794 = vand.u32 %v434, 4294901760
        %2795 = vmatpush1.msra.mxu0 %v2794
        %2796 = vmatprep.subr.mxu0 0.0
        %v2797 = vand.u32 %v435, 4294901760
        %2798 = vmatpush1.msra.mxu0 %v2797
        %2799 = vmatprep.subr.mxu0 0.0
        %2800 = vmatpush1.msra.mxu0 0.0
        %2801 = vmatprep.subr.mxu0 0.0
        %2802 = vmatpush1.msra.mxu0 0.0
        %2803 = vmatprep.subr.mxu0 0.0
        %2804 = vmatpush1.msra.mxu0 0.0
        %2805 = vmatprep.subr.mxu0 0.0
        %2806 = vmatpush1.msra.mxu0 0.0
        %2807 = vmatprep.subr.mxu0 0.0
        %2808 = vmatpush1.msra.mxu0 0.0
        %2809 = vmatprep.subr.mxu0 0.0
        %2810 = vmatpush1.msra.mxu0 0.0
        %2811 = vmatprep.subr.mxu0 0.0
        %2812 = vmatpush1.msra.mxu0 0.0
        %2813 = vmatprep.subr.mxu0 0.0
        %2814 = vmatpush1.msra.mxu0 0.0
        %2815 = vmatprep.subr.mxu0 0.0
        %2816 = vmatpush1.msra.mxu0 0.0
        %2817 = vmatprep.subr.mxu0 0.0
        %2818 = vmatpush1.msra.mxu0 0.0
        %2819 = vmatprep.subr.mxu0 0.0
        %2820 = vmatpush1.msra.mxu0 0.0
        %2821 = vmatprep.subr.mxu0 0.0
        %2822 = vmatpush1.msra.mxu0 0.0
        %2823 = vmatprep.subr.mxu0 0.0
        %2824 = vmatpush1.msra.mxu0 0.0
        %2825 = vmatprep.subr.mxu0 0.0
        %2826 = vmatpush1.msra.mxu0 0.0
        %2827 = vmatprep.subr.mxu0 0.0
        %2828 = vmatpush1.msra.mxu0 0.0
        %2829 = vmatprep.subr.mxu0 0.0
        %2830 = vmatpush1.msra.mxu0 0.0
        %2831 = vmatprep.subr.mxu0 0.0
        %2832 = vmatpush1.msra.mxu0 0.0
        %2833 = vmatprep.subr.mxu0 0.0
        %2834 = vmatpush1.msra.mxu0 0.0
        %2835 = vmatprep.subr.mxu0 0.0
        %2836 = vmatpush1.msra.mxu0 0.0
        %2837 = vmatprep.subr.mxu0 0.0
        %2838 = vmatpush1.msra.mxu0 0.0
        %2839 = vmatprep.subr.mxu0 0.0
        %2840 = vmatpush1.msra.mxu0 0.0
        %2841 = vmatprep.subr.mxu0 0.0
        %2842 = vmatpush1.msra.mxu0 0.0
        %2843 = vmatprep.subr.mxu0 0.0
        %2844 = vmatpush1.msra.mxu0 0.0
        %2845 = vmatprep.subr.mxu0 0.0
        %2846 = vmatpush1.msra.mxu0 0.0
        %2847 = vmatprep.subr.mxu0 0.0
        %2848 = vmatpush1.msra.mxu0 0.0
        %2849 = vmatprep.subr.mxu0 0.0
        %2850 = vmatpush1.msra.mxu0 0.0
        %2851 = vmatprep.subr.mxu0 0.0
        %2852 = vmatpush1.msra.mxu0 0.0
        %2853 = vmatprep.subr.mxu0 0.0
        %2854 = vmatpush1.msra.mxu0 0.0
        %2855 = vmatprep.mubr.f32.mxu0 0.0
        %v2856 = vand.u32 %v2535, 4294901760
        %v2857 = vsub.f32 %v2535, %v2856
        %v2858 = vand.u32 %v2857, 4294901760
        %2859 = vmatmul.mubr.f32.gmra.mrb[0].mxu0 %v2858
        %v2860 = vpop.f32.mrb[0].mxu0
        %v2861 = vadd.f32 %v2784, %v2860
        %v2862 = vpop.f32.mrb[0].mxu0
        %2863 = vdwg.mxu0
        %2864 = vmatprep.subr.mxu0 0.0
        %v2865 = vand.u32 %v432, 4294901760
        %v2866 = vsub.f32 %v432, %v2865
        %v2867 = vand.u32 %v2866, 4294901760
        %2868 = vmatpush1.msra.mxu0 %v2867
        %2869 = vmatprep.subr.mxu0 0.0
        %v2870 = vand.u32 %v433, 4294901760
        %v2871 = vsub.f32 %v433, %v2870
        %v2872 = vand.u32 %v2871, 4294901760
        %2873 = vmatpush1.msra.mxu0 %v2872
        %2874 = vmatprep.subr.mxu0 0.0
        %v2875 = vand.u32 %v434, 4294901760
        %v2876 = vsub.f32 %v434, %v2875
        %v2877 = vand.u32 %v2876, 4294901760
        %2878 = vmatpush1.msra.mxu0 %v2877
        %2879 = vmatprep.subr.mxu0 0.0
        %v2880 = vand.u32 %v435, 4294901760
        %v2881 = vsub.f32 %v435, %v2880
        %v2882 = vand.u32 %v2881, 4294901760
        %2883 = vmatpush1.msra.mxu0 %v2882
        %2884 = vmatprep.subr.mxu0 0.0
        %2885 = vmatpush1.msra.mxu0 0.0
        %2886 = vmatprep.subr.mxu0 0.0
        %2887 = vmatpush1.msra.mxu0 0.0
        %2888 = vmatprep.subr.mxu0 0.0
        %2889 = vmatpush1.msra.mxu0 0.0
        %2890 = vmatprep.subr.mxu0 0.0
        %2891 = vmatpush1.msra.mxu0 0.0
        %2892 = vmatprep.subr.mxu0 0.0
        %2893 = vmatpush1.msra.mxu0 0.0
        %2894 = vmatprep.subr.mxu0 0.0
        %2895 = vmatpush1.msra.mxu0 0.0
        %2896 = vmatprep.subr.mxu0 0.0
        %2897 = vmatpush1.msra.mxu0 0.0
        %2898 = vmatprep.subr.mxu0 0.0
        %2899 = vmatpush1.msra.mxu0 0.0
        %2900 = vmatprep.subr.mxu0 0.0
        %2901 = vmatpush1.msra.mxu0 0.0
        %2902 = vmatprep.subr.mxu0 0.0
        %2903 = vmatpush1.msra.mxu0 0.0
        %2904 = vmatprep.subr.mxu0 0.0
        %2905 = vmatpush1.msra.mxu0 0.0
        %2906 = vmatprep.subr.mxu0 0.0
        %2907 = vmatpush1.msra.mxu0 0.0
        %2908 = vmatprep.subr.mxu0 0.0
        %2909 = vmatpush1.msra.mxu0 0.0
        %2910 = vmatprep.subr.mxu0 0.0
        %2911 = vmatpush1.msra.mxu0 0.0
        %2912 = vmatprep.subr.mxu0 0.0
        %2913 = vmatpush1.msra.mxu0 0.0
        %2914 = vmatprep.subr.mxu0 0.0
        %2915 = vmatpush1.msra.mxu0 0.0
        %2916 = vmatprep.subr.mxu0 0.0
        %2917 = vmatpush1.msra.mxu0 0.0
        %2918 = vmatprep.subr.mxu0 0.0
        %2919 = vmatpush1.msra.mxu0 0.0
        %2920 = vmatprep.subr.mxu0 0.0
        %2921 = vmatpush1.msra.mxu0 0.0
        %2922 = vmatprep.subr.mxu0 0.0
        %2923 = vmatpush1.msra.mxu0 0.0
        %2924 = vmatprep.subr.mxu0 0.0
        %2925 = vmatpush1.msra.mxu0 0.0
        %2926 = vmatprep.subr.mxu0 0.0
        %2927 = vmatpush1.msra.mxu0 0.0
        %2928 = vmatprep.subr.mxu0 0.0
        %2929 = vmatpush1.msra.mxu0 0.0
        %2930 = vmatprep.subr.mxu0 0.0
        %2931 = vmatpush1.msra.mxu0 0.0
        %2932 = vmatprep.subr.mxu0 0.0
        %2933 = vmatpush1.msra.mxu0 0.0
        %2934 = vmatprep.subr.mxu0 0.0
        %2935 = vmatpush1.msra.mxu0 0.0
        %2936 = vmatprep.subr.mxu0 0.0
        %2937 = vmatpush1.msra.mxu0 0.0
        %2938 = vmatprep.subr.mxu0 0.0
        %2939 = vmatpush1.msra.mxu0 0.0
        %2940 = vmatprep.mubr.f32.mxu0 0.0
        %v2941 = vand.u32 %v2535, 4294901760
        %2942 = vmatmul.mubr.f32.gmra.mrb[0].mxu0 %v2941
        %v2943 = vpop.f32.mrb[0].mxu0
        %v2944 = vadd.f32 %v2861, %v2943
        %v2945 = vpop.f32.mrb[0].mxu0
        %2946 = vdwg.mxu0
        %2947 = vmatprep.subr.mxu0 0.0
        %v2948 = vand.u32 %v432, 4294901760
        %2949 = vmatpush1.msra.mxu0 %v2948
        %2950 = vmatprep.subr.mxu0 0.0
        %v2951 = vand.u32 %v433, 4294901760
        %2952 = vmatpush1.msra.mxu0 %v2951
        %2953 = vmatprep.subr.mxu0 0.0
        %v2954 = vand.u32 %v434, 4294901760
        %2955 = vmatpush1.msra.mxu0 %v2954
        %2956 = vmatprep.subr.mxu0 0.0
        %v2957 = vand.u32 %v435, 4294901760
        %2958 = vmatpush1.msra.mxu0 %v2957
        %2959 = vmatprep.subr.mxu0 0.0
        %2960 = vmatpush1.msra.mxu0 0.0
        %2961 = vmatprep.subr.mxu0 0.0
        %2962 = vmatpush1.msra.mxu0 0.0
        %2963 = vmatprep.subr.mxu0 0.0
        %2964 = vmatpush1.msra.mxu0 0.0
        %2965 = vmatprep.subr.mxu0 0.0
        %2966 = vmatpush1.msra.mxu0 0.0
        %2967 = vmatprep.subr.mxu0 0.0
        %2968 = vmatpush1.msra.mxu0 0.0
        %2969 = vmatprep.subr.mxu0 0.0
        %2970 = vmatpush1.msra.mxu0 0.0
        %2971 = vmatprep.subr.mxu0 0.0
        %2972 = vmatpush1.msra.mxu0 0.0
        %2973 = vmatprep.subr.mxu0 0.0
        %2974 = vmatpush1.msra.mxu0 0.0
        %2975 = vmatprep.subr.mxu0 0.0
        %2976 = vmatpush1.msra.mxu0 0.0
        %2977 = vmatprep.subr.mxu0 0.0
        %2978 = vmatpush1.msra.mxu0 0.0
        %2979 = vmatprep.subr.mxu0 0.0
        %2980 = vmatpush1.msra.mxu0 0.0
        %2981 = vmatprep.subr.mxu0 0.0
        %2982 = vmatpush1.msra.mxu0 0.0
        %2983 = vmatprep.subr.mxu0 0.0
        %2984 = vmatpush1.msra.mxu0 0.0
        %2985 = vmatprep.subr.mxu0 0.0
        %2986 = vmatpush1.msra.mxu0 0.0
        %2987 = vmatprep.subr.mxu0 0.0
        %2988 = vmatpush1.msra.mxu0 0.0
        %2989 = vmatprep.subr.mxu0 0.0
        %2990 = vmatpush1.msra.mxu0 0.0
        %2991 = vmatprep.subr.mxu0 0.0
        %2992 = vmatpush1.msra.mxu0 0.0
        %2993 = vmatprep.subr.mxu0 0.0
        %2994 = vmatpush1.msra.mxu0 0.0
        %2995 = vmatprep.subr.mxu0 0.0
        %2996 = vmatpush1.msra.mxu0 0.0
        %2997 = vmatprep.subr.mxu0 0.0
        %2998 = vmatpush1.msra.mxu0 0.0
        %2999 = vmatprep.subr.mxu0 0.0
        %3000 = vmatpush1.msra.mxu0 0.0
        %3001 = vmatprep.subr.mxu0 0.0
        %3002 = vmatpush1.msra.mxu0 0.0
        %3003 = vmatprep.subr.mxu0 0.0
        %3004 = vmatpush1.msra.mxu0 0.0
        %3005 = vmatprep.subr.mxu0 0.0
        %3006 = vmatpush1.msra.mxu0 0.0
        %3007 = vmatprep.subr.mxu0 0.0
        %3008 = vmatpush1.msra.mxu0 0.0
        %3009 = vmatprep.subr.mxu0 0.0
        %3010 = vmatpush1.msra.mxu0 0.0
        %3011 = vmatprep.subr.mxu0 0.0
        %3012 = vmatpush1.msra.mxu0 0.0
        %3013 = vmatprep.subr.mxu0 0.0
        %3014 = vmatpush1.msra.mxu0 0.0
        %3015 = vmatprep.mubr.f32.mxu0 0.0
        %v3016 = vand.u32 %v2535, 4294901760
        %3017 = vmatmul.mubr.f32.gmra.mrb[0].mxu0 %v3016
        %v3018 = vpop.f32.mrb[0].mxu0
        %v3019 = vadd.f32 %v2944, %v3018
        %v3020 = vpop.f32.mrb[0].mxu0
        %3021 = vdwg.mxu0
        %v3022 = vadd.f32 %v2534, %v3019
        %v3023 = vxor.u32 %v3022, 2147483648
        %v3024 = vmul.f32 %v3023, 1.442695
        %v3025 = vpow.pop %v3024
        %v3026 = vadd.f32 %v3025, 1.0
        %v3027 = vrcp.pop %v3026
        %v3028 = vmul.f32 1.0, %v3027
        %v3029 = vtanh.pop %v3022
        %v3030 = vmul.f32 %v3028, %v2000
        %3032 = vrot.lane.b32.xlu0 %v3029, 64
        %v3033 = vpop.permute.xlu0 %3032
        %v3035 = vmul.f32 %v3028, %v3033
        %3037 = vrot.lane.b32.xlu0 %v3035, 32
        %v3038 = vpop.permute.xlu0 %3037
        %v3040 = vadd.f32 %v3030, %v3038
        %v3041 = vtanh.pop %v3040
        %3043 = vrot.lane.b32.xlu0 %v3041, 64
        %v3044 = vpop.permute.xlu0 %3043
        %v3046 = vmul.f32 %v3028, %v3044
        %s3047 = scalar_lea.vmem %s361, 8 [#allocation9]
        %v3048 = vld [vmem:[%s3047] sm:$0xff]
        %v3049 = vsel %vm445, %v2529, 0
        %3051 = vmatprep.subr.mxu0 0.0
        %v3052 = vand.u32 %v436, 4294901760
        %3053 = vmatpush1.msra.mxu0 %v3052
        %3054 = vmatprep.subr.mxu0 0.0
        %v3055 = vand.u32 %v437, 4294901760
        %3056 = vmatpush1.msra.mxu0 %v3055
        %3057 = vmatprep.subr.mxu0 0.0
        %v3058 = vand.u32 %v438, 4294901760
        %3059 = vmatpush1.msra.mxu0 %v3058
        %3060 = vmatprep.subr.mxu0 0.0
        %v3061 = vand.u32 %v439, 4294901760
        %3062 = vmatpush1.msra.mxu0 %v3061
        %3063 = vmatprep.subr.mxu0 0.0
        %3064 = vmatpush1.msra.mxu0 0.0
        %3065 = vmatprep.subr.mxu0 0.0
        %3066 = vmatpush1.msra.mxu0 0.0
        %3067 = vmatprep.subr.mxu0 0.0
        %3068 = vmatpush1.msra.mxu0 0.0
        %3069 = vmatprep.subr.mxu0 0.0
        %3070 = vmatpush1.msra.mxu0 0.0
        %3071 = vmatprep.subr.mxu0 0.0
        %3072 = vmatpush1.msra.mxu0 0.0
        %3073 = vmatprep.subr.mxu0 0.0
        %3074 = vmatpush1.msra.mxu0 0.0
        %3075 = vmatprep.subr.mxu0 0.0
        %3076 = vmatpush1.msra.mxu0 0.0
        %3077 = vmatprep.subr.mxu0 0.0
        %3078 = vmatpush1.msra.mxu0 0.0
        %3079 = vmatprep.subr.mxu0 0.0
        %3080 = vmatpush1.msra.mxu0 0.0
        %3081 = vmatprep.subr.mxu0 0.0
        %3082 = vmatpush1.msra.mxu0 0.0
        %3083 = vmatprep.subr.mxu0 0.0
        %3084 = vmatpush1.msra.mxu0 0.0
        %3085 = vmatprep.subr.mxu0 0.0
        %3086 = vmatpush1.msra.mxu0 0.0
        %3087 = vmatprep.subr.mxu0 0.0
        %3088 = vmatpush1.msra.mxu0 0.0
        %3089 = vmatprep.subr.mxu0 0.0
        %3090 = vmatpush1.msra.mxu0 0.0
        %3091 = vmatprep.subr.mxu0 0.0
        %3092 = vmatpush1.msra.mxu0 0.0
        %3093 = vmatprep.subr.mxu0 0.0
        %3094 = vmatpush1.msra.mxu0 0.0
        %3095 = vmatprep.subr.mxu0 0.0
        %3096 = vmatpush1.msra.mxu0 0.0
        %3097 = vmatprep.subr.mxu0 0.0
        %3098 = vmatpush1.msra.mxu0 0.0
        %3099 = vmatprep.subr.mxu0 0.0
        %3100 = vmatpush1.msra.mxu0 0.0
        %3101 = vmatprep.subr.mxu0 0.0
        %3102 = vmatpush1.msra.mxu0 0.0
        %3103 = vmatprep.subr.mxu0 0.0
        %3104 = vmatpush1.msra.mxu0 0.0
        %3105 = vmatprep.subr.mxu0 0.0
        %3106 = vmatpush1.msra.mxu0 0.0
        %3107 = vmatprep.subr.mxu0 0.0
        %3108 = vmatpush1.msra.mxu0 0.0
        %3109 = vmatprep.subr.mxu0 0.0
        %3110 = vmatpush1.msra.mxu0 0.0
        %3111 = vmatprep.subr.mxu0 0.0
        %3112 = vmatpush1.msra.mxu0 0.0
        %3113 = vmatprep.subr.mxu0 0.0
        %3114 = vmatpush1.msra.mxu0 0.0
        %3115 = vmatprep.subr.mxu0 0.0
        %3116 = vmatpush1.msra.mxu0 0.0
        %3117 = vmatprep.subr.mxu0 0.0
        %3118 = vmatpush1.msra.mxu0 0.0
        %3119 = vmatprep.mubr.f32.mxu0 0.0
        %v3120 = vand.u32 %v3049, 4294901760
        %v3121 = vsub.f32 %v3049, %v3120
        %v3122 = vand.u32 %v3121, 4294901760
        %v3123 = vsub.f32 %v3121, %v3122
        %v3124 = vand.u32 %v3123, 4294901760
        %3125 = vmatmul.mubr.f32.gmra.mrb[0].mxu0 %v3124
        %v3126 = vpop.f32.mrb[0].mxu0
        %v3127 = vadd.f32 0.0, %v3126
        %v3128 = vpop.f32.mrb[0].mxu0
        %3129 = vdwg.mxu0
        %3130 = vmatprep.subr.mxu0 0.0
        %v3131 = vand.u32 %v436, 4294901760
        %v3132 = vsub.f32 %v436, %v3131
        %v3133 = vand.u32 %v3132, 4294901760
        %v3134 = vsub.f32 %v3132, %v3133
        %v3135 = vand.u32 %v3134, 4294901760
        %3136 = vmatpush1.msra.mxu0 %v3135
        %3137 = vmatprep.subr.mxu0 0.0
        %v3138 = vand.u32 %v437, 4294901760
        %v3139 = vsub.f32 %v437, %v3138
        %v3140 = vand.u32 %v3139, 4294901760
        %v3141 = vsub.f32 %v3139, %v3140
        %v3142 = vand.u32 %v3141, 4294901760
        %3143 = vmatpush1.msra.mxu0 %v3142
        %3144 = vmatprep.subr.mxu0 0.0
        %v3145 = vand.u32 %v438, 4294901760
        %v3146 = vsub.f32 %v438, %v3145
        %v3147 = vand.u32 %v3146, 4294901760
        %v3148 = vsub.f32 %v3146, %v3147
        %v3149 = vand.u32 %v3148, 4294901760
        %3150 = vmatpush1.msra.mxu0 %v3149
        %3151 = vmatprep.subr.mxu0 0.0
        %v3152 = vand.u32 %v439, 4294901760
        %v3153 = vsub.f32 %v439, %v3152
        %v3154 = vand.u32 %v3153, 4294901760
        %v3155 = vsub.f32 %v3153, %v3154
        %v3156 = vand.u32 %v3155, 4294901760
        %3157 = vmatpush1.msra.mxu0 %v3156
        %3158 = vmatprep.subr.mxu0 0.0
        %3159 = vmatpush1.msra.mxu0 0.0
        %3160 = vmatprep.subr.mxu0 0.0
        %3161 = vmatpush1.msra.mxu0 0.0
        %3162 = vmatprep.subr.mxu0 0.0
        %3163 = vmatpush1.msra.mxu0 0.0
        %3164 = vmatprep.subr.mxu0 0.0
        %3165 = vmatpush1.msra.mxu0 0.0
        %3166 = vmatprep.subr.mxu0 0.0
        %3167 = vmatpush1.msra.mxu0 0.0
        %3168 = vmatprep.subr.mxu0 0.0
        %3169 = vmatpush1.msra.mxu0 0.0
        %3170 = vmatprep.subr.mxu0 0.0
        %3171 = vmatpush1.msra.mxu0 0.0
        %3172 = vmatprep.subr.mxu0 0.0
        %3173 = vmatpush1.msra.mxu0 0.0
        %3174 = vmatprep.subr.mxu0 0.0
        %3175 = vmatpush1.msra.mxu0 0.0
        %3176 = vmatprep.subr.mxu0 0.0
        %3177 = vmatpush1.msra.mxu0 0.0
        %3178 = vmatprep.subr.mxu0 0.0
        %3179 = vmatpush1.msra.mxu0 0.0
        %3180 = vmatprep.subr.mxu0 0.0
        %3181 = vmatpush1.msra.mxu0 0.0
        %3182 = vmatprep.subr.mxu0 0.0
        %3183 = vmatpush1.msra.mxu0 0.0
        %3184 = vmatprep.subr.mxu0 0.0
        %3185 = vmatpush1.msra.mxu0 0.0
        %3186 = vmatprep.subr.mxu0 0.0
        %3187 = vmatpush1.msra.mxu0 0.0
        %3188 = vmatprep.subr.mxu0 0.0
        %3189 = vmatpush1.msra.mxu0 0.0
        %3190 = vmatprep.subr.mxu0 0.0
        %3191 = vmatpush1.msra.mxu0 0.0
        %3192 = vmatprep.subr.mxu0 0.0
        %3193 = vmatpush1.msra.mxu0 0.0
        %3194 = vmatprep.subr.mxu0 0.0
        %3195 = vmatpush1.msra.mxu0 0.0
        %3196 = vmatprep.subr.mxu0 0.0
        %3197 = vmatpush1.msra.mxu0 0.0
        %3198 = vmatprep.subr.mxu0 0.0
        %3199 = vmatpush1.msra.mxu0 0.0
        %3200 = vmatprep.subr.mxu0 0.0
        %3201 = vmatpush1.msra.mxu0 0.0
        %3202 = vmatprep.subr.mxu0 0.0
        %3203 = vmatpush1.msra.mxu0 0.0
        %3204 = vmatprep.subr.mxu0 0.0
        %3205 = vmatpush1.msra.mxu0 0.0
        %3206 = vmatprep.subr.mxu0 0.0
        %3207 = vmatpush1.msra.mxu0 0.0
        %3208 = vmatprep.subr.mxu0 0.0
        %3209 = vmatpush1.msra.mxu0 0.0
        %3210 = vmatprep.subr.mxu0 0.0
        %3211 = vmatpush1.msra.mxu0 0.0
        %3212 = vmatprep.subr.mxu0 0.0
        %3213 = vmatpush1.msra.mxu0 0.0
        %3214 = vmatprep.mubr.f32.mxu0 0.0
        %v3215 = vand.u32 %v3049, 4294901760
        %3216 = vmatmul.mubr.f32.gmra.mrb[0].mxu0 %v3215
        %v3217 = vpop.f32.mrb[0].mxu0
        %v3218 = vadd.f32 %v3127, %v3217
        %v3219 = vpop.f32.mrb[0].mxu0
        %3220 = vdwg.mxu0
        %3221 = vmatprep.subr.mxu0 0.0
        %v3222 = vand.u32 %v436, 4294901760
        %v3223 = vsub.f32 %v436, %v3222
        %3224 = vmatpush1.msra.mxu0 %v3223
        %3225 = vmatprep.subr.mxu0 0.0
        %v3226 = vand.u32 %v437, 4294901760
        %v3227 = vsub.f32 %v437, %v3226
        %3228 = vmatpush1.msra.mxu0 %v3227
        %3229 = vmatprep.subr.mxu0 0.0
        %v3230 = vand.u32 %v438, 4294901760
        %v3231 = vsub.f32 %v438, %v3230
        %3232 = vmatpush1.msra.mxu0 %v3231
        %3233 = vmatprep.subr.mxu0 0.0
        %v3234 = vand.u32 %v439, 4294901760
        %v3235 = vsub.f32 %v439, %v3234
        %3236 = vmatpush1.msra.mxu0 %v3235
        %3237 = vmatprep.subr.mxu0 0.0
        %3238 = vmatpush1.msra.mxu0 0.0
        %3239 = vmatprep.subr.mxu0 0.0
        %3240 = vmatpush1.msra.mxu0 0.0
        %3241 = vmatprep.subr.mxu0 0.0
        %3242 = vmatpush1.msra.mxu0 0.0
        %3243 = vmatprep.subr.mxu0 0.0
        %3244 = vmatpush1.msra.mxu0 0.0
        %3245 = vmatprep.subr.mxu0 0.0
        %3246 = vmatpush1.msra.mxu0 0.0
        %3247 = vmatprep.subr.mxu0 0.0
        %3248 = vmatpush1.msra.mxu0 0.0
        %3249 = vmatprep.subr.mxu0 0.0
        %3250 = vmatpush1.msra.mxu0 0.0
        %3251 = vmatprep.subr.mxu0 0.0
        %3252 = vmatpush1.msra.mxu0 0.0
        %3253 = vmatprep.subr.mxu0 0.0
        %3254 = vmatpush1.msra.mxu0 0.0
        %3255 = vmatprep.subr.mxu0 0.0
        %3256 = vmatpush1.msra.mxu0 0.0
        %3257 = vmatprep.subr.mxu0 0.0
        %3258 = vmatpush1.msra.mxu0 0.0
        %3259 = vmatprep.subr.mxu0 0.0
        %3260 = vmatpush1.msra.mxu0 0.0
        %3261 = vmatprep.subr.mxu0 0.0
        %3262 = vmatpush1.msra.mxu0 0.0
        %3263 = vmatprep.subr.mxu0 0.0
        %3264 = vmatpush1.msra.mxu0 0.0
        %3265 = vmatprep.subr.mxu0 0.0
        %3266 = vmatpush1.msra.mxu0 0.0
        %3267 = vmatprep.subr.mxu0 0.0
        %3268 = vmatpush1.msra.mxu0 0.0
        %3269 = vmatprep.subr.mxu0 0.0
        %3270 = vmatpush1.msra.mxu0 0.0
        %3271 = vmatprep.subr.mxu0 0.0
        %3272 = vmatpush1.msra.mxu0 0.0
        %3273 = vmatprep.subr.mxu0 0.0
        %3274 = vmatpush1.msra.mxu0 0.0
        %3275 = vmatprep.subr.mxu0 0.0
        %3276 = vmatpush1.msra.mxu0 0.0
        %3277 = vmatprep.subr.mxu0 0.0
        %3278 = vmatpush1.msra.mxu0 0.0
        %3279 = vmatprep.subr.mxu0 0.0
        %3280 = vmatpush1.msra.mxu0 0.0
        %3281 = vmatprep.subr.mxu0 0.0
        %3282 = vmatpush1.msra.mxu0 0.0
        %3283 = vmatprep.subr.mxu0 0.0
        %3284 = vmatpush1.msra.mxu0 0.0
        %3285 = vmatprep.subr.mxu0 0.0
        %3286 = vmatpush1.msra.mxu0 0.0
        %3287 = vmatprep.subr.mxu0 0.0
        %3288 = vmatpush1.msra.mxu0 0.0
        %3289 = vmatprep.subr.mxu0 0.0
        %3290 = vmatpush1.msra.mxu0 0.0
        %3291 = vmatprep.subr.mxu0 0.0
        %3292 = vmatpush1.msra.mxu0 0.0
        %3293 = vmatprep.mubr.f32.mxu0 0.0
        %v3294 = vand.u32 %v3049, 4294901760
        %v3295 = vsub.f32 %v3049, %v3294
        %3296 = vmatmul.mubr.f32.gmra.mrb[0].mxu0 %v3295
        %v3297 = vpop.f32.mrb[0].mxu0
        %v3298 = vadd.f32 %v3218, %v3297
        %v3299 = vpop.f32.mrb[0].mxu0
        %3300 = vdwg.mxu0
        %3301 = vmatprep.subr.mxu0 0.0
        %v3302 = vand.u32 %v436, 4294901760
        %3303 = vmatpush1.msra.mxu0 %v3302
        %3304 = vmatprep.subr.mxu0 0.0
        %v3305 = vand.u32 %v437, 4294901760
        %3306 = vmatpush1.msra.mxu0 %v3305
        %3307 = vmatprep.subr.mxu0 0.0
        %v3308 = vand.u32 %v438, 4294901760
        %3309 = vmatpush1.msra.mxu0 %v3308
        %3310 = vmatprep.subr.mxu0 0.0
        %v3311 = vand.u32 %v439, 4294901760
        %3312 = vmatpush1.msra.mxu0 %v3311
        %3313 = vmatprep.subr.mxu0 0.0
        %3314 = vmatpush1.msra.mxu0 0.0
        %3315 = vmatprep.subr.mxu0 0.0
        %3316 = vmatpush1.msra.mxu0 0.0
        %3317 = vmatprep.subr.mxu0 0.0
        %3318 = vmatpush1.msra.mxu0 0.0
        %3319 = vmatprep.subr.mxu0 0.0
        %3320 = vmatpush1.msra.mxu0 0.0
        %3321 = vmatprep.subr.mxu0 0.0
        %3322 = vmatpush1.msra.mxu0 0.0
        %3323 = vmatprep.subr.mxu0 0.0
        %3324 = vmatpush1.msra.mxu0 0.0
        %3325 = vmatprep.subr.mxu0 0.0
        %3326 = vmatpush1.msra.mxu0 0.0
        %3327 = vmatprep.subr.mxu0 0.0
        %3328 = vmatpush1.msra.mxu0 0.0
        %3329 = vmatprep.subr.mxu0 0.0
        %3330 = vmatpush1.msra.mxu0 0.0
        %3331 = vmatprep.subr.mxu0 0.0
        %3332 = vmatpush1.msra.mxu0 0.0
        %3333 = vmatprep.subr.mxu0 0.0
        %3334 = vmatpush1.msra.mxu0 0.0
        %3335 = vmatprep.subr.mxu0 0.0
        %3336 = vmatpush1.msra.mxu0 0.0
        %3337 = vmatprep.subr.mxu0 0.0
        %3338 = vmatpush1.msra.mxu0 0.0
        %3339 = vmatprep.subr.mxu0 0.0
        %3340 = vmatpush1.msra.mxu0 0.0
        %3341 = vmatprep.subr.mxu0 0.0
        %3342 = vmatpush1.msra.mxu0 0.0
        %3343 = vmatprep.subr.mxu0 0.0
        %3344 = vmatpush1.msra.mxu0 0.0
        %3345 = vmatprep.subr.mxu0 0.0
        %3346 = vmatpush1.msra.mxu0 0.0
        %3347 = vmatprep.subr.mxu0 0.0
        %3348 = vmatpush1.msra.mxu0 0.0
        %3349 = vmatprep.subr.mxu0 0.0
        %3350 = vmatpush1.msra.mxu0 0.0
        %3351 = vmatprep.subr.mxu0 0.0
        %3352 = vmatpush1.msra.mxu0 0.0
        %3353 = vmatprep.subr.mxu0 0.0
        %3354 = vmatpush1.msra.mxu0 0.0
        %3355 = vmatprep.subr.mxu0 0.0
        %3356 = vmatpush1.msra.mxu0 0.0
        %3357 = vmatprep.subr.mxu0 0.0
        %3358 = vmatpush1.msra.mxu0 0.0
        %3359 = vmatprep.subr.mxu0 0.0
        %3360 = vmatpush1.msra.mxu0 0.0
        %3361 = vmatprep.subr.mxu0 0.0
        %3362 = vmatpush1.msra.mxu0 0.0
        %3363 = vmatprep.subr.mxu0 0.0
        %3364 = vmatpush1.msra.mxu0 0.0
        %3365 = vmatprep.subr.mxu0 0.0
        %3366 = vmatpush1.msra.mxu0 0.0
        %3367 = vmatprep.subr.mxu0 0.0
        %3368 = vmatpush1.msra.mxu0 0.0
        %3369 = vmatprep.mubr.f32.mxu0 0.0
        %v3370 = vand.u32 %v3049, 4294901760
        %v3371 = vsub.f32 %v3049, %v3370
        %v3372 = vand.u32 %v3371, 4294901760
        %3373 = vmatmul.mubr.f32.gmra.mrb[0].mxu0 %v3372
        %v3374 = vpop.f32.mrb[0].mxu0
        %v3375 = vadd.f32 %v3298, %v3374
        %v3376 = vpop.f32.mrb[0].mxu0
        %3377 = vdwg.mxu0
        %3378 = vmatprep.subr.mxu0 0.0
        %v3379 = vand.u32 %v436, 4294901760
        %v3380 = vsub.f32 %v436, %v3379
        %v3381 = vand.u32 %v3380, 4294901760
        %3382 = vmatpush1.msra.mxu0 %v3381
        %3383 = vmatprep.subr.mxu0 0.0
        %v3384 = vand.u32 %v437, 4294901760
        %v3385 = vsub.f32 %v437, %v3384
        %v3386 = vand.u32 %v3385, 4294901760
        %3387 = vmatpush1.msra.mxu0 %v3386
        %3388 = vmatprep.subr.mxu0 0.0
        %v3389 = vand.u32 %v438, 4294901760
        %v3390 = vsub.f32 %v438, %v3389
        %v3391 = vand.u32 %v3390, 4294901760
        %3392 = vmatpush1.msra.mxu0 %v3391
        %3393 = vmatprep.subr.mxu0 0.0
        %v3394 = vand.u32 %v439, 4294901760
        %v3395 = vsub.f32 %v439, %v3394
        %v3396 = vand.u32 %v3395, 4294901760
        %3397 = vmatpush1.msra.mxu0 %v3396
        %3398 = vmatprep.subr.mxu0 0.0
        %3399 = vmatpush1.msra.mxu0 0.0
        %3400 = vmatprep.subr.mxu0 0.0
        %3401 = vmatpush1.msra.mxu0 0.0
        %3402 = vmatprep.subr.mxu0 0.0
        %3403 = vmatpush1.msra.mxu0 0.0
        %3404 = vmatprep.subr.mxu0 0.0
        %3405 = vmatpush1.msra.mxu0 0.0
        %3406 = vmatprep.subr.mxu0 0.0
        %3407 = vmatpush1.msra.mxu0 0.0
        %3408 = vmatprep.subr.mxu0 0.0
        %3409 = vmatpush1.msra.mxu0 0.0
        %3410 = vmatprep.subr.mxu0 0.0
        %3411 = vmatpush1.msra.mxu0 0.0
        %3412 = vmatprep.subr.mxu0 0.0
        %3413 = vmatpush1.msra.mxu0 0.0
        %3414 = vmatprep.subr.mxu0 0.0
        %3415 = vmatpush1.msra.mxu0 0.0
        %3416 = vmatprep.subr.mxu0 0.0
        %3417 = vmatpush1.msra.mxu0 0.0
        %3418 = vmatprep.subr.mxu0 0.0
        %3419 = vmatpush1.msra.mxu0 0.0
        %3420 = vmatprep.subr.mxu0 0.0
        %3421 = vmatpush1.msra.mxu0 0.0
        %3422 = vmatprep.subr.mxu0 0.0
        %3423 = vmatpush1.msra.mxu0 0.0
        %3424 = vmatprep.subr.mxu0 0.0
        %3425 = vmatpush1.msra.mxu0 0.0
        %3426 = vmatprep.subr.mxu0 0.0
        %3427 = vmatpush1.msra.mxu0 0.0
        %3428 = vmatprep.subr.mxu0 0.0
        %3429 = vmatpush1.msra.mxu0 0.0
        %3430 = vmatprep.subr.mxu0 0.0
        %3431 = vmatpush1.msra.mxu0 0.0
        %3432 = vmatprep.subr.mxu0 0.0
        %3433 = vmatpush1.msra.mxu0 0.0
        %3434 = vmatprep.subr.mxu0 0.0
        %3435 = vmatpush1.msra.mxu0 0.0
        %3436 = vmatprep.subr.mxu0 0.0
        %3437 = vmatpush1.msra.mxu0 0.0
        %3438 = vmatprep.subr.mxu0 0.0
        %3439 = vmatpush1.msra.mxu0 0.0
        %3440 = vmatprep.subr.mxu0 0.0
        %3441 = vmatpush1.msra.mxu0 0.0
        %3442 = vmatprep.subr.mxu0 0.0
        %3443 = vmatpush1.msra.mxu0 0.0
        %3444 = vmatprep.subr.mxu0 0.0
        %3445 = vmatpush1.msra.mxu0 0.0
        %3446 = vmatprep.subr.mxu0 0.0
        %3447 = vmatpush1.msra.mxu0 0.0
        %3448 = vmatprep.subr.mxu0 0.0
        %3449 = vmatpush1.msra.mxu0 0.0
        %3450 = vmatprep.subr.mxu0 0.0
        %3451 = vmatpush1.msra.mxu0 0.0
        %3452 = vmatprep.subr.mxu0 0.0
        %3453 = vmatpush1.msra.mxu0 0.0
        %3454 = vmatprep.mubr.f32.mxu0 0.0
        %v3455 = vand.u32 %v3049, 4294901760
        %3456 = vmatmul.mubr.f32.gmra.mrb[0].mxu0 %v3455
        %v3457 = vpop.f32.mrb[0].mxu0
        %v3458 = vadd.f32 %v3375, %v3457
        %v3459 = vpop.f32.mrb[0].mxu0
        %3460 = vdwg.mxu0
        %3461 = vmatprep.subr.mxu0 0.0
        %v3462 = vand.u32 %v436, 4294901760
        %3463 = vmatpush1.msra.mxu0 %v3462
        %3464 = vmatprep.subr.mxu0 0.0
        %v3465 = vand.u32 %v437, 4294901760
        %3466 = vmatpush1.msra.mxu0 %v3465
        %3467 = vmatprep.subr.mxu0 0.0
        %v3468 = vand.u32 %v438, 4294901760
        %3469 = vmatpush1.msra.mxu0 %v3468
        %3470 = vmatprep.subr.mxu0 0.0
        %v3471 = vand.u32 %v439, 4294901760
        %3472 = vmatpush1.msra.mxu0 %v3471
        %3473 = vmatprep.subr.mxu0 0.0
        %3474 = vmatpush1.msra.mxu0 0.0
        %3475 = vmatprep.subr.mxu0 0.0
        %3476 = vmatpush1.msra.mxu0 0.0
        %3477 = vmatprep.subr.mxu0 0.0
        %3478 = vmatpush1.msra.mxu0 0.0
        %3479 = vmatprep.subr.mxu0 0.0
        %3480 = vmatpush1.msra.mxu0 0.0
        %3481 = vmatprep.subr.mxu0 0.0
        %3482 = vmatpush1.msra.mxu0 0.0
        %3483 = vmatprep.subr.mxu0 0.0
        %3484 = vmatpush1.msra.mxu0 0.0
        %3485 = vmatprep.subr.mxu0 0.0
        %3486 = vmatpush1.msra.mxu0 0.0
        %3487 = vmatprep.subr.mxu0 0.0
        %3488 = vmatpush1.msra.mxu0 0.0
        %3489 = vmatprep.subr.mxu0 0.0
        %3490 = vmatpush1.msra.mxu0 0.0
        %3491 = vmatprep.subr.mxu0 0.0
        %3492 = vmatpush1.msra.mxu0 0.0
        %3493 = vmatprep.subr.mxu0 0.0
        %3494 = vmatpush1.msra.mxu0 0.0
        %3495 = vmatprep.subr.mxu0 0.0
        %3496 = vmatpush1.msra.mxu0 0.0
        %3497 = vmatprep.subr.mxu0 0.0
        %3498 = vmatpush1.msra.mxu0 0.0
        %3499 = vmatprep.subr.mxu0 0.0
        %3500 = vmatpush1.msra.mxu0 0.0
        %3501 = vmatprep.subr.mxu0 0.0
        %3502 = vmatpush1.msra.mxu0 0.0
        %3503 = vmatprep.subr.mxu0 0.0
        %3504 = vmatpush1.msra.mxu0 0.0
        %3505 = vmatprep.subr.mxu0 0.0
        %3506 = vmatpush1.msra.mxu0 0.0
        %3507 = vmatprep.subr.mxu0 0.0
        %3508 = vmatpush1.msra.mxu0 0.0
        %3509 = vmatprep.subr.mxu0 0.0
        %3510 = vmatpush1.msra.mxu0 0.0
        %3511 = vmatprep.subr.mxu0 0.0
        %3512 = vmatpush1.msra.mxu0 0.0
        %3513 = vmatprep.subr.mxu0 0.0
        %3514 = vmatpush1.msra.mxu0 0.0
        %3515 = vmatprep.subr.mxu0 0.0
        %3516 = vmatpush1.msra.mxu0 0.0
        %3517 = vmatprep.subr.mxu0 0.0
        %3518 = vmatpush1.msra.mxu0 0.0
        %3519 = vmatprep.subr.mxu0 0.0
        %3520 = vmatpush1.msra.mxu0 0.0
        %3521 = vmatprep.subr.mxu0 0.0
        %3522 = vmatpush1.msra.mxu0 0.0
        %3523 = vmatprep.subr.mxu0 0.0
        %3524 = vmatpush1.msra.mxu0 0.0
        %3525 = vmatprep.subr.mxu0 0.0
        %3526 = vmatpush1.msra.mxu0 0.0
        %3527 = vmatprep.subr.mxu0 0.0
        %3528 = vmatpush1.msra.mxu0 0.0
        %3529 = vmatprep.mubr.f32.mxu0 0.0
        %v3530 = vand.u32 %v3049, 4294901760
        %3531 = vmatmul.mubr.f32.gmra.mrb[0].mxu0 %v3530
        %v3532 = vpop.f32.mrb[0].mxu0
        %v3533 = vadd.f32 %v3458, %v3532
        %v3534 = vpop.f32.mrb[0].mxu0
        %3535 = vdwg.mxu0
        %v3536 = vadd.f32 %v3048, %v3533
        %v3537 = vxor.u32 %v3536, 2147483648
        %v3538 = vmul.f32 %v3537, 1.442695
        %v3539 = vpow.pop %v3538
        %v3540 = vadd.f32 %v3539, 1.0
        %v3541 = vrcp.pop %v3540
        %v3542 = vmul.f32 1.0, %v3541
        %v3543 = vtanh.pop %v3536
        %v3544 = vmul.f32 %v3542, %v2514
        %3546 = vrot.lane.b32.xlu0 %v3543, 64
        %v3547 = vpop.permute.xlu0 %3546
        %v3549 = vmul.f32 %v3542, %v3547
        %3551 = vrot.lane.b32.xlu0 %v3549, 32
        %v3552 = vpop.permute.xlu0 %3551
        %v3554 = vadd.f32 %v3544, %v3552
        %v3555 = vtanh.pop %v3554
        %3557 = vrot.lane.b32.xlu0 %v3555, 64
        %v3558 = vpop.permute.xlu0 %3557
        %v3560 = vmul.f32 %v3542, %v3558
        %3562 = vrot.lane.b32.xlu0 %v3046, 32
        %v3563 = vpop.permute.xlu0 %3562
        %s3565 = scalar_lea.vmem %s404, 16 [#allocation15]
        %3566 = vst.msk [vmem:[%s3565] sm:$0xff] %vm445, %v3563
        %3568 = vrot.lane.b32.xlu0 %v3560, 32
        %v3569 = vpop.permute.xlu0 %3568
        %s3571 = scalar_lea.vmem %s411, 8 [#allocation16]
        %3572 = vst.msk [vmem:[%s3571] sm:$0xff] %vm445, %v3569
        %s3573 = scalar_lea.vmem %s352, 24 [#allocation6]
        %v3574 = vld [vmem:[%s3573] sm:$0xff]
        %v3575 = vsel %vm445, %v3563, 0
        %3577 = vmatprep.subr.mxu0 0.0
        %v3578 = vand.u32 %v432, 4294901760
        %3579 = vmatpush1.msra.mxu0 %v3578
        %3580 = vmatprep.subr.mxu0 0.0
        %v3581 = vand.u32 %v433, 4294901760
        %3582 = vmatpush1.msra.mxu0 %v3581
        %3583 = vmatprep.subr.mxu0 0.0
        %v3584 = vand.u32 %v434, 4294901760
        %3585 = vmatpush1.msra.mxu0 %v3584
        %3586 = vmatprep.subr.mxu0 0.0
        %v3587 = vand.u32 %v435, 4294901760
        %3588 = vmatpush1.msra.mxu0 %v3587
        %3589 = vmatprep.subr.mxu0 0.0
        %3590 = vmatpush1.msra.mxu0 0.0
        %3591 = vmatprep.subr.mxu0 0.0
        %3592 = vmatpush1.msra.mxu0 0.0
        %3593 = vmatprep.subr.mxu0 0.0
        %3594 = vmatpush1.msra.mxu0 0.0
        %3595 = vmatprep.subr.mxu0 0.0
        %3596 = vmatpush1.msra.mxu0 0.0
        %3597 = vmatprep.subr.mxu0 0.0
        %3598 = vmatpush1.msra.mxu0 0.0
        %3599 = vmatprep.subr.mxu0 0.0
        %3600 = vmatpush1.msra.mxu0 0.0
        %3601 = vmatprep.subr.mxu0 0.0
        %3602 = vmatpush1.msra.mxu0 0.0
        %3603 = vmatprep.subr.mxu0 0.0
        %3604 = vmatpush1.msra.mxu0 0.0
        %3605 = vmatprep.subr.mxu0 0.0
        %3606 = vmatpush1.msra.mxu0 0.0
        %3607 = vmatprep.subr.mxu0 0.0
        %3608 = vmatpush1.msra.mxu0 0.0
        %3609 = vmatprep.subr.mxu0 0.0
        %3610 = vmatpush1.msra.mxu0 0.0
        %3611 = vmatprep.subr.mxu0 0.0
        %3612 = vmatpush1.msra.mxu0 0.0
        %3613 = vmatprep.subr.mxu0 0.0
        %3614 = vmatpush1.msra.mxu0 0.0
        %3615 = vmatprep.subr.mxu0 0.0
        %3616 = vmatpush1.msra.mxu0 0.0
        %3617 = vmatprep.subr.mxu0 0.0
        %3618 = vmatpush1.msra.mxu0 0.0
        %3619 = vmatprep.subr.mxu0 0.0
        %3620 = vmatpush1.msra.mxu0 0.0
        %3621 = vmatprep.subr.mxu0 0.0
        %3622 = vmatpush1.msra.mxu0 0.0
        %3623 = vmatprep.subr.mxu0 0.0
        %3624 = vmatpush1.msra.mxu0 0.0
        %3625 = vmatprep.subr.mxu0 0.0
        %3626 = vmatpush1.msra.mxu0 0.0
        %3627 = vmatprep.subr.mxu0 0.0
        %3628 = vmatpush1.msra.mxu0 0.0
        %3629 = vmatprep.subr.mxu0 0.0
        %3630 = vmatpush1.msra.mxu0 0.0
        %3631 = vmatprep.subr.mxu0 0.0
        %3632 = vmatpush1.msra.mxu0 0.0
        %3633 = vmatprep.subr.mxu0 0.0
        %3634 = vmatpush1.msra.mxu0 0.0
        %3635 = vmatprep.subr.mxu0 0.0
        %3636 = vmatpush1.msra.mxu0 0.0
        %3637 = vmatprep.subr.mxu0 0.0
        %3638 = vmatpush1.msra.mxu0 0.0
        %3639 = vmatprep.subr.mxu0 0.0
        %3640 = vmatpush1.msra.mxu0 0.0
        %3641 = vmatprep.subr.mxu0 0.0
        %3642 = vmatpush1.msra.mxu0 0.0
        %3643 = vmatprep.subr.mxu0 0.0
        %3644 = vmatpush1.msra.mxu0 0.0
        %3645 = vmatprep.mubr.f32.mxu0 0.0
        %v3646 = vand.u32 %v3575, 4294901760
        %v3647 = vsub.f32 %v3575, %v3646
        %v3648 = vand.u32 %v3647, 4294901760
        %v3649 = vsub.f32 %v3647, %v3648
        %v3650 = vand.u32 %v3649, 4294901760
        %3651 = vmatmul.mubr.f32.gmra.mrb[0].mxu0 %v3650
        %v3652 = vpop.f32.mrb[0].mxu0
        %v3653 = vadd.f32 0.0, %v3652
        %v3654 = vpop.f32.mrb[0].mxu0
        %3655 = vdwg.mxu0
        %3656 = vmatprep.subr.mxu0 0.0
        %v3657 = vand.u32 %v432, 4294901760
        %v3658 = vsub.f32 %v432, %v3657
        %v3659 = vand.u32 %v3658, 4294901760
        %v3660 = vsub.f32 %v3658, %v3659
        %v3661 = vand.u32 %v3660, 4294901760
        %3662 = vmatpush1.msra.mxu0 %v3661
        %3663 = vmatprep.subr.mxu0 0.0
        %v3664 = vand.u32 %v433, 4294901760
        %v3665 = vsub.f32 %v433, %v3664
        %v3666 = vand.u32 %v3665, 4294901760
        %v3667 = vsub.f32 %v3665, %v3666
        %v3668 = vand.u32 %v3667, 4294901760
        %3669 = vmatpush1.msra.mxu0 %v3668
        %3670 = vmatprep.subr.mxu0 0.0
        %v3671 = vand.u32 %v434, 4294901760
        %v3672 = vsub.f32 %v434, %v3671
        %v3673 = vand.u32 %v3672, 4294901760
        %v3674 = vsub.f32 %v3672, %v3673
        %v3675 = vand.u32 %v3674, 4294901760
        %3676 = vmatpush1.msra.mxu0 %v3675
        %3677 = vmatprep.subr.mxu0 0.0
        %v3678 = vand.u32 %v435, 4294901760
        %v3679 = vsub.f32 %v435, %v3678
        %v3680 = vand.u32 %v3679, 4294901760
        %v3681 = vsub.f32 %v3679, %v3680
        %v3682 = vand.u32 %v3681, 4294901760
        %3683 = vmatpush1.msra.mxu0 %v3682
        %3684 = vmatprep.subr.mxu0 0.0
        %3685 = vmatpush1.msra.mxu0 0.0
        %3686 = vmatprep.subr.mxu0 0.0
        %3687 = vmatpush1.msra.mxu0 0.0
        %3688 = vmatprep.subr.mxu0 0.0
        %3689 = vmatpush1.msra.mxu0 0.0
        %3690 = vmatprep.subr.mxu0 0.0
        %3691 = vmatpush1.msra.mxu0 0.0
        %3692 = vmatprep.subr.mxu0 0.0
        %3693 = vmatpush1.msra.mxu0 0.0
        %3694 = vmatprep.subr.mxu0 0.0
        %3695 = vmatpush1.msra.mxu0 0.0
        %3696 = vmatprep.subr.mxu0 0.0
        %3697 = vmatpush1.msra.mxu0 0.0
        %3698 = vmatprep.subr.mxu0 0.0
        %3699 = vmatpush1.msra.mxu0 0.0
        %3700 = vmatprep.subr.mxu0 0.0
        %3701 = vmatpush1.msra.mxu0 0.0
        %3702 = vmatprep.subr.mxu0 0.0
        %3703 = vmatpush1.msra.mxu0 0.0
        %3704 = vmatprep.subr.mxu0 0.0
        %3705 = vmatpush1.msra.mxu0 0.0
        %3706 = vmatprep.subr.mxu0 0.0
        %3707 = vmatpush1.msra.mxu0 0.0
        %3708 = vmatprep.subr.mxu0 0.0
        %3709 = vmatpush1.msra.mxu0 0.0
        %3710 = vmatprep.subr.mxu0 0.0
        %3711 = vmatpush1.msra.mxu0 0.0
        %3712 = vmatprep.subr.mxu0 0.0
        %3713 = vmatpush1.msra.mxu0 0.0
        %3714 = vmatprep.subr.mxu0 0.0
        %3715 = vmatpush1.msra.mxu0 0.0
        %3716 = vmatprep.subr.mxu0 0.0
        %3717 = vmatpush1.msra.mxu0 0.0
        %3718 = vmatprep.subr.mxu0 0.0
        %3719 = vmatpush1.msra.mxu0 0.0
        %3720 = vmatprep.subr.mxu0 0.0
        %3721 = vmatpush1.msra.mxu0 0.0
        %3722 = vmatprep.subr.mxu0 0.0
        %3723 = vmatpush1.msra.mxu0 0.0
        %3724 = vmatprep.subr.mxu0 0.0
        %3725 = vmatpush1.msra.mxu0 0.0
        %3726 = vmatprep.subr.mxu0 0.0
        %3727 = vmatpush1.msra.mxu0 0.0
        %3728 = vmatprep.subr.mxu0 0.0
        %3729 = vmatpush1.msra.mxu0 0.0
        %3730 = vmatprep.subr.mxu0 0.0
        %3731 = vmatpush1.msra.mxu0 0.0
        %3732 = vmatprep.subr.mxu0 0.0
        %3733 = vmatpush1.msra.mxu0 0.0
        %3734 = vmatprep.subr.mxu0 0.0
        %3735 = vmatpush1.msra.mxu0 0.0
        %3736 = vmatprep.subr.mxu0 0.0
        %3737 = vmatpush1.msra.mxu0 0.0
        %3738 = vmatprep.subr.mxu0 0.0
        %3739 = vmatpush1.msra.mxu0 0.0
        %3740 = vmatprep.mubr.f32.mxu0 0.0
        %v3741 = vand.u32 %v3575, 4294901760
        %3742 = vmatmul.mubr.f32.gmra.mrb[0].mxu0 %v3741
        %v3743 = vpop.f32.mrb[0].mxu0
        %v3744 = vadd.f32 %v3653, %v3743
        %v3745 = vpop.f32.mrb[0].mxu0
        %3746 = vdwg.mxu0
        %3747 = vmatprep.subr.mxu0 0.0
        %v3748 = vand.u32 %v432, 4294901760
        %v3749 = vsub.f32 %v432, %v3748
        %3750 = vmatpush1.msra.mxu0 %v3749
        %3751 = vmatprep.subr.mxu0 0.0
        %v3752 = vand.u32 %v433, 4294901760
        %v3753 = vsub.f32 %v433, %v3752
        %3754 = vmatpush1.msra.mxu0 %v3753
        %3755 = vmatprep.subr.mxu0 0.0
        %v3756 = vand.u32 %v434, 4294901760
        %v3757 = vsub.f32 %v434, %v3756
        %3758 = vmatpush1.msra.mxu0 %v3757
        %3759 = vmatprep.subr.mxu0 0.0
        %v3760 = vand.u32 %v435, 4294901760
        %v3761 = vsub.f32 %v435, %v3760
        %3762 = vmatpush1.msra.mxu0 %v3761
        %3763 = vmatprep.subr.mxu0 0.0
        %3764 = vmatpush1.msra.mxu0 0.0
        %3765 = vmatprep.subr.mxu0 0.0
        %3766 = vmatpush1.msra.mxu0 0.0
        %3767 = vmatprep.subr.mxu0 0.0
        %3768 = vmatpush1.msra.mxu0 0.0
        %3769 = vmatprep.subr.mxu0 0.0
        %3770 = vmatpush1.msra.mxu0 0.0
        %3771 = vmatprep.subr.mxu0 0.0
        %3772 = vmatpush1.msra.mxu0 0.0
        %3773 = vmatprep.subr.mxu0 0.0
        %3774 = vmatpush1.msra.mxu0 0.0
        %3775 = vmatprep.subr.mxu0 0.0
        %3776 = vmatpush1.msra.mxu0 0.0
        %3777 = vmatprep.subr.mxu0 0.0
        %3778 = vmatpush1.msra.mxu0 0.0
        %3779 = vmatprep.subr.mxu0 0.0
        %3780 = vmatpush1.msra.mxu0 0.0
        %3781 = vmatprep.subr.mxu0 0.0
        %3782 = vmatpush1.msra.mxu0 0.0
        %3783 = vmatprep.subr.mxu0 0.0
        %3784 = vmatpush1.msra.mxu0 0.0
        %3785 = vmatprep.subr.mxu0 0.0
        %3786 = vmatpush1.msra.mxu0 0.0
        %3787 = vmatprep.subr.mxu0 0.0
        %3788 = vmatpush1.msra.mxu0 0.0
        %3789 = vmatprep.subr.mxu0 0.0
        %3790 = vmatpush1.msra.mxu0 0.0
        %3791 = vmatprep.subr.mxu0 0.0
        %3792 = vmatpush1.msra.mxu0 0.0
        %3793 = vmatprep.subr.mxu0 0.0
        %3794 = vmatpush1.msra.mxu0 0.0
        %3795 = vmatprep.subr.mxu0 0.0
        %3796 = vmatpush1.msra.mxu0 0.0
        %3797 = vmatprep.subr.mxu0 0.0
        %3798 = vmatpush1.msra.mxu0 0.0
        %3799 = vmatprep.subr.mxu0 0.0
        %3800 = vmatpush1.msra.mxu0 0.0
        %3801 = vmatprep.subr.mxu0 0.0
        %3802 = vmatpush1.msra.mxu0 0.0
        %3803 = vmatprep.subr.mxu0 0.0
        %3804 = vmatpush1.msra.mxu0 0.0
        %3805 = vmatprep.subr.mxu0 0.0
        %3806 = vmatpush1.msra.mxu0 0.0
        %3807 = vmatprep.subr.mxu0 0.0
        %3808 = vmatpush1.msra.mxu0 0.0
        %3809 = vmatprep.subr.mxu0 0.0
        %3810 = vmatpush1.msra.mxu0 0.0
        %3811 = vmatprep.subr.mxu0 0.0
        %3812 = vmatpush1.msra.mxu0 0.0
        %3813 = vmatprep.subr.mxu0 0.0
        %3814 = vmatpush1.msra.mxu0 0.0
        %3815 = vmatprep.subr.mxu0 0.0
        %3816 = vmatpush1.msra.mxu0 0.0
        %3817 = vmatprep.subr.mxu0 0.0
        %3818 = vmatpush1.msra.mxu0 0.0
        %3819 = vmatprep.mubr.f32.mxu0 0.0
        %v3820 = vand.u32 %v3575, 4294901760
        %v3821 = vsub.f32 %v3575, %v3820
        %3822 = vmatmul.mubr.f32.gmra.mrb[0].mxu0 %v3821
        %v3823 = vpop.f32.mrb[0].mxu0
        %v3824 = vadd.f32 %v3744, %v3823
        %v3825 = vpop.f32.mrb[0].mxu0
        %3826 = vdwg.mxu0
        %3827 = vmatprep.subr.mxu0 0.0
        %v3828 = vand.u32 %v432, 4294901760
        %3829 = vmatpush1.msra.mxu0 %v3828
        %3830 = vmatprep.subr.mxu0 0.0
        %v3831 = vand.u32 %v433, 4294901760
        %3832 = vmatpush1.msra.mxu0 %v3831
        %3833 = vmatprep.subr.mxu0 0.0
        %v3834 = vand.u32 %v434, 4294901760
        %3835 = vmatpush1.msra.mxu0 %v3834
        %3836 = vmatprep.subr.mxu0 0.0
        %v3837 = vand.u32 %v435, 4294901760
        %3838 = vmatpush1.msra.mxu0 %v3837
        %3839 = vmatprep.subr.mxu0 0.0
        %3840 = vmatpush1.msra.mxu0 0.0
        %3841 = vmatprep.subr.mxu0 0.0
        %3842 = vmatpush1.msra.mxu0 0.0
        %3843 = vmatprep.subr.mxu0 0.0
        %3844 = vmatpush1.msra.mxu0 0.0
        %3845 = vmatprep.subr.mxu0 0.0
        %3846 = vmatpush1.msra.mxu0 0.0
        %3847 = vmatprep.subr.mxu0 0.0
        %3848 = vmatpush1.msra.mxu0 0.0
        %3849 = vmatprep.subr.mxu0 0.0
        %3850 = vmatpush1.msra.mxu0 0.0
        %3851 = vmatprep.subr.mxu0 0.0
        %3852 = vmatpush1.msra.mxu0 0.0
        %3853 = vmatprep.subr.mxu0 0.0
        %3854 = vmatpush1.msra.mxu0 0.0
        %3855 = vmatprep.subr.mxu0 0.0
        %3856 = vmatpush1.msra.mxu0 0.0
        %3857 = vmatprep.subr.mxu0 0.0
        %3858 = vmatpush1.msra.mxu0 0.0
        %3859 = vmatprep.subr.mxu0 0.0
        %3860 = vmatpush1.msra.mxu0 0.0
        %3861 = vmatprep.subr.mxu0 0.0
        %3862 = vmatpush1.msra.mxu0 0.0
        %3863 = vmatprep.subr.mxu0 0.0
        %3864 = vmatpush1.msra.mxu0 0.0
        %3865 = vmatprep.subr.mxu0 0.0
        %3866 = vmatpush1.msra.mxu0 0.0
        %3867 = vmatprep.subr.mxu0 0.0
        %3868 = vmatpush1.msra.mxu0 0.0
        %3869 = vmatprep.subr.mxu0 0.0
        %3870 = vmatpush1.msra.mxu0 0.0
        %3871 = vmatprep.subr.mxu0 0.0
        %3872 = vmatpush1.msra.mxu0 0.0
        %3873 = vmatprep.subr.mxu0 0.0
        %3874 = vmatpush1.msra.mxu0 0.0
        %3875 = vmatprep.subr.mxu0 0.0
        %3876 = vmatpush1.msra.mxu0 0.0
        %3877 = vmatprep.subr.mxu0 0.0
        %3878 = vmatpush1.msra.mxu0 0.0
        %3879 = vmatprep.subr.mxu0 0.0
        %3880 = vmatpush1.msra.mxu0 0.0
        %3881 = vmatprep.subr.mxu0 0.0
        %3882 = vmatpush1.msra.mxu0 0.0
        %3883 = vmatprep.subr.mxu0 0.0
        %3884 = vmatpush1.msra.mxu0 0.0
        %3885 = vmatprep.subr.mxu0 0.0
        %3886 = vmatpush1.msra.mxu0 0.0
        %3887 = vmatprep.subr.mxu0 0.0
        %3888 = vmatpush1.msra.mxu0 0.0
        %3889 = vmatprep.subr.mxu0 0.0
        %3890 = vmatpush1.msra.mxu0 0.0
        %3891 = vmatprep.subr.mxu0 0.0
        %3892 = vmatpush1.msra.mxu0 0.0
        %3893 = vmatprep.subr.mxu0 0.0
        %3894 = vmatpush1.msra.mxu0 0.0
        %3895 = vmatprep.mubr.f32.mxu0 0.0
        %v3896 = vand.u32 %v3575, 4294901760
        %v3897 = vsub.f32 %v3575, %v3896
        %v3898 = vand.u32 %v3897, 4294901760
        %3899 = vmatmul.mubr.f32.gmra.mrb[0].mxu0 %v3898
        %v3900 = vpop.f32.mrb[0].mxu0
        %v3901 = vadd.f32 %v3824, %v3900
        %v3902 = vpop.f32.mrb[0].mxu0
        %3903 = vdwg.mxu0
        %3904 = vmatprep.subr.mxu0 0.0
        %v3905 = vand.u32 %v432, 4294901760
        %v3906 = vsub.f32 %v432, %v3905
        %v3907 = vand.u32 %v3906, 4294901760
        %3908 = vmatpush1.msra.mxu0 %v3907
        %3909 = vmatprep.subr.mxu0 0.0
        %v3910 = vand.u32 %v433, 4294901760
        %v3911 = vsub.f32 %v433, %v3910
        %v3912 = vand.u32 %v3911, 4294901760
        %3913 = vmatpush1.msra.mxu0 %v3912
        %3914 = vmatprep.subr.mxu0 0.0
        %v3915 = vand.u32 %v434, 4294901760
        %v3916 = vsub.f32 %v434, %v3915
        %v3917 = vand.u32 %v3916, 4294901760
        %3918 = vmatpush1.msra.mxu0 %v3917
        %3919 = vmatprep.subr.mxu0 0.0
        %v3920 = vand.u32 %v435, 4294901760
        %v3921 = vsub.f32 %v435, %v3920
        %v3922 = vand.u32 %v3921, 4294901760
        %3923 = vmatpush1.msra.mxu0 %v3922
        %3924 = vmatprep.subr.mxu0 0.0
        %3925 = vmatpush1.msra.mxu0 0.0
        %3926 = vmatprep.subr.mxu0 0.0
        %3927 = vmatpush1.msra.mxu0 0.0
        %3928 = vmatprep.subr.mxu0 0.0
        %3929 = vmatpush1.msra.mxu0 0.0
        %3930 = vmatprep.subr.mxu0 0.0
        %3931 = vmatpush1.msra.mxu0 0.0
        %3932 = vmatprep.subr.mxu0 0.0
        %3933 = vmatpush1.msra.mxu0 0.0
        %3934 = vmatprep.subr.mxu0 0.0
        %3935 = vmatpush1.msra.mxu0 0.0
        %3936 = vmatprep.subr.mxu0 0.0
        %3937 = vmatpush1.msra.mxu0 0.0
        %3938 = vmatprep.subr.mxu0 0.0
        %3939 = vmatpush1.msra.mxu0 0.0
        %3940 = vmatprep.subr.mxu0 0.0
        %3941 = vmatpush1.msra.mxu0 0.0
        %3942 = vmatprep.subr.mxu0 0.0
        %3943 = vmatpush1.msra.mxu0 0.0
        %3944 = vmatprep.subr.mxu0 0.0
        %3945 = vmatpush1.msra.mxu0 0.0
        %3946 = vmatprep.subr.mxu0 0.0
        %3947 = vmatpush1.msra.mxu0 0.0
        %3948 = vmatprep.subr.mxu0 0.0
        %3949 = vmatpush1.msra.mxu0 0.0
        %3950 = vmatprep.subr.mxu0 0.0
        %3951 = vmatpush1.msra.mxu0 0.0
        %3952 = vmatprep.subr.mxu0 0.0
        %3953 = vmatpush1.msra.mxu0 0.0
        %3954 = vmatprep.subr.mxu0 0.0
        %3955 = vmatpush1.msra.mxu0 0.0
        %3956 = vmatprep.subr.mxu0 0.0
        %3957 = vmatpush1.msra.mxu0 0.0
        %3958 = vmatprep.subr.mxu0 0.0
        %3959 = vmatpush1.msra.mxu0 0.0
        %3960 = vmatprep.subr.mxu0 0.0
        %3961 = vmatpush1.msra.mxu0 0.0
        %3962 = vmatprep.subr.mxu0 0.0
        %3963 = vmatpush1.msra.mxu0 0.0
        %3964 = vmatprep.subr.mxu0 0.0
        %3965 = vmatpush1.msra.mxu0 0.0
        %3966 = vmatprep.subr.mxu0 0.0
        %3967 = vmatpush1.msra.mxu0 0.0
        %3968 = vmatprep.subr.mxu0 0.0
        %3969 = vmatpush1.msra.mxu0 0.0
        %3970 = vmatprep.subr.mxu0 0.0
        %3971 = vmatpush1.msra.mxu0 0.0
        %3972 = vmatprep.subr.mxu0 0.0
        %3973 = vmatpush1.msra.mxu0 0.0
        %3974 = vmatprep.subr.mxu0 0.0
        %3975 = vmatpush1.msra.mxu0 0.0
        %3976 = vmatprep.subr.mxu0 0.0
        %3977 = vmatpush1.msra.mxu0 0.0
        %3978 = vmatprep.subr.mxu0 0.0
        %3979 = vmatpush1.msra.mxu0 0.0
        %3980 = vmatprep.mubr.f32.mxu0 0.0
        %v3981 = vand.u32 %v3575, 4294901760
        %3982 = vmatmul.mubr.f32.gmra.mrb[0].mxu0 %v3981
        %v3983 = vpop.f32.mrb[0].mxu0
        %v3984 = vadd.f32 %v3901, %v3983
        %v3985 = vpop.f32.mrb[0].mxu0
        %3986 = vdwg.mxu0
        %3987 = vmatprep.subr.mxu0 0.0
        %v3988 = vand.u32 %v432, 4294901760
        %3989 = vmatpush1.msra.mxu0 %v3988
        %3990 = vmatprep.subr.mxu0 0.0
        %v3991 = vand.u32 %v433, 4294901760
        %3992 = vmatpush1.msra.mxu0 %v3991
        %3993 = vmatprep.subr.mxu0 0.0
        %v3994 = vand.u32 %v434, 4294901760
        %3995 = vmatpush1.msra.mxu0 %v3994
        %3996 = vmatprep.subr.mxu0 0.0
        %v3997 = vand.u32 %v435, 4294901760
        %3998 = vmatpush1.msra.mxu0 %v3997
        %3999 = vmatprep.subr.mxu0 0.0
        %4000 = vmatpush1.msra.mxu0 0.0
        %4001 = vmatprep.subr.mxu0 0.0
        %4002 = vmatpush1.msra.mxu0 0.0
        %4003 = vmatprep.subr.mxu0 0.0
        %4004 = vmatpush1.msra.mxu0 0.0
        %4005 = vmatprep.subr.mxu0 0.0
        %4006 = vmatpush1.msra.mxu0 0.0
        %4007 = vmatprep.subr.mxu0 0.0
        %4008 = vmatpush1.msra.mxu0 0.0
        %4009 = vmatprep.subr.mxu0 0.0
        %4010 = vmatpush1.msra.mxu0 0.0
        %4011 = vmatprep.subr.mxu0 0.0
        %4012 = vmatpush1.msra.mxu0 0.0
        %4013 = vmatprep.subr.mxu0 0.0
        %4014 = vmatpush1.msra.mxu0 0.0
        %4015 = vmatprep.subr.mxu0 0.0
        %4016 = vmatpush1.msra.mxu0 0.0
        %4017 = vmatprep.subr.mxu0 0.0
        %4018 = vmatpush1.msra.mxu0 0.0
        %4019 = vmatprep.subr.mxu0 0.0
        %4020 = vmatpush1.msra.mxu0 0.0
        %4021 = vmatprep.subr.mxu0 0.0
        %4022 = vmatpush1.msra.mxu0 0.0
        %4023 = vmatprep.subr.mxu0 0.0
        %4024 = vmatpush1.msra.mxu0 0.0
        %4025 = vmatprep.subr.mxu0 0.0
        %4026 = vmatpush1.msra.mxu0 0.0
        %4027 = vmatprep.subr.mxu0 0.0
        %4028 = vmatpush1.msra.mxu0 0.0
        %4029 = vmatprep.subr.mxu0 0.0
        %4030 = vmatpush1.msra.mxu0 0.0
        %4031 = vmatprep.subr.mxu0 0.0
        %4032 = vmatpush1.msra.mxu0 0.0
        %4033 = vmatprep.subr.mxu0 0.0
        %4034 = vmatpush1.msra.mxu0 0.0
        %4035 = vmatprep.subr.mxu0 0.0
        %4036 = vmatpush1.msra.mxu0 0.0
        %4037 = vmatprep.subr.mxu0 0.0
        %4038 = vmatpush1.msra.mxu0 0.0
        %4039 = vmatprep.subr.mxu0 0.0
        %4040 = vmatpush1.msra.mxu0 0.0
        %4041 = vmatprep.subr.mxu0 0.0
        %4042 = vmatpush1.msra.mxu0 0.0
        %4043 = vmatprep.subr.mxu0 0.0
        %4044 = vmatpush1.msra.mxu0 0.0
        %4045 = vmatprep.subr.mxu0 0.0
        %4046 = vmatpush1.msra.mxu0 0.0
        %4047 = vmatprep.subr.mxu0 0.0
        %4048 = vmatpush1.msra.mxu0 0.0
        %4049 = vmatprep.subr.mxu0 0.0
        %4050 = vmatpush1.msra.mxu0 0.0
        %4051 = vmatprep.subr.mxu0 0.0
        %4052 = vmatpush1.msra.mxu0 0.0
        %4053 = vmatprep.subr.mxu0 0.0
        %4054 = vmatpush1.msra.mxu0 0.0
        %4055 = vmatprep.mubr.f32.mxu0 0.0
        %v4056 = vand.u32 %v3575, 4294901760
        %4057 = vmatmul.mubr.f32.gmra.mrb[0].mxu0 %v4056
        %v4058 = vpop.f32.mrb[0].mxu0
        %v4059 = vadd.f32 %v3984, %v4058
        %v4060 = vpop.f32.mrb[0].mxu0
        %4061 = vdwg.mxu0
        %v4062 = vadd.f32 %v3574, %v4059
        %v4063 = vxor.u32 %v4062, 2147483648
        %v4064 = vmul.f32 %v4063, 1.442695
        %v4065 = vpow.pop %v4064
        %v4066 = vadd.f32 %v4065, 1.0
        %v4067 = vrcp.pop %v4066
        %v4068 = vmul.f32 1.0, %v4067
        %v4069 = vtanh.pop %v4062
        %v4070 = vmul.f32 %v4068, %v3040
        %4072 = vrot.lane.b32.xlu0 %v4069, 64
        %v4073 = vpop.permute.xlu0 %4072
        %v4075 = vmul.f32 %v4068, %v4073
        %4077 = vrot.lane.b32.xlu0 %v4075, 32
        %v4078 = vpop.permute.xlu0 %4077
        %v4080 = vadd.f32 %v4070, %v4078
        %v4081 = vtanh.pop %v4080
        %4083 = vrot.lane.b32.xlu0 %v4081, 64
        %v4084 = vpop.permute.xlu0 %4083
        %v4086 = vmul.f32 %v4068, %v4084
        %v4087 = vld [vmem:[%s361] sm:$0xff]
        %v4088 = vsel %vm445, %v3569, 0
        %4090 = vmatprep.subr.mxu0 0.0
        %v4091 = vand.u32 %v436, 4294901760
        %4092 = vmatpush1.msra.mxu0 %v4091
        %4093 = vmatprep.subr.mxu0 0.0
        %v4094 = vand.u32 %v437, 4294901760
        %4095 = vmatpush1.msra.mxu0 %v4094
        %4096 = vmatprep.subr.mxu0 0.0
        %v4097 = vand.u32 %v438, 4294901760
        %4098 = vmatpush1.msra.mxu0 %v4097
        %4099 = vmatprep.subr.mxu0 0.0
        %v4100 = vand.u32 %v439, 4294901760
        %4101 = vmatpush1.msra.mxu0 %v4100
        %4102 = vmatprep.subr.mxu0 0.0
        %4103 = vmatpush1.msra.mxu0 0.0
        %4104 = vmatprep.subr.mxu0 0.0
        %4105 = vmatpush1.msra.mxu0 0.0
        %4106 = vmatprep.subr.mxu0 0.0
        %4107 = vmatpush1.msra.mxu0 0.0
        %4108 = vmatprep.subr.mxu0 0.0
        %4109 = vmatpush1.msra.mxu0 0.0
        %4110 = vmatprep.subr.mxu0 0.0
        %4111 = vmatpush1.msra.mxu0 0.0
        %4112 = vmatprep.subr.mxu0 0.0
        %4113 = vmatpush1.msra.mxu0 0.0
        %4114 = vmatprep.subr.mxu0 0.0
        %4115 = vmatpush1.msra.mxu0 0.0
        %4116 = vmatprep.subr.mxu0 0.0
        %4117 = vmatpush1.msra.mxu0 0.0
        %4118 = vmatprep.subr.mxu0 0.0
        %4119 = vmatpush1.msra.mxu0 0.0
        %4120 = vmatprep.subr.mxu0 0.0
        %4121 = vmatpush1.msra.mxu0 0.0
        %4122 = vmatprep.subr.mxu0 0.0
        %4123 = vmatpush1.msra.mxu0 0.0
        %4124 = vmatprep.subr.mxu0 0.0
        %4125 = vmatpush1.msra.mxu0 0.0
        %4126 = vmatprep.subr.mxu0 0.0
        %4127 = vmatpush1.msra.mxu0 0.0
        %4128 = vmatprep.subr.mxu0 0.0
        %4129 = vmatpush1.msra.mxu0 0.0
        %4130 = vmatprep.subr.mxu0 0.0
        %4131 = vmatpush1.msra.mxu0 0.0
        %4132 = vmatprep.subr.mxu0 0.0
        %4133 = vmatpush1.msra.mxu0 0.0
        %4134 = vmatprep.subr.mxu0 0.0
        %4135 = vmatpush1.msra.mxu0 0.0
        %4136 = vmatprep.subr.mxu0 0.0
        %4137 = vmatpush1.msra.mxu0 0.0
        %4138 = vmatprep.subr.mxu0 0.0
        %4139 = vmatpush1.msra.mxu0 0.0
        %4140 = vmatprep.subr.mxu0 0.0
        %4141 = vmatpush1.msra.mxu0 0.0
        %4142 = vmatprep.subr.mxu0 0.0
        %4143 = vmatpush1.msra.mxu0 0.0
        %4144 = vmatprep.subr.mxu0 0.0
        %4145 = vmatpush1.msra.mxu0 0.0
        %4146 = vmatprep.subr.mxu0 0.0
        %4147 = vmatpush1.msra.mxu0 0.0
        %4148 = vmatprep.subr.mxu0 0.0
        %4149 = vmatpush1.msra.mxu0 0.0
        %4150 = vmatprep.subr.mxu0 0.0
        %4151 = vmatpush1.msra.mxu0 0.0
        %4152 = vmatprep.subr.mxu0 0.0
        %4153 = vmatpush1.msra.mxu0 0.0
        %4154 = vmatprep.subr.mxu0 0.0
        %4155 = vmatpush1.msra.mxu0 0.0
        %4156 = vmatprep.subr.mxu0 0.0
        %4157 = vmatpush1.msra.mxu0 0.0
        %4158 = vmatprep.mubr.f32.mxu0 0.0
        %v4159 = vand.u32 %v4088, 4294901760
        %v4160 = vsub.f32 %v4088, %v4159
        %v4161 = vand.u32 %v4160, 4294901760
        %v4162 = vsub.f32 %v4160, %v4161
        %v4163 = vand.u32 %v4162, 4294901760
        %4164 = vmatmul.mubr.f32.gmra.mrb[0].mxu0 %v4163
        %v4165 = vpop.f32.mrb[0].mxu0
        %v4166 = vadd.f32 0.0, %v4165
        %v4167 = vpop.f32.mrb[0].mxu0
        %4168 = vdwg.mxu0
        %4169 = vmatprep.subr.mxu0 0.0
        %v4170 = vand.u32 %v436, 4294901760
        %v4171 = vsub.f32 %v436, %v4170
        %v4172 = vand.u32 %v4171, 4294901760
        %v4173 = vsub.f32 %v4171, %v4172
        %v4174 = vand.u32 %v4173, 4294901760
        %4175 = vmatpush1.msra.mxu0 %v4174
        %4176 = vmatprep.subr.mxu0 0.0
        %v4177 = vand.u32 %v437, 4294901760
        %v4178 = vsub.f32 %v437, %v4177
        %v4179 = vand.u32 %v4178, 4294901760
        %v4180 = vsub.f32 %v4178, %v4179
        %v4181 = vand.u32 %v4180, 4294901760
        %4182 = vmatpush1.msra.mxu0 %v4181
        %4183 = vmatprep.subr.mxu0 0.0
        %v4184 = vand.u32 %v438, 4294901760
        %v4185 = vsub.f32 %v438, %v4184
        %v4186 = vand.u32 %v4185, 4294901760
        %v4187 = vsub.f32 %v4185, %v4186
        %v4188 = vand.u32 %v4187, 4294901760
        %4189 = vmatpush1.msra.mxu0 %v4188
        %4190 = vmatprep.subr.mxu0 0.0
        %v4191 = vand.u32 %v439, 4294901760
        %v4192 = vsub.f32 %v439, %v4191
        %v4193 = vand.u32 %v4192, 4294901760
        %v4194 = vsub.f32 %v4192, %v4193
        %v4195 = vand.u32 %v4194, 4294901760
        %4196 = vmatpush1.msra.mxu0 %v4195
        %4197 = vmatprep.subr.mxu0 0.0
        %4198 = vmatpush1.msra.mxu0 0.0
        %4199 = vmatprep.subr.mxu0 0.0
        %4200 = vmatpush1.msra.mxu0 0.0
        %4201 = vmatprep.subr.mxu0 0.0
        %4202 = vmatpush1.msra.mxu0 0.0
        %4203 = vmatprep.subr.mxu0 0.0
        %4204 = vmatpush1.msra.mxu0 0.0
        %4205 = vmatprep.subr.mxu0 0.0
        %4206 = vmatpush1.msra.mxu0 0.0
        %4207 = vmatprep.subr.mxu0 0.0
        %4208 = vmatpush1.msra.mxu0 0.0
        %4209 = vmatprep.subr.mxu0 0.0
        %4210 = vmatpush1.msra.mxu0 0.0
        %4211 = vmatprep.subr.mxu0 0.0
        %4212 = vmatpush1.msra.mxu0 0.0
        %4213 = vmatprep.subr.mxu0 0.0
        %4214 = vmatpush1.msra.mxu0 0.0
        %4215 = vmatprep.subr.mxu0 0.0
        %4216 = vmatpush1.msra.mxu0 0.0
        %4217 = vmatprep.subr.mxu0 0.0
        %4218 = vmatpush1.msra.mxu0 0.0
        %4219 = vmatprep.subr.mxu0 0.0
        %4220 = vmatpush1.msra.mxu0 0.0
        %4221 = vmatprep.subr.mxu0 0.0
        %4222 = vmatpush1.msra.mxu0 0.0
        %4223 = vmatprep.subr.mxu0 0.0
        %4224 = vmatpush1.msra.mxu0 0.0
        %4225 = vmatprep.subr.mxu0 0.0
        %4226 = vmatpush1.msra.mxu0 0.0
        %4227 = vmatprep.subr.mxu0 0.0
        %4228 = vmatpush1.msra.mxu0 0.0
        %4229 = vmatprep.subr.mxu0 0.0
        %4230 = vmatpush1.msra.mxu0 0.0
        %4231 = vmatprep.subr.mxu0 0.0
        %4232 = vmatpush1.msra.mxu0 0.0
        %4233 = vmatprep.subr.mxu0 0.0
        %4234 = vmatpush1.msra.mxu0 0.0
        %4235 = vmatprep.subr.mxu0 0.0
        %4236 = vmatpush1.msra.mxu0 0.0
        %4237 = vmatprep.subr.mxu0 0.0
        %4238 = vmatpush1.msra.mxu0 0.0
        %4239 = vmatprep.subr.mxu0 0.0
        %4240 = vmatpush1.msra.mxu0 0.0
        %4241 = vmatprep.subr.mxu0 0.0
        %4242 = vmatpush1.msra.mxu0 0.0
        %4243 = vmatprep.subr.mxu0 0.0
        %4244 = vmatpush1.msra.mxu0 0.0
        %4245 = vmatprep.subr.mxu0 0.0
        %4246 = vmatpush1.msra.mxu0 0.0
        %4247 = vmatprep.subr.mxu0 0.0
        %4248 = vmatpush1.msra.mxu0 0.0
        %4249 = vmatprep.subr.mxu0 0.0
        %4250 = vmatpush1.msra.mxu0 0.0
        %4251 = vmatprep.subr.mxu0 0.0
        %4252 = vmatpush1.msra.mxu0 0.0
        %4253 = vmatprep.mubr.f32.mxu0 0.0
        %v4254 = vand.u32 %v4088, 4294901760
        %4255 = vmatmul.mubr.f32.gmra.mrb[0].mxu0 %v4254
        %v4256 = vpop.f32.mrb[0].mxu0
        %v4257 = vadd.f32 %v4166, %v4256
        %v4258 = vpop.f32.mrb[0].mxu0
        %4259 = vdwg.mxu0
        %4260 = vmatprep.subr.mxu0 0.0
        %v4261 = vand.u32 %v436, 4294901760
        %v4262 = vsub.f32 %v436, %v4261
        %4263 = vmatpush1.msra.mxu0 %v4262
        %4264 = vmatprep.subr.mxu0 0.0
        %v4265 = vand.u32 %v437, 4294901760
        %v4266 = vsub.f32 %v437, %v4265
        %4267 = vmatpush1.msra.mxu0 %v4266
        %4268 = vmatprep.subr.mxu0 0.0
        %v4269 = vand.u32 %v438, 4294901760
        %v4270 = vsub.f32 %v438, %v4269
        %4271 = vmatpush1.msra.mxu0 %v4270
        %4272 = vmatprep.subr.mxu0 0.0
        %v4273 = vand.u32 %v439, 4294901760
        %v4274 = vsub.f32 %v439, %v4273
        %4275 = vmatpush1.msra.mxu0 %v4274
        %4276 = vmatprep.subr.mxu0 0.0
        %4277 = vmatpush1.msra.mxu0 0.0
        %4278 = vmatprep.subr.mxu0 0.0
        %4279 = vmatpush1.msra.mxu0 0.0
        %4280 = vmatprep.subr.mxu0 0.0
        %4281 = vmatpush1.msra.mxu0 0.0
        %4282 = vmatprep.subr.mxu0 0.0
        %4283 = vmatpush1.msra.mxu0 0.0
        %4284 = vmatprep.subr.mxu0 0.0
        %4285 = vmatpush1.msra.mxu0 0.0
        %4286 = vmatprep.subr.mxu0 0.0
        %4287 = vmatpush1.msra.mxu0 0.0
        %4288 = vmatprep.subr.mxu0 0.0
        %4289 = vmatpush1.msra.mxu0 0.0
        %4290 = vmatprep.subr.mxu0 0.0
        %4291 = vmatpush1.msra.mxu0 0.0
        %4292 = vmatprep.subr.mxu0 0.0
        %4293 = vmatpush1.msra.mxu0 0.0
        %4294 = vmatprep.subr.mxu0 0.0
        %4295 = vmatpush1.msra.mxu0 0.0
        %4296 = vmatprep.subr.mxu0 0.0
        %4297 = vmatpush1.msra.mxu0 0.0
        %4298 = vmatprep.subr.mxu0 0.0
        %4299 = vmatpush1.msra.mxu0 0.0
        %4300 = vmatprep.subr.mxu0 0.0
        %4301 = vmatpush1.msra.mxu0 0.0
        %4302 = vmatprep.subr.mxu0 0.0
        %4303 = vmatpush1.msra.mxu0 0.0
        %4304 = vmatprep.subr.mxu0 0.0
        %4305 = vmatpush1.msra.mxu0 0.0
        %4306 = vmatprep.subr.mxu0 0.0
        %4307 = vmatpush1.msra.mxu0 0.0
        %4308 = vmatprep.subr.mxu0 0.0
        %4309 = vmatpush1.msra.mxu0 0.0
        %4310 = vmatprep.subr.mxu0 0.0
        %4311 = vmatpush1.msra.mxu0 0.0
        %4312 = vmatprep.subr.mxu0 0.0
        %4313 = vmatpush1.msra.mxu0 0.0
        %4314 = vmatprep.subr.mxu0 0.0
        %4315 = vmatpush1.msra.mxu0 0.0
        %4316 = vmatprep.subr.mxu0 0.0
        %4317 = vmatpush1.msra.mxu0 0.0
        %4318 = vmatprep.subr.mxu0 0.0
        %4319 = vmatpush1.msra.mxu0 0.0
        %4320 = vmatprep.subr.mxu0 0.0
        %4321 = vmatpush1.msra.mxu0 0.0
        %4322 = vmatprep.subr.mxu0 0.0
        %4323 = vmatpush1.msra.mxu0 0.0
        %4324 = vmatprep.subr.mxu0 0.0
        %4325 = vmatpush1.msra.mxu0 0.0
        %4326 = vmatprep.subr.mxu0 0.0
        %4327 = vmatpush1.msra.mxu0 0.0
        %4328 = vmatprep.subr.mxu0 0.0
        %4329 = vmatpush1.msra.mxu0 0.0
        %4330 = vmatprep.subr.mxu0 0.0
        %4331 = vmatpush1.msra.mxu0 0.0
        %4332 = vmatprep.mubr.f32.mxu0 0.0
        %v4333 = vand.u32 %v4088, 4294901760
        %v4334 = vsub.f32 %v4088, %v4333
        %4335 = vmatmul.mubr.f32.gmra.mrb[0].mxu0 %v4334
        %v4336 = vpop.f32.mrb[0].mxu0
        %v4337 = vadd.f32 %v4257, %v4336
        %v4338 = vpop.f32.mrb[0].mxu0
        %4339 = vdwg.mxu0
        %4340 = vmatprep.subr.mxu0 0.0
        %v4341 = vand.u32 %v436, 4294901760
        %4342 = vmatpush1.msra.mxu0 %v4341
        %4343 = vmatprep.subr.mxu0 0.0
        %v4344 = vand.u32 %v437, 4294901760
        %4345 = vmatpush1.msra.mxu0 %v4344
        %4346 = vmatprep.subr.mxu0 0.0
        %v4347 = vand.u32 %v438, 4294901760
        %4348 = vmatpush1.msra.mxu0 %v4347
        %4349 = vmatprep.subr.mxu0 0.0
        %v4350 = vand.u32 %v439, 4294901760
        %4351 = vmatpush1.msra.mxu0 %v4350
        %4352 = vmatprep.subr.mxu0 0.0
        %4353 = vmatpush1.msra.mxu0 0.0
        %4354 = vmatprep.subr.mxu0 0.0
        %4355 = vmatpush1.msra.mxu0 0.0
        %4356 = vmatprep.subr.mxu0 0.0
        %4357 = vmatpush1.msra.mxu0 0.0
        %4358 = vmatprep.subr.mxu0 0.0
        %4359 = vmatpush1.msra.mxu0 0.0
        %4360 = vmatprep.subr.mxu0 0.0
        %4361 = vmatpush1.msra.mxu0 0.0
        %4362 = vmatprep.subr.mxu0 0.0
        %4363 = vmatpush1.msra.mxu0 0.0
        %4364 = vmatprep.subr.mxu0 0.0
        %4365 = vmatpush1.msra.mxu0 0.0
        %4366 = vmatprep.subr.mxu0 0.0
        %4367 = vmatpush1.msra.mxu0 0.0
        %4368 = vmatprep.subr.mxu0 0.0
        %4369 = vmatpush1.msra.mxu0 0.0
        %4370 = vmatprep.subr.mxu0 0.0
        %4371 = vmatpush1.msra.mxu0 0.0
        %4372 = vmatprep.subr.mxu0 0.0
        %4373 = vmatpush1.msra.mxu0 0.0
        %4374 = vmatprep.subr.mxu0 0.0
        %4375 = vmatpush1.msra.mxu0 0.0
        %4376 = vmatprep.subr.mxu0 0.0
        %4377 = vmatpush1.msra.mxu0 0.0
        %4378 = vmatprep.subr.mxu0 0.0
        %4379 = vmatpush1.msra.mxu0 0.0
        %4380 = vmatprep.subr.mxu0 0.0
        %4381 = vmatpush1.msra.mxu0 0.0
        %4382 = vmatprep.subr.mxu0 0.0
        %4383 = vmatpush1.msra.mxu0 0.0
        %4384 = vmatprep.subr.mxu0 0.0
        %4385 = vmatpush1.msra.mxu0 0.0
        %4386 = vmatprep.subr.mxu0 0.0
        %4387 = vmatpush1.msra.mxu0 0.0
        %4388 = vmatprep.subr.mxu0 0.0
        %4389 = vmatpush1.msra.mxu0 0.0
        %4390 = vmatprep.subr.mxu0 0.0
        %4391 = vmatpush1.msra.mxu0 0.0
        %4392 = vmatprep.subr.mxu0 0.0
        %4393 = vmatpush1.msra.mxu0 0.0
        %4394 = vmatprep.subr.mxu0 0.0
        %4395 = vmatpush1.msra.mxu0 0.0
        %4396 = vmatprep.subr.mxu0 0.0
        %4397 = vmatpush1.msra.mxu0 0.0
        %4398 = vmatprep.subr.mxu0 0.0
        %4399 = vmatpush1.msra.mxu0 0.0
        %4400 = vmatprep.subr.mxu0 0.0
        %4401 = vmatpush1.msra.mxu0 0.0
        %4402 = vmatprep.subr.mxu0 0.0
        %4403 = vmatpush1.msra.mxu0 0.0
        %4404 = vmatprep.subr.mxu0 0.0
        %4405 = vmatpush1.msra.mxu0 0.0
        %4406 = vmatprep.subr.mxu0 0.0
        %4407 = vmatpush1.msra.mxu0 0.0
        %4408 = vmatprep.mubr.f32.mxu0 0.0
        %v4409 = vand.u32 %v4088, 4294901760
        %v4410 = vsub.f32 %v4088, %v4409
        %v4411 = vand.u32 %v4410, 4294901760
        %4412 = vmatmul.mubr.f32.gmra.mrb[0].mxu0 %v4411
        %v4413 = vpop.f32.mrb[0].mxu0
        %v4414 = vadd.f32 %v4337, %v4413
        %v4415 = vpop.f32.mrb[0].mxu0
        %4416 = vdwg.mxu0
        %4417 = vmatprep.subr.mxu0 0.0
        %v4418 = vand.u32 %v436, 4294901760
        %v4419 = vsub.f32 %v436, %v4418
        %v4420 = vand.u32 %v4419, 4294901760
        %4421 = vmatpush1.msra.mxu0 %v4420
        %4422 = vmatprep.subr.mxu0 0.0
        %v4423 = vand.u32 %v437, 4294901760
        %v4424 = vsub.f32 %v437, %v4423
        %v4425 = vand.u32 %v4424, 4294901760
        %4426 = vmatpush1.msra.mxu0 %v4425
        %4427 = vmatprep.subr.mxu0 0.0
        %v4428 = vand.u32 %v438, 4294901760
        %v4429 = vsub.f32 %v438, %v4428
        %v4430 = vand.u32 %v4429, 4294901760
        %4431 = vmatpush1.msra.mxu0 %v4430
        %4432 = vmatprep.subr.mxu0 0.0
        %v4433 = vand.u32 %v439, 4294901760
        %v4434 = vsub.f32 %v439, %v4433
        %v4435 = vand.u32 %v4434, 4294901760
        %4436 = vmatpush1.msra.mxu0 %v4435
        %4437 = vmatprep.subr.mxu0 0.0
        %4438 = vmatpush1.msra.mxu0 0.0
        %4439 = vmatprep.subr.mxu0 0.0
        %4440 = vmatpush1.msra.mxu0 0.0
        %4441 = vmatprep.subr.mxu0 0.0
        %4442 = vmatpush1.msra.mxu0 0.0
        %4443 = vmatprep.subr.mxu0 0.0
        %4444 = vmatpush1.msra.mxu0 0.0
        %4445 = vmatprep.subr.mxu0 0.0
        %4446 = vmatpush1.msra.mxu0 0.0
        %4447 = vmatprep.subr.mxu0 0.0
        %4448 = vmatpush1.msra.mxu0 0.0
        %4449 = vmatprep.subr.mxu0 0.0
        %4450 = vmatpush1.msra.mxu0 0.0
        %4451 = vmatprep.subr.mxu0 0.0
        %4452 = vmatpush1.msra.mxu0 0.0
        %4453 = vmatprep.subr.mxu0 0.0
        %4454 = vmatpush1.msra.mxu0 0.0
        %4455 = vmatprep.subr.mxu0 0.0
        %4456 = vmatpush1.msra.mxu0 0.0
        %4457 = vmatprep.subr.mxu0 0.0
        %4458 = vmatpush1.msra.mxu0 0.0
        %4459 = vmatprep.subr.mxu0 0.0
        %4460 = vmatpush1.msra.mxu0 0.0
        %4461 = vmatprep.subr.mxu0 0.0
        %4462 = vmatpush1.msra.mxu0 0.0
        %4463 = vmatprep.subr.mxu0 0.0
        %4464 = vmatpush1.msra.mxu0 0.0
        %4465 = vmatprep.subr.mxu0 0.0
        %4466 = vmatpush1.msra.mxu0 0.0
        %4467 = vmatprep.subr.mxu0 0.0
        %4468 = vmatpush1.msra.mxu0 0.0
        %4469 = vmatprep.subr.mxu0 0.0
        %4470 = vmatpush1.msra.mxu0 0.0
        %4471 = vmatprep.subr.mxu0 0.0
        %4472 = vmatpush1.msra.mxu0 0.0
        %4473 = vmatprep.subr.mxu0 0.0
        %4474 = vmatpush1.msra.mxu0 0.0
        %4475 = vmatprep.subr.mxu0 0.0
        %4476 = vmatpush1.msra.mxu0 0.0
        %4477 = vmatprep.subr.mxu0 0.0
        %4478 = vmatpush1.msra.mxu0 0.0
        %4479 = vmatprep.subr.mxu0 0.0
        %4480 = vmatpush1.msra.mxu0 0.0
        %4481 = vmatprep.subr.mxu0 0.0
        %4482 = vmatpush1.msra.mxu0 0.0
        %4483 = vmatprep.subr.mxu0 0.0
        %4484 = vmatpush1.msra.mxu0 0.0
        %4485 = vmatprep.subr.mxu0 0.0
        %4486 = vmatpush1.msra.mxu0 0.0
        %4487 = vmatprep.subr.mxu0 0.0
        %4488 = vmatpush1.msra.mxu0 0.0
        %4489 = vmatprep.subr.mxu0 0.0
        %4490 = vmatpush1.msra.mxu0 0.0
        %4491 = vmatprep.subr.mxu0 0.0
        %4492 = vmatpush1.msra.mxu0 0.0
        %4493 = vmatprep.mubr.f32.mxu0 0.0
        %v4494 = vand.u32 %v4088, 4294901760
        %4495 = vmatmul.mubr.f32.gmra.mrb[0].mxu0 %v4494
        %v4496 = vpop.f32.mrb[0].mxu0
        %v4497 = vadd.f32 %v4414, %v4496
        %v4498 = vpop.f32.mrb[0].mxu0
        %4499 = vdwg.mxu0
        %4500 = vmatprep.subr.mxu0 0.0
        %v4501 = vand.u32 %v436, 4294901760
        %4502 = vmatpush1.msra.mxu0 %v4501
        %4503 = vmatprep.subr.mxu0 0.0
        %v4504 = vand.u32 %v437, 4294901760
        %4505 = vmatpush1.msra.mxu0 %v4504
        %4506 = vmatprep.subr.mxu0 0.0
        %v4507 = vand.u32 %v438, 4294901760
        %4508 = vmatpush1.msra.mxu0 %v4507
        %4509 = vmatprep.subr.mxu0 0.0
        %v4510 = vand.u32 %v439, 4294901760
        %4511 = vmatpush1.msra.mxu0 %v4510
        %4512 = vmatprep.subr.mxu0 0.0
        %4513 = vmatpush1.msra.mxu0 0.0
        %4514 = vmatprep.subr.mxu0 0.0
        %4515 = vmatpush1.msra.mxu0 0.0
        %4516 = vmatprep.subr.mxu0 0.0
        %4517 = vmatpush1.msra.mxu0 0.0
        %4518 = vmatprep.subr.mxu0 0.0
        %4519 = vmatpush1.msra.mxu0 0.0
        %4520 = vmatprep.subr.mxu0 0.0
        %4521 = vmatpush1.msra.mxu0 0.0
        %4522 = vmatprep.subr.mxu0 0.0
        %4523 = vmatpush1.msra.mxu0 0.0
        %4524 = vmatprep.subr.mxu0 0.0
        %4525 = vmatpush1.msra.mxu0 0.0
        %4526 = vmatprep.subr.mxu0 0.0
        %4527 = vmatpush1.msra.mxu0 0.0
        %4528 = vmatprep.subr.mxu0 0.0
        %4529 = vmatpush1.msra.mxu0 0.0
        %4530 = vmatprep.subr.mxu0 0.0
        %4531 = vmatpush1.msra.mxu0 0.0
        %4532 = vmatprep.subr.mxu0 0.0
        %4533 = vmatpush1.msra.mxu0 0.0
        %4534 = vmatprep.subr.mxu0 0.0
        %4535 = vmatpush1.msra.mxu0 0.0
        %4536 = vmatprep.subr.mxu0 0.0
        %4537 = vmatpush1.msra.mxu0 0.0
        %4538 = vmatprep.subr.mxu0 0.0
        %4539 = vmatpush1.msra.mxu0 0.0
        %4540 = vmatprep.subr.mxu0 0.0
        %4541 = vmatpush1.msra.mxu0 0.0
        %4542 = vmatprep.subr.mxu0 0.0
        %4543 = vmatpush1.msra.mxu0 0.0
        %4544 = vmatprep.subr.mxu0 0.0
        %4545 = vmatpush1.msra.mxu0 0.0
        %4546 = vmatprep.subr.mxu0 0.0
        %4547 = vmatpush1.msra.mxu0 0.0
        %4548 = vmatprep.subr.mxu0 0.0
        %4549 = vmatpush1.msra.mxu0 0.0
        %4550 = vmatprep.subr.mxu0 0.0
        %4551 = vmatpush1.msra.mxu0 0.0
        %4552 = vmatprep.subr.mxu0 0.0
        %4553 = vmatpush1.msra.mxu0 0.0
        %4554 = vmatprep.subr.mxu0 0.0
        %4555 = vmatpush1.msra.mxu0 0.0
        %4556 = vmatprep.subr.mxu0 0.0
        %4557 = vmatpush1.msra.mxu0 0.0
        %4558 = vmatprep.subr.mxu0 0.0
        %4559 = vmatpush1.msra.mxu0 0.0
        %4560 = vmatprep.subr.mxu0 0.0
        %4561 = vmatpush1.msra.mxu0 0.0
        %4562 = vmatprep.subr.mxu0 0.0
        %4563 = vmatpush1.msra.mxu0 0.0
        %4564 = vmatprep.subr.mxu0 0.0
        %4565 = vmatpush1.msra.mxu0 0.0
        %4566 = vmatprep.subr.mxu0 0.0
        %4567 = vmatpush1.msra.mxu0 0.0
        %4568 = vmatprep.mubr.f32.mxu0 0.0
        %v4569 = vand.u32 %v4088, 4294901760
        %4570 = vmatmul.mubr.f32.gmra.mrb[0].mxu0 %v4569
        %v4571 = vpop.f32.mrb[0].mxu0
        %v4572 = vadd.f32 %v4497, %v4571
        %v4573 = vpop.f32.mrb[0].mxu0
        %4574 = vdwg.mxu0
        %v4575 = vadd.f32 %v4087, %v4572
        %v4576 = vxor.u32 %v4575, 2147483648
        %v4577 = vmul.f32 %v4576, 1.442695
        %v4578 = vpow.pop %v4577
        %v4579 = vadd.f32 %v4578, 1.0
        %v4580 = vrcp.pop %v4579
        %v4581 = vmul.f32 1.0, %v4580
        %v4582 = vtanh.pop %v4575
        %v4583 = vmul.f32 %v4581, %v3554
        %4585 = vrot.lane.b32.xlu0 %v4582, 64
        %v4586 = vpop.permute.xlu0 %4585
        %v4588 = vmul.f32 %v4581, %v4586
        %4590 = vrot.lane.b32.xlu0 %v4588, 32
        %v4591 = vpop.permute.xlu0 %4590
        %v4593 = vadd.f32 %v4583, %v4591
        %v4594 = vtanh.pop %v4593
        %4596 = vrot.lane.b32.xlu0 %v4594, 64
        %v4597 = vpop.permute.xlu0 %4596
        %v4599 = vmul.f32 %v4581, %v4597
        %4601 = vrot.lane.b32.xlu0 %v4086, 32
        %v4602 = vpop.permute.xlu0 %4601
        %s4604 = scalar_lea.vmem %s404, 24 [#allocation15]
        %4605 = vst.msk [vmem:[%s4604] sm:$0xff] %vm445, %v4602
        %4607 = vrot.lane.b32.xlu0 %v4599, 32
        %v4608 = vpop.permute.xlu0 %4607
        %4610 = vst.msk [vmem:[%s411] sm:$0xff] %vm445, %v4608
        %4611 = vst.msk [vmem:[#allocation2] sm:$0xff] %vm445, %v4602
        %4613 = vrot.lane.b32.xlu0 %v4080, 96
        %v4614 = vpop.permute.xlu0 %4613
        %4616 = vst.msk [vmem:[#allocation3] sm:$0xff] %vm445, %v4614
        %4617 = vst.msk [vmem:[#allocation4] sm:$0xff] %vm445, %v4608
        %4619 = vrot.lane.b32.xlu0 %v4593, 96
        %v4620 = vpop.permute.xlu0 %4619
        %4622 = vst.msk [vmem:[#allocation5] sm:$0xff] %vm445, %v4620
        %p4623 = scmp.eq.s32.totalorder %s34, 3
        // Predicated region
        $region65: #{bilstm_forward.1} parent=39 // pred_check
          %p4624 = pneg %p4623
        $region66: #{bilstm_forward.1} parent=39 // pred_check_branch
          %4626 = sbr.rel (%p4624) target = $region68
        $region67: #{bilstm_forward.1} parent=39 // pred_region
          %4627 = vst.msk [vmem:[#allocation18] sm:$0xff] %vm445, %v4602
          %s4628 = scalar_lea.vmem [#allocation18], 8
          %4629 = vst.msk [vmem:[%s4628] sm:$0xff] %vm445, %v4608
          %4630 = vst.msk [vmem:[#allocation19] sm:$0xff] %vm445, %v4614
          %s4631 = scalar_lea.vmem [#allocation19], 8
          %4632 = vst.msk [vmem:[%s4631] sm:$0xff] %vm445, %v4620
        $region68: #{bilstm_forward.1} parent=39 // pred_fallthru
          _
        %s4633 = sand.u32 %s159, 1
        %s4634 = scalar_lea.sflag [#allocation8], %s4633
        %s4635 = sand.u32 %s159, 1
        %s4636 = smul.addr %s4635, 32
        %s4637 = scalar_lea.vmem [#allocation15], %s4636
        %s4638 = sand.u32 %s34, 1
        %s4639 = scalar_lea.sflag [#allocation17], %s4638
        %s4640 = sand.u32 %s187, 1
        %s4641 = smul.addr %s4640, 32
        %s4642 = scalar_lea.vmem [#allocation16], %s4641
        // Predicated region
        $region69: #{bilstm_forward.1} parent=39 // pred_check
          %p4643 = pneg %p169
        $region70: #{bilstm_forward.1} parent=39 // pred_check_branch
          %4645 = sbr.rel (%p4643) target = $region72
        $region71: #{bilstm_forward.1} parent=39 // pred_region
          %s4646 = smul.u32 4, %s34
          %s4648 = ssub.s32 512, 512
          %4649 = vsyncadd %s4634, %s4648
          %s4650 = smul.addr %s4646, 128
          %s4651 = scalar_lea.hbm %s5, %s4650
          %s4652 = sshll.u32 %s4637, 4
          %s4653 = int_to_ptr.vmem [resolvable:$true] %s4652
          %4658 = dma.vmem_to_hbm [thread:$0]  %s4653, 512, %s4651, %s4634, 128, 128, 8
        $region72: #{bilstm_forward.1} parent=39 // pred_fallthru
          _
        // Predicated region
        $region73: #{bilstm_forward.1} parent=39 // pred_check
          %p4659 = pneg %p197
        $region74: #{bilstm_forward.1} parent=39 // pred_check_branch
          %4661 = sbr.rel (%p4659) target = $region76
        $region75: #{bilstm_forward.1} parent=39 // pred_region
          %s4662 = ssub.s32 3, %s34
          %s4663 = smul.u32 4, %s4662
          %s4665 = ssub.s32 512, 512
          %4666 = vsyncadd %s4639, %s4665
          %s4667 = smul.addr %s4663, 128
          %s4668 = scalar_lea.hbm %s6, %s4667
          %s4669 = sshll.u32 %s4642, 4
          %s4670 = int_to_ptr.vmem [resolvable:$true] %s4669
          %4675 = dma.vmem_to_hbm [thread:$0]  %s4670, 512, %s4668, %s4639, 128, 128, 8
        $region76: #{bilstm_forward.1} parent=39 // pred_fallthru
          _
        // Predicated region
        $region77: #{bilstm_forward.1} parent=39 // pred_check
          %p4676 = pneg %p218
        $region78: #{bilstm_forward.1} parent=39 // pred_check_branch
          %4678 = sbr.rel (%p4676) target = $region80
        $region79: #{bilstm_forward.1} parent=39 // pred_region
          %s4680 = ssub.s32 256, 256
          %4681 = vsyncadd [#allocation17], %s4680
          %s4682 = sshll.u32 [#allocation18], 4
          %s4683 = int_to_ptr.vmem [resolvable:$true] %s4682
          %4688 = dma.vmem_to_hbm [thread:$0]  %s4683, 256, %s7, [#allocation17], 128, 128, 8
        $region80: #{bilstm_forward.1} parent=39 // pred_fallthru
          _
        // Predicated region
        $region81: #{bilstm_forward.1} parent=39 // pred_check
          %p4689 = pneg %p239
        $region82: #{bilstm_forward.1} parent=39 // pred_check_branch
          %4691 = sbr.rel (%p4689) target = $region84
        $region83: #{bilstm_forward.1} parent=39 // pred_region
          %s4693 = ssub.s32 256, 256
          %4694 = vsyncadd [#allocation20], %s4693
          %s4695 = sshll.u32 [#allocation19], 4
          %s4696 = int_to_ptr.vmem [resolvable:$true] %s4695
          %4701 = dma.vmem_to_hbm [thread:$0]  %s4696, 256, %s8, [#allocation20], 128, 128, 8
        $region84: #{bilstm_forward.1} parent=39 // pred_fallthru
          _
        // Predicated region
        $region85: #{bilstm_forward.1} parent=39 // pred_check
          %p4702 = pneg %p218
        $region86: #{bilstm_forward.1} parent=39 // pred_check_branch
          %4704 = sbr.rel (%p4702) target = $region88
        $region87: #{bilstm_forward.1} parent=39 // pred_region
          %4705 = dma.done [#allocation17], 256
        $region88: #{bilstm_forward.1} parent=39 // pred_fallthru
          _
        // Predicated region
        $region89: #{bilstm_forward.1} parent=39 // pred_check
          %p4706 = pneg %p239
        $region90: #{bilstm_forward.1} parent=39 // pred_check_branch
          %4708 = sbr.rel (%p4706) target = $region92
        $region91: #{bilstm_forward.1} parent=39 // pred_region
          %4709 = dma.done [#allocation20], 256
        $region92: #{bilstm_forward.1} parent=39 // pred_fallthru
          _
      $region40: #{bilstm_forward.1} parent=5 // pred_fallthru
        _
      %p4710 = scmp.le.s32.totalorder 2, %s29
      // Predicated region
      $region93: #{bilstm_forward.1} parent=5 // pred_check
        %p4711 = pneg %p4710
      $region94: #{bilstm_forward.1} parent=5 // pred_check_branch
        %4713 = sbr.rel (%p4711) target = $region96
      $region95: #{bilstm_forward.1} parent=5 // pred_region
        %s4714 = ssub.s32 %s29, 2
        // Predicated region
        $region97: #{bilstm_forward.1} parent=95 // pred_check
          %p4715 = pneg %p175
        $region98: #{bilstm_forward.1} parent=95 // pred_check_branch
          %4717 = sbr.rel (%p4715) target = $region100
        $region99: #{bilstm_forward.1} parent=95 // pred_region
          %s4718 = sand.u32 %s160, 1
          %s4719 = scalar_lea.sflag [#allocation8], %s4718
          %s4720 = sand.u32 %s160, 1
          %s4721 = smul.addr %s4720, 32
          %s4722 = scalar_lea.vmem [#allocation15], %s4721
          %4723 = dma.done %s4719, 512
        $region100: #{bilstm_forward.1} parent=95 // pred_fallthru
          _
        // Predicated region
        $region101: #{bilstm_forward.1} parent=95 // pred_check
          %p4724 = pneg %p203
        $region102: #{bilstm_forward.1} parent=95 // pred_check_branch
          %4726 = sbr.rel (%p4724) target = $region104
        $region103: #{bilstm_forward.1} parent=95 // pred_region
          %s4727 = sand.u32 %s35, 1
          %s4728 = scalar_lea.sflag [#allocation17], %s4727
          %s4729 = sand.u32 %s188, 1
          %s4730 = smul.addr %s4729, 32
          %s4731 = scalar_lea.vmem [#allocation16], %s4730
          %4732 = dma.done %s4728, 512
        $region104: #{bilstm_forward.1} parent=95 // pred_fallthru
          _
      $region96: #{bilstm_forward.1} parent=5 // pred_fallthru
        _
    $region6: #{bilstm_forward.1} parent=1 // loop_footer
      %s33 = sadd.s32 1, %s29
    $region7: #{bilstm_forward.1} parent=1 // loop_footer_branch
      %28 = sbr.rel target = $region3
    $region8: #{bilstm_forward.1} parent=1 // loop_exit
      _
    %4733 = vsyncpa [#allocation7], 1
    %s4734 = scalar_lea.sflag [#allocation7], 1
    %4735 = vsyncpa %s4734, 1
    %4736 = vsyncpa [#allocation10], 1
    %s4737 = scalar_lea.sflag [#allocation10], 1
    %4738 = vsyncpa %s4737, 1
    %4739 = vsyncpa [#allocation13], 1
    %4740 = vsyncpa [#allocation8], 1
    %s4741 = scalar_lea.sflag [#allocation8], 1
    %4742 = vsyncpa %s4741, 1
    %4743 = vsyncpa [#allocation17], 1
    %s4744 = scalar_lea.sflag [#allocation17], 1
    %4745 = vsyncpa %s4744, 1
    %4746 = vsyncpa [#allocation20], 1

</llo_original>
